<compile_context>
chip_gen: v5e
topology: v5e:2x2
jax: 0.10.0
libtpu: 0.0.40
codegen_flags: <defaults>
</compile_context>

<pallas_src>
import jax
import jax.numpy as jnp
from jax.experimental import pallas as pl
from jax.experimental.pallas import tpu as pltpu

LANE = 128
VMEM_LIMIT = 32 * 1024 * 1024  # fits v5e/v6e/v7x scoped+physical limits


def _round_up(x, m):
    return ((x + m - 1) // m) * m


def _pick_tile(m):
    # Largest M-tile (multiple of 8) that divides M; 512-2048 ~ HBM roofline.
    for tm in (2048, 1024, 512, 256, 128, 64, 32, 16, 8):
        if m % tm == 0:
            return tm
    return m


def _compiler_params(n_parallel_axes):
    return pltpu.CompilerParams(
        dimension_semantics=("parallel",) * n_parallel_axes,
        vmem_limit_bytes=VMEM_LIMIT,
    )


# ----------------------------------------------------------------------------
# Kernel 1: cv1 + cv2 fused (1x1 conv, BN-scale folded, +bias, SiLU)
# ----------------------------------------------------------------------------
def _cv12_kernel(x_ref, w_ref, b1_ref, b2_ref, y1_ref, y2_ref):
    # x_ref: (TM, Cin) bf16, w_ref: (Cin, 2*Cp) bf16 (cv1|cv2 packed along Cout)
    cp = y1_ref.shape[-1]
    acc = jnp.dot(x_ref[...], w_ref[...], preferred_element_type=jnp.float32)
    a1 = acc[:, :cp] + b1_ref[...]
    a2 = acc[:, cp:] + b2_ref[...]
    y1_ref[...] = (a1 * jax.nn.sigmoid(a1)).astype(y1_ref.dtype)   # SiLU
    y2_ref[...] = (a2 * jax.nn.sigmoid(a2)).astype(y2_ref.dtype)   # SiLU


def fused_cv1_cv2(x_flat, w12, b1, b2, tm):
    m, cin = x_flat.shape
    cp2 = w12.shape[1]
    cp = cp2 // 2
    return pl.pallas_call(
        _cv12_kernel,
        grid=(m // tm,),
        in_specs=[
            pl.BlockSpec((tm, cin), lambda i: (i, 0)),
            pl.BlockSpec((cin, cp2), lambda i: (0, 0)),
            pl.BlockSpec((1, cp), lambda i: (0, 0)),
            pl.BlockSpec((1, cp), lambda i: (0, 0)),
        ],
        out_specs=(
            pl.BlockSpec((tm, cp), lambda i: (i, 0)),
            pl.BlockSpec((tm, cp), lambda i: (i, 0)),
        ),
        out_shape=(
            jax.ShapeDtypeStruct((m, cp), jnp.bfloat16),
            jax.ShapeDtypeStruct((m, cp), jnp.bfloat16),
        ),
        compiler_params=_compiler_params(1),
    )(x_flat, w12, b1, b2)


# ----------------------------------------------------------------------------
# Kernel 2: whole Bottleneck fused: y1 + cv2_3x3(cv1_1x1(y1))
#           (t1 + its zero halo stay in VMEM scratch; 9 taps built in-kernel)
# ----------------------------------------------------------------------------
def _bottleneck_kernel(y1_ref, w1_ref, b1_ref, w2_ref, b2_ref, o_ref, t1p_ref):
    # y1_ref: (H, W, Cp) bf16 (one image), w1_ref: (Cp, Cp) bf16,
    # w2_ref: (9, Cp, Cp) bf16 taps, t1p_ref: VMEM scratch (H+2, W+2, Cp) f32
    h, w, cp = y1_ref.shape
    y1_2d = y1_ref[...].reshape(h * w, cp)                      # (H*W, Cp) bf16

    # m.cv1: 1x1 conv + bias + SiLU (f32 epilogue)
    a1 = jnp.dot(y1_2d, w1_ref[...],
                 preferred_element_type=jnp.float32) + b1_ref[...]
    t1 = a1 * jax.nn.sigmoid(a1)                                # (H*W, Cp) f32

    # zero-padded t1 held only in VMEM (replaces HBM im2col round trip)
    t1p_ref[...] = jnp.zeros(t1p_ref.shape, t1p_ref.dtype)
    t1p_ref[1:h + 1, 1:w + 1, :] = t1.reshape(h, w, cp)

    # m.cv2: 3x3 conv (pad=1) as 9 shifted-view matmuls, f32 accumulator
    acc = jnp.zeros((h * w, cp), jnp.float32)
    for t in range(9):                                          # static unroll
        dy, dx = t // 3, t % 3
        tap = t1p_ref[dy:dy + h, dx:dx + w, :].reshape(h * w, cp)
        acc = acc + jnp.dot(tap.astype(jnp.bfloat16), w2_ref[t],
                            preferred_element_type=jnp.float32)
    a2 = acc + b2_ref[...]
    b_out = a2 * jax.nn.sigmoid(a2)

    # Bottleneck shortcut add
    out = b_out + y1_2d.astype(jnp.float32)
    o_ref[...] = out.reshape(h, w, cp).astype(o_ref.dtype)


def fused_bottleneck(y1_img, w1, b1, w2, b2):
    n, h, w, cp = y1_img.shape
    return pl.pallas_call(
        _bottleneck_kernel,
        grid=(n,),
        in_specs=[
            pl.BlockSpec((None, h, w, cp), lambda i: (i, 0, 0, 0)),
            pl.BlockSpec((cp, cp), lambda i: (0, 0)),
            pl.BlockSpec((1, cp), lambda i: (0, 0)),
            pl.BlockSpec((9, cp, cp), lambda i: (0, 0, 0)),
            pl.BlockSpec((1, cp), lambda i: (0, 0)),
        ],
        out_specs=pl.BlockSpec((None, h, w, cp), lambda i: (i, 0, 0, 0)),
        out_shape=jax.ShapeDtypeStruct((n, h, w, cp), jnp.bfloat16),
        scratch_shapes=[pltpu.VMEM((h + 2, w + 2, cp), jnp.float32)],
        compiler_params=_compiler_params(1),
    )(y1_img, w1, b1, w2, b2)


# ----------------------------------------------------------------------------
# Kernel 3: cv3 over the *virtual* concat([bottleneck, y2])  (never built)
# ----------------------------------------------------------------------------
def _cv3_kernel(b_ref, y2_ref, w3a_ref, w3b_ref, bias_ref, o_ref):
    acc = jnp.dot(b_ref[...], w3a_ref[...], preferred_element_type=jnp.float32)
    acc = acc + jnp.dot(y2_ref[...], w3b_ref[...],
                        preferred_element_type=jnp.float32)
    a = acc + bias_ref[...]
    o_ref[...] = (a * jax.nn.sigmoid(a)).astype(o_ref.dtype)


def fused_cat_cv3(b_flat, y2, w3a, w3b, b3, tm):
    m, cp = b_flat.shape
    coutp = w3a.shape[-1]
    return pl.pallas_call(
        _cv3_kernel,
        grid=(m // tm,),
        in_specs=[
            pl.BlockSpec((tm, cp), lambda i: (i, 0)),
            pl.BlockSpec((tm, cp), lambda i: (i, 0)),
            pl.BlockSpec((cp, coutp), lambda i: (0, 0)),
            pl.BlockSpec((cp, coutp), lambda i: (0, 0)),
            pl.BlockSpec((1, coutp), lambda i: (0, 0)),
        ],
        out_specs=pl.BlockSpec((tm, coutp), lambda i: (i, 0)),
        out_shape=jax.ShapeDtypeStruct((m, coutp), jnp.float32),
        compiler_params=_compiler_params(1),
    )(b_flat, y2, w3a, w3b, b3)


# ----------------------------------------------------------------------------
# Parameter construction (deterministic, synthetic). BN scale folded into W,
# output (and optionally input) channels zero-padded to a multiple of 128.
# ----------------------------------------------------------------------------
def make_conv_params(key, cin, cout, k, *, cin_pad=None, cout_pad=None):
    kw, kg, kb, km, kv = jax.random.split(key, 5)
    wt = jax.random.normal(kw, (cout, cin, k, k), jnp.float32) / ((cin * k * k) ** 0.5)
    gamma = 1.0 + 0.1 * jax.random.normal(kg, (cout,), jnp.float32)
    beta = 0.1 * jax.random.normal(kb, (cout,), jnp.float32)
    run_mean = 0.1 * jax.random.normal(km, (cout,), jnp.float32)
    run_var = 1.0 + 0.1 * jax.random.uniform(kv, (cout,), jnp.float32)
    eps = 1e-5
    scale = gamma / jnp.sqrt(run_var + eps)
    bias = beta - run_mean * scale
    wt = wt * scale[:, None, None, None]                # fold BN scale into W
    w_taps = jnp.transpose(wt, (2, 3, 1, 0)).reshape(k * k, cin, cout)
    cin_p = cin if cin_pad is None else cin_pad
    cout_p = cout if cout_pad is None else cout_pad
    w_p = jnp.zeros((k * k, cin_p, cout_p), jnp.float32).at[:, :cin, :cout].set(w_taps)
    b_p = jnp.zeros((1, cout_p), jnp.float32).at[0, :cout].set(bias)
    return w_p.astype(jnp.bfloat16), b_p                # bf16 W, f32 bias


def make_c3_params(key, in_channels, out_channels):
    c_ = out_channels // 2
    cp = _round_up(c_, LANE)
    coutp = _round_up(out_channels, LANE)
    ks = jax.random.split(key, 5)
    cv1 = make_conv_params(ks[0], in_channels, c_, 1, cout_pad=cp)
    cv2 = make_conv_params(ks[1], in_channels, c_, 1, cout_pad=cp)
    cv3_w, cv3_b = make_conv_params(ks[2], 2 * c_, out_channels, 1, cout_pad=coutp)
    m1 = make_conv_params(ks[3], c_, c_, 1, cin_pad=cp, cout_pad=cp)
    m2 = make_conv_params(ks[4], c_, c_, 3, cin_pad=cp, cout_pad=cp)
    # split cv3 by concat branch (rows [:c_] -> bottleneck, [c_:] -> y2),
    # pad each half's input channels to cp for lane-aligned matmuls.
    w3 = cv3_w[0].astype(jnp.float32)                   # (2*c_, coutp)
    w3a = jnp.zeros((cp, coutp), jnp.float32).at[:c_].set(w3[:c_])
    w3b = jnp.zeros((cp, coutp), jnp.float32).at[:c_].set(w3[c_:])
    return {
        "cv1": cv1, "cv2": cv2, "m_cv1": m1, "m_cv2": m2,
        "cv3": (w3a.astype(jnp.bfloat16), w3b.astype(jnp.bfloat16), cv3_b),
        "c_pad": cp, "out_pad": coutp, "out_channels": out_channels,
    }


# ----------------------------------------------------------------------------
# C3 forward
# ----------------------------------------------------------------------------
def c3_forward(x_nchw, params):
    # TODO(synk): BatchNorm is eval-mode (running stats folded into conv
    # weights); PyTorch training-mode batch statistics are not reproduced.
    n, cin, h, w = x_nchw.shape
    m = n * h * w
    x_flat = (jnp.transpose(x_nchw, (0, 2, 3, 1))
              .reshape(m, cin).astype(jnp.bfloat16))

    cp = params["c_pad"]
    tm = _pick_tile(m)

    # cv1 + cv2 fused (single packed 1x1 matmul, x read from HBM once)
    w1, b1 = params["cv1"]
    w2, b2 = params["cv2"]
    w12 = jnp.concatenate([w1[0], w2[0]], axis=-1)      # (cin, 2*cp)
    y1, y2 = fused_cv1_cv2(x_flat, w12, b1, b2, tm)

    # Bottleneck (n=1, shortcut=True), fully fused per image
    wm1, bm1 = params["m_cv1"]
    wm2, bm2 = params["m_cv2"]
    b_img = fused_bottleneck(y1.reshape(n, h, w, cp), wm1[0], bm1, wm2, bm2)

    # cv3 over virtual concat([bottleneck, y2])
    w3a, w3b, b3 = params["cv3"]
    out = fused_cat_cv3(b_img.reshape(m, cp), y2, w3a, w3b, b3, tm)

    cout = params["out_channels"]
    out_img = out.reshape(n, h, w, params["out_pad"])[..., :cout]
    return jnp.transpose(out_img, (0, 3, 1, 2))         # back to NCHW, f32


if __name__ == "__main__":
    key = jax.random.PRNGKey(0)
    k_x, k_p = jax.random.split(key)

    N, C_IN, C_OUT, H, W = 2, 8, 8, 16, 16
    x = jax.random.normal(k_x, (N, C_IN, H, W), jnp.float32)
    params = make_c3_params(k_p, C_IN, C_OUT)

    out = c3_forward(x, params)
    out = jax.block_until_ready(out)
    assert out.shape == (N, C_OUT, H, W)
    assert bool(jnp.all(jnp.isfinite(out)))
    print("KERNEL_OK")
</pallas_src>

<mosaic_0001>
module attributes {stable_mosaic.version = 11 : i64} {
  func.func @_cv12_kernel(%arg0: i32, %arg1: memref<512x8xbf16, #tpu.memory_space<vmem>>, %arg2: memref<8x256xbf16, #tpu.memory_space<vmem>>, %arg3: memref<1x128xf32, #tpu.memory_space<vmem>>, %arg4: memref<1x128xf32, #tpu.memory_space<vmem>>, %arg5: memref<512x128xbf16, #tpu.memory_space<vmem>>, %arg6: memref<512x128xbf16, #tpu.memory_space<vmem>>) attributes {dimension_semantics = [#tpu.dimension_semantics<parallel>], iteration_bounds = array<i64: 1>, scalar_prefetch = 0 : i64, scratch_operands = 0 : i64, tpu.core_type = #tpu.core_type<tc>, window_params = [{transform_indices = @transform_0, window_bounds = array<i64: 512, 8>}, {pipeline_mode = #tpu.pipeline_mode<synchronous>, transform_indices = @transform_1, window_bounds = array<i64: 8, 256>}, {pipeline_mode = #tpu.pipeline_mode<synchronous>, transform_indices = @transform_2, window_bounds = array<i64: 1, 128>}, {pipeline_mode = #tpu.pipeline_mode<synchronous>, transform_indices = @transform_3, window_bounds = array<i64: 1, 128>}, {transform_indices = @transform_4, window_bounds = array<i64: 512, 128>}, {transform_indices = @transform_5, window_bounds = array<i64: 512, 128>}]} {
    %c0 = arith.constant 0 : index
    %c0_0 = arith.constant 0 : index
    %0 = vector.load %arg1[%c0, %c0_0] : memref<512x8xbf16, #tpu.memory_space<vmem>>, vector<512x8xbf16>
    %c0_1 = arith.constant 0 : index
    %c0_2 = arith.constant 0 : index
    %1 = vector.load %arg2[%c0_1, %c0_2] : memref<8x256xbf16, #tpu.memory_space<vmem>>, vector<8x256xbf16>
    %cst = arith.constant dense<0.000000e+00> : vector<512x256xf32>
    %2 = tpu.matmul %0, %1, %cst {dimension_numbers = #tpu.dot_dimension_numbers<[1], [0], [0], [1], [0, 0, 1, 1], [], []>} : vector<512x8xbf16>, vector<8x256xbf16>, vector<512x256xf32> -> vector<512x256xf32>
    %3 = vector.extract_strided_slice %2 {offsets = [0, 0], sizes = [512, 128], strides = [1, 1]} : vector<512x256xf32> to vector<512x128xf32>
    %c0_3 = arith.constant 0 : index
    %c0_4 = arith.constant 0 : index
    %4 = vector.load %arg3[%c0_3, %c0_4] : memref<1x128xf32, #tpu.memory_space<vmem>>, vector<1x128xf32>
    %5 = vector.broadcast %4 : vector<1x128xf32> to vector<512x128xf32>
    %6 = arith.addf %3, %5 : vector<512x128xf32>
    %7 = vector.extract_strided_slice %2 {offsets = [0, 128], sizes = [512, 128], strides = [1, 1]} : vector<512x256xf32> to vector<512x128xf32>
    %c0_5 = arith.constant 0 : index
    %c0_6 = arith.constant 0 : index
    %8 = vector.load %arg4[%c0_5, %c0_6] : memref<1x128xf32, #tpu.memory_space<vmem>>, vector<1x128xf32>
    %9 = vector.broadcast %8 : vector<1x128xf32> to vector<512x128xf32>
    %10 = arith.addf %7, %9 : vector<512x128xf32>
    %11 = arith.negf %6 : vector<512x128xf32>
    %12 = math.exp %11 : vector<512x128xf32>
    %cst_7 = arith.constant 1.000000e+00 : f32
    %13 = vector.broadcast %cst_7 : f32 to vector<512x128xf32>
    %14 = arith.addf %13, %12 : vector<512x128xf32>
    %15 = arith.divf %13, %14 : vector<512x128xf32>
    %16 = arith.mulf %6, %15 : vector<512x128xf32>
    %17 = arith.truncf %16 : vector<512x128xf32> to vector<512x128xbf16>
    %c0_8 = arith.constant 0 : index
    %c0_9 = arith.constant 0 : index
    %18 = vector.load %arg5[%c0_8, %c0_9] : memref<512x128xbf16, #tpu.memory_space<vmem>>, vector<512x128xbf16>
    tpu.vector_store %arg5[%c0_8, %c0_9], %17 {strides = array<i32>} : memref<512x128xbf16, #tpu.memory_space<vmem>>, vector<512x128xbf16>,
    %19 = arith.negf %10 : vector<512x128xf32>
    %20 = math.exp %19 : vector<512x128xf32>
    %cst_10 = arith.constant 1.000000e+00 : f32
    %21 = vector.broadcast %cst_10 : f32 to vector<512x128xf32>
    %22 = arith.addf %21, %20 : vector<512x128xf32>
    %23 = arith.divf %21, %22 : vector<512x128xf32>
    %24 = arith.mulf %10, %23 : vector<512x128xf32>
    %25 = arith.truncf %24 : vector<512x128xf32> to vector<512x128xbf16>
    %c0_11 = arith.constant 0 : index
    %c0_12 = arith.constant 0 : index
    %26 = vector.load %arg6[%c0_11, %c0_12] : memref<512x128xbf16, #tpu.memory_space<vmem>>, vector<512x128xbf16>
    tpu.vector_store %arg6[%c0_11, %c0_12], %25 {strides = array<i32>} : memref<512x128xbf16, #tpu.memory_space<vmem>>, vector<512x128xbf16>,
    return
  }
  func.func @transform_0(%arg0: i32) -> (i32, i32) {
    %c0_i32 = arith.constant 0 : i32
    %c0_i32_0 = arith.constant 0 : i32
    return %arg0, %c0_i32 : i32, i32
  }
  func.func @transform_1(%arg0: i32) -> (i32, i32) {
    %c0_i32 = arith.constant 0 : i32
    %c0_i32_0 = arith.constant 0 : i32
    %c0_i32_1 = arith.constant 0 : i32
    return %c0_i32, %c0_i32_0 : i32, i32
  }
  func.func @transform_2(%arg0: i32) -> (i32, i32) {
    %c0_i32 = arith.constant 0 : i32
    %c0_i32_0 = arith.constant 0 : i32
    %c0_i32_1 = arith.constant 0 : i32
    return %c0_i32, %c0_i32_0 : i32, i32
  }
  func.func @transform_3(%arg0: i32) -> (i32, i32) {
    %c0_i32 = arith.constant 0 : i32
    %c0_i32_0 = arith.constant 0 : i32
    %c0_i32_1 = arith.constant 0 : i32
    return %c0_i32, %c0_i32_0 : i32, i32
  }
  func.func @transform_4(%arg0: i32) -> (i32, i32) {
    %c0_i32 = arith.constant 0 : i32
    %c0_i32_0 = arith.constant 0 : i32
    return %arg0, %c0_i32 : i32, i32
  }
  func.func @transform_5(%arg0: i32) -> (i32, i32) {
    %c0_i32 = arith.constant 0 : i32
    %c0_i32_0 = arith.constant 0 : i32
    return %arg0, %c0_i32 : i32, i32
  }
}

</mosaic_0001>

<llo_original>
// kernel: tpu_custom_call.1
$region0: #{tpu_custom_call.1}
  #allocation0 [shape = 'u32[]', space=smem, size = 0x4, offset = 0x4, fixed_abs, tag = 'smem constant byte address 0x4 - core index']
  #allocation1 [shape = 'u32[72,128]{1,0:T(1,128)}', space=vmem, size = 0x9000, scoped, tag = 'internal scratch']
  %s0 = inlined_call_operand.vmem [shape: bf16[512,8], index: 0, kind: input, shape index: {}]
  %s1 = inlined_call_operand.vmem [shape: bf16[8,256], index: 1, kind: input, shape index: {}]
  %s2 = inlined_call_operand.vmem [shape: f32[1,128], index: 2, kind: input, shape index: {}]
  %s3 = inlined_call_operand.vmem [shape: f32[1,128], index: 3, kind: input, shape index: {}]
  %s4 = inlined_call_operand.hbm [shape: bf16[512,128], index: 4, kind: output, shape index: {0}]
  %s5 = inlined_call_operand.hbm [shape: bf16[512,128], index: 5, kind: output, shape index: {1}]
  %6 = xla_tuple %s4, %s5
  %s7 = sld [smem:[#allocation0]]
  $region34: #{tpu_custom_call.1} parent=0
    _
  %s9 = ssub.s32 1, %s7
  %s10 = scalar_select 0, %s9, %s7
  $region1: #{tpu_custom_call.1} parent=0
    #allocation2 [shape = 'u8[131072]{0}', space=vmem, size = 0x20000, scoped, tag = 'output window, operand 0, single buffered']
    #allocation3 [shape = 's32[1]{0}', space=sflag, size = 0x4, scoped, tag = 'scoped memory for tpu_custom_call.1']
    #allocation4 [shape = 'u8[131072]{0}', space=vmem, size = 0x20000, scoped, tag = 'output window, operand 1, single buffered']
    #allocation5 [shape = 's32[1]{0}', space=sflag, size = 0x4, scoped, tag = 'scoped memory for tpu_custom_call.1']
    %11 = vsyncpa [#allocation3], 0
    %12 = vsyncpa [#allocation5], 0
    // Predicated region
    $region2: #{tpu_custom_call.1} parent=1 // pred_check
      _
    $region3: #{tpu_custom_call.1} parent=1 // pred_check_branch
      %14 = sbr.rel (0) target = $region5
    $region4: #{tpu_custom_call.1} parent=1 // pred_region
      _
    $region5: #{tpu_custom_call.1} parent=1 // pred_fallthru
      _
    // Predicated region
    $region6: #{tpu_custom_call.1} parent=1 // pred_check
      _
    $region7: #{tpu_custom_call.1} parent=1 // pred_check_branch
      %16 = sbr.rel (0) target = $region9
    $region8: #{tpu_custom_call.1} parent=1 // pred_region
      _
    $region9: #{tpu_custom_call.1} parent=1 // pred_fallthru
      _
    // Predicated region
    $region10: #{tpu_custom_call.1} parent=1 // pred_check
      _
    $region11: #{tpu_custom_call.1} parent=1 // pred_check_branch
      %18 = sbr.rel (0) target = $region13
    $region12: #{tpu_custom_call.1} parent=1 // pred_region
      _
    $region13: #{tpu_custom_call.1} parent=1 // pred_fallthru
      _
    // Predicated region
    $region14: #{tpu_custom_call.1} parent=1 // pred_check
      _
    $region15: #{tpu_custom_call.1} parent=1 // pred_check_branch
      %20 = sbr.rel (0) target = $region17
    $region16: #{tpu_custom_call.1} parent=1 // pred_region
      _
    $region17: #{tpu_custom_call.1} parent=1 // pred_fallthru
      _
    %v22 = vld [vmem:[%s0] sm:$0xf]
    %v23 = vld [vmem:[%s0 + $0x4] sm:$0xf]
    %v24 = vld [vmem:[%s0 + $0x8] sm:$0xf]
    %v25 = vld [vmem:[%s0 + $0xc] sm:$0xf]
    %v26 = vld [vmem:[%s0 + $0x10] sm:$0xf]
    %v27 = vld [vmem:[%s0 + $0x14] sm:$0xf]
    %v28 = vld [vmem:[%s0 + $0x18] sm:$0xf]
    %v29 = vld [vmem:[%s0 + $0x1c] sm:$0xf]
    %v30 = vld [vmem:[%s0 + $0x20] sm:$0xf]
    %v31 = vld [vmem:[%s0 + $0x24] sm:$0xf]
    %v32 = vld [vmem:[%s0 + $0x28] sm:$0xf]
    %v33 = vld [vmem:[%s0 + $0x2c] sm:$0xf]
    %v34 = vld [vmem:[%s0 + $0x30] sm:$0xf]
    %v35 = vld [vmem:[%s0 + $0x34] sm:$0xf]
    %v36 = vld [vmem:[%s0 + $0x38] sm:$0xf]
    %v37 = vld [vmem:[%s0 + $0x3c] sm:$0xf]
    %v38 = vld [vmem:[%s0 + $0x40] sm:$0xf]
    %v39 = vld [vmem:[%s0 + $0x44] sm:$0xf]
    %v40 = vld [vmem:[%s0 + $0x48] sm:$0xf]
    %v41 = vld [vmem:[%s0 + $0x4c] sm:$0xf]
    %v42 = vld [vmem:[%s0 + $0x50] sm:$0xf]
    %v43 = vld [vmem:[%s0 + $0x54] sm:$0xf]
    %v44 = vld [vmem:[%s0 + $0x58] sm:$0xf]
    %v45 = vld [vmem:[%s0 + $0x5c] sm:$0xf]
    %v46 = vld [vmem:[%s0 + $0x60] sm:$0xf]
    %v47 = vld [vmem:[%s0 + $0x64] sm:$0xf]
    %v48 = vld [vmem:[%s0 + $0x68] sm:$0xf]
    %v49 = vld [vmem:[%s0 + $0x6c] sm:$0xf]
    %v50 = vld [vmem:[%s0 + $0x70] sm:$0xf]
    %v51 = vld [vmem:[%s0 + $0x74] sm:$0xf]
    %v52 = vld [vmem:[%s0 + $0x78] sm:$0xf]
    %v53 = vld [vmem:[%s0 + $0x7c] sm:$0xf]
    %v54 = vld [vmem:[%s0 + $0x80] sm:$0xf]
    %v55 = vld [vmem:[%s0 + $0x84] sm:$0xf]
    %v56 = vld [vmem:[%s0 + $0x88] sm:$0xf]
    %v57 = vld [vmem:[%s0 + $0x8c] sm:$0xf]
    %v58 = vld [vmem:[%s0 + $0x90] sm:$0xf]
    %v59 = vld [vmem:[%s0 + $0x94] sm:$0xf]
    %v60 = vld [vmem:[%s0 + $0x98] sm:$0xf]
    %v61 = vld [vmem:[%s0 + $0x9c] sm:$0xf]
    %v62 = vld [vmem:[%s0 + $0xa0] sm:$0xf]
    %v63 = vld [vmem:[%s0 + $0xa4] sm:$0xf]
    %v64 = vld [vmem:[%s0 + $0xa8] sm:$0xf]
    %v65 = vld [vmem:[%s0 + $0xac] sm:$0xf]
    %v66 = vld [vmem:[%s0 + $0xb0] sm:$0xf]
    %v67 = vld [vmem:[%s0 + $0xb4] sm:$0xf]
    %v68 = vld [vmem:[%s0 + $0xb8] sm:$0xf]
    %v69 = vld [vmem:[%s0 + $0xbc] sm:$0xf]
    %v70 = vld [vmem:[%s0 + $0xc0] sm:$0xf]
    %v71 = vld [vmem:[%s0 + $0xc4] sm:$0xf]
    %v72 = vld [vmem:[%s0 + $0xc8] sm:$0xf]
    %v73 = vld [vmem:[%s0 + $0xcc] sm:$0xf]
    %v74 = vld [vmem:[%s0 + $0xd0] sm:$0xf]
    %v75 = vld [vmem:[%s0 + $0xd4] sm:$0xf]
    %v76 = vld [vmem:[%s0 + $0xd8] sm:$0xf]
    %v77 = vld [vmem:[%s0 + $0xdc] sm:$0xf]
    %v78 = vld [vmem:[%s0 + $0xe0] sm:$0xf]
    %v79 = vld [vmem:[%s0 + $0xe4] sm:$0xf]
    %v80 = vld [vmem:[%s0 + $0xe8] sm:$0xf]
    %v81 = vld [vmem:[%s0 + $0xec] sm:$0xf]
    %v82 = vld [vmem:[%s0 + $0xf0] sm:$0xf]
    %v83 = vld [vmem:[%s0 + $0xf4] sm:$0xf]
    %v84 = vld [vmem:[%s0 + $0xf8] sm:$0xf]
    %v85 = vld [vmem:[%s0 + $0xfc] sm:$0xf]
    %v86 = vld [vmem:[%s1] sm:$0xff]
    %v151 = vunpack.c.l.b16 %v22
    %v152 = vunpack.c.l.b16 %v23
    %v153 = vunpack.c.l.b16 %v24
    %v154 = vunpack.c.l.b16 %v25
    %v155 = vunpack.c.l.b16 %v26
    %v156 = vunpack.c.l.b16 %v27
    %v157 = vunpack.c.l.b16 %v28
    %v158 = vunpack.c.l.b16 %v29
    %v159 = vunpack.c.l.b16 %v30
    %v160 = vunpack.c.l.b16 %v31
    %v161 = vunpack.c.l.b16 %v32
    %v162 = vunpack.c.l.b16 %v33
    %v163 = vunpack.c.l.b16 %v34
    %v164 = vunpack.c.l.b16 %v35
    %v165 = vunpack.c.l.b16 %v36
    %v166 = vunpack.c.l.b16 %v37
    %v167 = vunpack.c.l.b16 %v38
    %v168 = vunpack.c.l.b16 %v39
    %v169 = vunpack.c.l.b16 %v40
    %v170 = vunpack.c.l.b16 %v41
    %v171 = vunpack.c.l.b16 %v42
    %v172 = vunpack.c.l.b16 %v43
    %v173 = vunpack.c.l.b16 %v44
    %v174 = vunpack.c.l.b16 %v45
    %v175 = vunpack.c.l.b16 %v46
    %v176 = vunpack.c.l.b16 %v47
    %v177 = vunpack.c.l.b16 %v48
    %v178 = vunpack.c.l.b16 %v49
    %v179 = vunpack.c.l.b16 %v50
    %v180 = vunpack.c.l.b16 %v51
    %v181 = vunpack.c.l.b16 %v52
    %v182 = vunpack.c.l.b16 %v53
    %v183 = vunpack.c.l.b16 %v54
    %v184 = vunpack.c.l.b16 %v55
    %v185 = vunpack.c.l.b16 %v56
    %v186 = vunpack.c.l.b16 %v57
    %v187 = vunpack.c.l.b16 %v58
    %v188 = vunpack.c.l.b16 %v59
    %v189 = vunpack.c.l.b16 %v60
    %v190 = vunpack.c.l.b16 %v61
    %v191 = vunpack.c.l.b16 %v62
    %v192 = vunpack.c.l.b16 %v63
    %v193 = vunpack.c.l.b16 %v64
    %v194 = vunpack.c.l.b16 %v65
    %v195 = vunpack.c.l.b16 %v66
    %v196 = vunpack.c.l.b16 %v67
    %v197 = vunpack.c.l.b16 %v68
    %v198 = vunpack.c.l.b16 %v69
    %v199 = vunpack.c.l.b16 %v70
    %v200 = vunpack.c.l.b16 %v71
    %v201 = vunpack.c.l.b16 %v72
    %v202 = vunpack.c.l.b16 %v73
    %v203 = vunpack.c.l.b16 %v74
    %v204 = vunpack.c.l.b16 %v75
    %v205 = vunpack.c.l.b16 %v76
    %v206 = vunpack.c.l.b16 %v77
    %v207 = vunpack.c.l.b16 %v78
    %v208 = vunpack.c.l.b16 %v79
    %v209 = vunpack.c.l.b16 %v80
    %v210 = vunpack.c.l.b16 %v81
    %v211 = vunpack.c.l.b16 %v82
    %v212 = vunpack.c.l.b16 %v83
    %v213 = vunpack.c.l.b16 %v84
    %v214 = vunpack.c.l.b16 %v85
    %v215 = vpack.c.b16 %v152, %v151
    %v216 = vpack.c.b16 %v154, %v153
    %v217 = vpack.c.b16 %v156, %v155
    %v218 = vpack.c.b16 %v158, %v157
    %v219 = vpack.c.b16 %v160, %v159
    %v220 = vpack.c.b16 %v162, %v161
    %v221 = vpack.c.b16 %v164, %v163
    %v222 = vpack.c.b16 %v166, %v165
    %v223 = vpack.c.b16 %v168, %v167
    %v224 = vpack.c.b16 %v170, %v169
    %v225 = vpack.c.b16 %v172, %v171
    %v226 = vpack.c.b16 %v174, %v173
    %v227 = vpack.c.b16 %v176, %v175
    %v228 = vpack.c.b16 %v178, %v177
    %v229 = vpack.c.b16 %v180, %v179
    %v230 = vpack.c.b16 %v182, %v181
    %v231 = vpack.c.b16 %v184, %v183
    %v232 = vpack.c.b16 %v186, %v185
    %v233 = vpack.c.b16 %v188, %v187
    %v234 = vpack.c.b16 %v190, %v189
    %v235 = vpack.c.b16 %v192, %v191
    %v236 = vpack.c.b16 %v194, %v193
    %v237 = vpack.c.b16 %v196, %v195
    %v238 = vpack.c.b16 %v198, %v197
    %v239 = vpack.c.b16 %v200, %v199
    %v240 = vpack.c.b16 %v202, %v201
    %v241 = vpack.c.b16 %v204, %v203
    %v242 = vpack.c.b16 %v206, %v205
    %v243 = vpack.c.b16 %v208, %v207
    %v244 = vpack.c.b16 %v210, %v209
    %v245 = vpack.c.b16 %v212, %v211
    %v246 = vpack.c.b16 %v214, %v213
    %v248 = vunpack.c.l.b16 %v86
    %v249 = vunpack.c.h.b16 %v86
    %v250 = vpack.c.b16 %v248, %v248
    %v251 = vpack.c.b16 %v249, %v249
    %vm252 = vcmask 64512
    %v254 = vsel %vm252, %v215, 0
    %v257 = vsel %vm252, %v216, 0
    %v260 = vsel %vm252, %v217, 0
    %v263 = vsel %vm252, %v218, 0
    %v266 = vsel %vm252, %v219, 0
    %v269 = vsel %vm252, %v220, 0
    %v272 = vsel %vm252, %v221, 0
    %v275 = vsel %vm252, %v222, 0
    %v278 = vsel %vm252, %v223, 0
    %v281 = vsel %vm252, %v224, 0
    %v284 = vsel %vm252, %v225, 0
    %v287 = vsel %vm252, %v226, 0
    %v290 = vsel %vm252, %v227, 0
    %v293 = vsel %vm252, %v228, 0
    %v296 = vsel %vm252, %v229, 0
    %v299 = vsel %vm252, %v230, 0
    %v302 = vsel %vm252, %v231, 0
    %v305 = vsel %vm252, %v232, 0
    %v308 = vsel %vm252, %v233, 0
    %v311 = vsel %vm252, %v234, 0
    %v314 = vsel %vm252, %v235, 0
    %v317 = vsel %vm252, %v236, 0
    %v320 = vsel %vm252, %v237, 0
    %v323 = vsel %vm252, %v238, 0
    %v326 = vsel %vm252, %v239, 0
    %v329 = vsel %vm252, %v240, 0
    %v332 = vsel %vm252, %v241, 0
    %v335 = vsel %vm252, %v242, 0
    %v338 = vsel %vm252, %v243, 0
    %v341 = vsel %vm252, %v244, 0
    %v344 = vsel %vm252, %v245, 0
    %v347 = vsel %vm252, %v246, 0
    %vm349 = vcmask 1043456
    %v351 = vsel %vm349, %v250, 0
    %v354 = vsel %vm349, %v251, 0
    %356 = vmatpush.bf16.msra.mxu0 0
    %357 = vmatpush.bf16.msra.mxu0 0
    %358 = vmatpush.bf16.msra.mxu0 0
    %359 = vmatpush.bf16.msra.mxu0 0
    %360 = vmatpush.bf16.msra.mxu0 0
    %361 = vmatpush.bf16.msra.mxu0 0
    %362 = vmatpush.bf16.msra.mxu0 0
    %363 = vmatpush.bf16.msra.mxu0 %v351
    %364 = vmatmul.bf16.gmra.mxu0 %v254
    %v365 = vpop.f32.mrf.mxu0
    %v366 = vadd.f32 0.0, %v365
    %v367 = vpop.f32.mrf.mxu0
    %v368 = vadd.f32 0.0, %v367
    %369 = vmatmul.bf16.gmra.mxu0 %v257
    %v370 = vpop.f32.mrf.mxu0
    %v371 = vadd.f32 0.0, %v370
    %v372 = vpop.f32.mrf.mxu0
    %v373 = vadd.f32 0.0, %v372
    %374 = vmatmul.bf16.gmra.mxu0 %v260
    %v375 = vpop.f32.mrf.mxu0
    %v376 = vadd.f32 0.0, %v375
    %v377 = vpop.f32.mrf.mxu0
    %v378 = vadd.f32 0.0, %v377
    %379 = vmatmul.bf16.gmra.mxu0 %v263
    %v380 = vpop.f32.mrf.mxu0
    %v381 = vadd.f32 0.0, %v380
    %v382 = vpop.f32.mrf.mxu0
    %v383 = vadd.f32 0.0, %v382
    %384 = vmatmul.bf16.gmra.mxu0 %v266
    %v385 = vpop.f32.mrf.mxu0
    %v386 = vadd.f32 0.0, %v385
    %v387 = vpop.f32.mrf.mxu0
    %v388 = vadd.f32 0.0, %v387
    %389 = vmatmul.bf16.gmra.mxu0 %v269
    %v390 = vpop.f32.mrf.mxu0
    %v391 = vadd.f32 0.0, %v390
    %v392 = vpop.f32.mrf.mxu0
    %v393 = vadd.f32 0.0, %v392
    %394 = vmatmul.bf16.gmra.mxu0 %v272
    %v395 = vpop.f32.mrf.mxu0
    %v396 = vadd.f32 0.0, %v395
    %v397 = vpop.f32.mrf.mxu0
    %v398 = vadd.f32 0.0, %v397
    %399 = vmatmul.bf16.gmra.mxu0 %v275
    %v400 = vpop.f32.mrf.mxu0
    %v401 = vadd.f32 0.0, %v400
    %v402 = vpop.f32.mrf.mxu0
    %v403 = vadd.f32 0.0, %v402
    %404 = vmatmul.bf16.gmra.mxu0 %v278
    %v405 = vpop.f32.mrf.mxu0
    %v406 = vadd.f32 0.0, %v405
    %v407 = vpop.f32.mrf.mxu0
    %v408 = vadd.f32 0.0, %v407
    %409 = vmatmul.bf16.gmra.mxu0 %v281
    %v410 = vpop.f32.mrf.mxu0
    %v411 = vadd.f32 0.0, %v410
    %v412 = vpop.f32.mrf.mxu0
    %v413 = vadd.f32 0.0, %v412
    %414 = vmatmul.bf16.gmra.mxu0 %v284
    %v415 = vpop.f32.mrf.mxu0
    %v416 = vadd.f32 0.0, %v415
    %v417 = vpop.f32.mrf.mxu0
    %v418 = vadd.f32 0.0, %v417
    %419 = vmatmul.bf16.gmra.mxu0 %v287
    %v420 = vpop.f32.mrf.mxu0
    %v421 = vadd.f32 0.0, %v420
    %v422 = vpop.f32.mrf.mxu0
    %v423 = vadd.f32 0.0, %v422
    %424 = vmatmul.bf16.gmra.mxu0 %v290
    %v425 = vpop.f32.mrf.mxu0
    %v426 = vadd.f32 0.0, %v425
    %v427 = vpop.f32.mrf.mxu0
    %v428 = vadd.f32 0.0, %v427
    %429 = vmatmul.bf16.gmra.mxu0 %v293
    %v430 = vpop.f32.mrf.mxu0
    %v431 = vadd.f32 0.0, %v430
    %v432 = vpop.f32.mrf.mxu0
    %v433 = vadd.f32 0.0, %v432
    %434 = vmatmul.bf16.gmra.mxu0 %v296
    %v435 = vpop.f32.mrf.mxu0
    %v436 = vadd.f32 0.0, %v435
    %v437 = vpop.f32.mrf.mxu0
    %v438 = vadd.f32 0.0, %v437
    %439 = vmatmul.bf16.gmra.mxu0 %v299
    %v440 = vpop.f32.mrf.mxu0
    %v441 = vadd.f32 0.0, %v440
    %v442 = vpop.f32.mrf.mxu0
    %v443 = vadd.f32 0.0, %v442
    %444 = vmatmul.bf16.gmra.mxu0 %v302
    %v445 = vpop.f32.mrf.mxu0
    %v446 = vadd.f32 0.0, %v445
    %v447 = vpop.f32.mrf.mxu0
    %v448 = vadd.f32 0.0, %v447
    %449 = vmatmul.bf16.gmra.mxu0 %v305
    %v450 = vpop.f32.mrf.mxu0
    %v451 = vadd.f32 0.0, %v450
    %v452 = vpop.f32.mrf.mxu0
    %v453 = vadd.f32 0.0, %v452
    %454 = vmatmul.bf16.gmra.mxu0 %v308
    %v455 = vpop.f32.mrf.mxu0
    %v456 = vadd.f32 0.0, %v455
    %v457 = vpop.f32.mrf.mxu0
    %v458 = vadd.f32 0.0, %v457
    %459 = vmatmul.bf16.gmra.mxu0 %v311
    %v460 = vpop.f32.mrf.mxu0
    %v461 = vadd.f32 0.0, %v460
    %v462 = vpop.f32.mrf.mxu0
    %v463 = vadd.f32 0.0, %v462
    %464 = vmatmul.bf16.gmra.mxu0 %v314
    %v465 = vpop.f32.mrf.mxu0
    %v466 = vadd.f32 0.0, %v465
    %v467 = vpop.f32.mrf.mxu0
    %v468 = vadd.f32 0.0, %v467
    %469 = vmatmul.bf16.gmra.mxu0 %v317
    %v470 = vpop.f32.mrf.mxu0
    %v471 = vadd.f32 0.0, %v470
    %v472 = vpop.f32.mrf.mxu0
    %v473 = vadd.f32 0.0, %v472
    %474 = vmatmul.bf16.gmra.mxu0 %v320
    %v475 = vpop.f32.mrf.mxu0
    %v476 = vadd.f32 0.0, %v475
    %v477 = vpop.f32.mrf.mxu0
    %v478 = vadd.f32 0.0, %v477
    %479 = vmatmul.bf16.gmra.mxu0 %v323
    %v480 = vpop.f32.mrf.mxu0
    %v481 = vadd.f32 0.0, %v480
    %v482 = vpop.f32.mrf.mxu0
    %v483 = vadd.f32 0.0, %v482
    %484 = vmatmul.bf16.gmra.mxu0 %v326
    %v485 = vpop.f32.mrf.mxu0
    %v486 = vadd.f32 0.0, %v485
    %v487 = vpop.f32.mrf.mxu0
    %v488 = vadd.f32 0.0, %v487
    %489 = vmatmul.bf16.gmra.mxu0 %v329
    %v490 = vpop.f32.mrf.mxu0
    %v491 = vadd.f32 0.0, %v490
    %v492 = vpop.f32.mrf.mxu0
    %v493 = vadd.f32 0.0, %v492
    %494 = vmatmul.bf16.gmra.mxu0 %v332
    %v495 = vpop.f32.mrf.mxu0
    %v496 = vadd.f32 0.0, %v495
    %v497 = vpop.f32.mrf.mxu0
    %v498 = vadd.f32 0.0, %v497
    %499 = vmatmul.bf16.gmra.mxu0 %v335
    %v500 = vpop.f32.mrf.mxu0
    %v501 = vadd.f32 0.0, %v500
    %v502 = vpop.f32.mrf.mxu0
    %v503 = vadd.f32 0.0, %v502
    %504 = vmatmul.bf16.gmra.mxu0 %v338
    %v505 = vpop.f32.mrf.mxu0
    %v506 = vadd.f32 0.0, %v505
    %v507 = vpop.f32.mrf.mxu0
    %v508 = vadd.f32 0.0, %v507
    %509 = vmatmul.bf16.gmra.mxu0 %v341
    %v510 = vpop.f32.mrf.mxu0
    %v511 = vadd.f32 0.0, %v510
    %v512 = vpop.f32.mrf.mxu0
    %v513 = vadd.f32 0.0, %v512
    %514 = vmatmul.bf16.gmra.mxu0 %v344
    %v515 = vpop.f32.mrf.mxu0
    %v516 = vadd.f32 0.0, %v515
    %v517 = vpop.f32.mrf.mxu0
    %v518 = vadd.f32 0.0, %v517
    %519 = vmatmul.bf16.gmra.mxu0 %v347
    %v520 = vpop.f32.mrf.mxu0
    %v521 = vadd.f32 0.0, %v520
    %v522 = vpop.f32.mrf.mxu0
    %v523 = vadd.f32 0.0, %v522
    %524 = vdwg.mxu0
    %525 = vmatpush.bf16.msra.mxu0 0
    %526 = vmatpush.bf16.msra.mxu0 0
    %527 = vmatpush.bf16.msra.mxu0 0
    %528 = vmatpush.bf16.msra.mxu0 0
    %529 = vmatpush.bf16.msra.mxu0 0
    %530 = vmatpush.bf16.msra.mxu0 0
    %531 = vmatpush.bf16.msra.mxu0 0
    %532 = vmatpush.bf16.msra.mxu0 %v354
    %533 = vmatmul.bf16.gmra.mxu0 %v254
    %v534 = vpop.f32.mrf.mxu0
    %v535 = vadd.f32 0.0, %v534
    %v536 = vpop.f32.mrf.mxu0
    %v537 = vadd.f32 0.0, %v536
    %538 = vmatmul.bf16.gmra.mxu0 %v257
    %v539 = vpop.f32.mrf.mxu0
    %v540 = vadd.f32 0.0, %v539
    %v541 = vpop.f32.mrf.mxu0
    %v542 = vadd.f32 0.0, %v541
    %543 = vmatmul.bf16.gmra.mxu0 %v260
    %v544 = vpop.f32.mrf.mxu0
    %v545 = vadd.f32 0.0, %v544
    %v546 = vpop.f32.mrf.mxu0
    %v547 = vadd.f32 0.0, %v546
    %548 = vmatmul.bf16.gmra.mxu0 %v263
    %v549 = vpop.f32.mrf.mxu0
    %v550 = vadd.f32 0.0, %v549
    %v551 = vpop.f32.mrf.mxu0
    %v552 = vadd.f32 0.0, %v551
    %553 = vmatmul.bf16.gmra.mxu0 %v266
    %v554 = vpop.f32.mrf.mxu0
    %v555 = vadd.f32 0.0, %v554
    %v556 = vpop.f32.mrf.mxu0
    %v557 = vadd.f32 0.0, %v556
    %558 = vmatmul.bf16.gmra.mxu0 %v269
    %v559 = vpop.f32.mrf.mxu0
    %v560 = vadd.f32 0.0, %v559
    %v561 = vpop.f32.mrf.mxu0
    %v562 = vadd.f32 0.0, %v561
    %563 = vmatmul.bf16.gmra.mxu0 %v272
    %v564 = vpop.f32.mrf.mxu0
    %v565 = vadd.f32 0.0, %v564
    %v566 = vpop.f32.mrf.mxu0
    %v567 = vadd.f32 0.0, %v566
    %568 = vmatmul.bf16.gmra.mxu0 %v275
    %v569 = vpop.f32.mrf.mxu0
    %v570 = vadd.f32 0.0, %v569
    %v571 = vpop.f32.mrf.mxu0
    %v572 = vadd.f32 0.0, %v571
    %573 = vmatmul.bf16.gmra.mxu0 %v278
    %v574 = vpop.f32.mrf.mxu0
    %v575 = vadd.f32 0.0, %v574
    %v576 = vpop.f32.mrf.mxu0
    %v577 = vadd.f32 0.0, %v576
    %578 = vmatmul.bf16.gmra.mxu0 %v281
    %v579 = vpop.f32.mrf.mxu0
    %v580 = vadd.f32 0.0, %v579
    %v581 = vpop.f32.mrf.mxu0
    %v582 = vadd.f32 0.0, %v581
    %583 = vmatmul.bf16.gmra.mxu0 %v284
    %v584 = vpop.f32.mrf.mxu0
    %v585 = vadd.f32 0.0, %v584
    %v586 = vpop.f32.mrf.mxu0
    %v587 = vadd.f32 0.0, %v586
    %588 = vmatmul.bf16.gmra.mxu0 %v287
    %v589 = vpop.f32.mrf.mxu0
    %v590 = vadd.f32 0.0, %v589
    %v591 = vpop.f32.mrf.mxu0
    %v592 = vadd.f32 0.0, %v591
    %593 = vmatmul.bf16.gmra.mxu0 %v290
    %v594 = vpop.f32.mrf.mxu0
    %v595 = vadd.f32 0.0, %v594
    %v596 = vpop.f32.mrf.mxu0
    %v597 = vadd.f32 0.0, %v596
    %598 = vmatmul.bf16.gmra.mxu0 %v293
    %v599 = vpop.f32.mrf.mxu0
    %v600 = vadd.f32 0.0, %v599
    %v601 = vpop.f32.mrf.mxu0
    %v602 = vadd.f32 0.0, %v601
    %603 = vmatmul.bf16.gmra.mxu0 %v296
    %v604 = vpop.f32.mrf.mxu0
    %v605 = vadd.f32 0.0, %v604
    %v606 = vpop.f32.mrf.mxu0
    %v607 = vadd.f32 0.0, %v606
    %608 = vmatmul.bf16.gmra.mxu0 %v299
    %v609 = vpop.f32.mrf.mxu0
    %v610 = vadd.f32 0.0, %v609
    %v611 = vpop.f32.mrf.mxu0
    %v612 = vadd.f32 0.0, %v611
    %613 = vmatmul.bf16.gmra.mxu0 %v302
    %v614 = vpop.f32.mrf.mxu0
    %v615 = vadd.f32 0.0, %v614
    %v616 = vpop.f32.mrf.mxu0
    %v617 = vadd.f32 0.0, %v616
    %618 = vmatmul.bf16.gmra.mxu0 %v305
    %v619 = vpop.f32.mrf.mxu0
    %v620 = vadd.f32 0.0, %v619
    %v621 = vpop.f32.mrf.mxu0
    %v622 = vadd.f32 0.0, %v621
    %623 = vmatmul.bf16.gmra.mxu0 %v308
    %v624 = vpop.f32.mrf.mxu0
    %v625 = vadd.f32 0.0, %v624
    %v626 = vpop.f32.mrf.mxu0
    %v627 = vadd.f32 0.0, %v626
    %628 = vmatmul.bf16.gmra.mxu0 %v311
    %v629 = vpop.f32.mrf.mxu0
    %v630 = vadd.f32 0.0, %v629
    %v631 = vpop.f32.mrf.mxu0
    %v632 = vadd.f32 0.0, %v631
    %633 = vmatmul.bf16.gmra.mxu0 %v314
    %v634 = vpop.f32.mrf.mxu0
    %v635 = vadd.f32 0.0, %v634
    %v636 = vpop.f32.mrf.mxu0
    %v637 = vadd.f32 0.0, %v636
    %638 = vmatmul.bf16.gmra.mxu0 %v317
    %v639 = vpop.f32.mrf.mxu0
    %v640 = vadd.f32 0.0, %v639
    %v641 = vpop.f32.mrf.mxu0
    %v642 = vadd.f32 0.0, %v641
    %643 = vmatmul.bf16.gmra.mxu0 %v320
    %v644 = vpop.f32.mrf.mxu0
    %v645 = vadd.f32 0.0, %v644
    %v646 = vpop.f32.mrf.mxu0
    %v647 = vadd.f32 0.0, %v646
    %648 = vmatmul.bf16.gmra.mxu0 %v323
    %v649 = vpop.f32.mrf.mxu0
    %v650 = vadd.f32 0.0, %v649
    %v651 = vpop.f32.mrf.mxu0
    %v652 = vadd.f32 0.0, %v651
    %653 = vmatmul.bf16.gmra.mxu0 %v326
    %v654 = vpop.f32.mrf.mxu0
    %v655 = vadd.f32 0.0, %v654
    %v656 = vpop.f32.mrf.mxu0
    %v657 = vadd.f32 0.0, %v656
    %658 = vmatmul.bf16.gmra.mxu0 %v329
    %v659 = vpop.f32.mrf.mxu0
    %v660 = vadd.f32 0.0, %v659
    %v661 = vpop.f32.mrf.mxu0
    %v662 = vadd.f32 0.0, %v661
    %663 = vmatmul.bf16.gmra.mxu0 %v332
    %v664 = vpop.f32.mrf.mxu0
    %v665 = vadd.f32 0.0, %v664
    %v666 = vpop.f32.mrf.mxu0
    %v667 = vadd.f32 0.0, %v666
    %668 = vmatmul.bf16.gmra.mxu0 %v335
    %v669 = vpop.f32.mrf.mxu0
    %v670 = vadd.f32 0.0, %v669
    %v671 = vpop.f32.mrf.mxu0
    %v672 = vadd.f32 0.0, %v671
    %673 = vmatmul.bf16.gmra.mxu0 %v338
    %v674 = vpop.f32.mrf.mxu0
    %v675 = vadd.f32 0.0, %v674
    %v676 = vpop.f32.mrf.mxu0
    %v677 = vadd.f32 0.0, %v676
    %678 = vmatmul.bf16.gmra.mxu0 %v341
    %v679 = vpop.f32.mrf.mxu0
    %v680 = vadd.f32 0.0, %v679
    %v681 = vpop.f32.mrf.mxu0
    %v682 = vadd.f32 0.0, %v681
    %683 = vmatmul.bf16.gmra.mxu0 %v344
    %v684 = vpop.f32.mrf.mxu0
    %v685 = vadd.f32 0.0, %v684
    %v686 = vpop.f32.mrf.mxu0
    %v687 = vadd.f32 0.0, %v686
    %688 = vmatmul.bf16.gmra.mxu0 %v347
    %v689 = vpop.f32.mrf.mxu0
    %v690 = vadd.f32 0.0, %v689
    %v691 = vpop.f32.mrf.mxu0
    %v692 = vadd.f32 0.0, %v691
    %693 = vdwg.mxu0
    %v694 = vld [vmem:[%s2] sm:$0x1]
    %v696 = vperm.slane %v694, 0
    %v698 = vadd.f32 %v366, %v696
    %v699 = vadd.f32 %v368, %v696
    %v700 = vadd.f32 %v371, %v696
    %v701 = vadd.f32 %v373, %v696
    %v702 = vadd.f32 %v376, %v696
    %v703 = vadd.f32 %v378, %v696
    %v704 = vadd.f32 %v381, %v696
    %v705 = vadd.f32 %v383, %v696
    %v706 = vadd.f32 %v386, %v696
    %v707 = vadd.f32 %v388, %v696
    %v708 = vadd.f32 %v391, %v696
    %v709 = vadd.f32 %v393, %v696
    %v710 = vadd.f32 %v396, %v696
    %v711 = vadd.f32 %v398, %v696
    %v712 = vadd.f32 %v401, %v696
    %v713 = vadd.f32 %v403, %v696
    %v714 = vadd.f32 %v406, %v696
    %v715 = vadd.f32 %v408, %v696
    %v716 = vadd.f32 %v411, %v696
    %v717 = vadd.f32 %v413, %v696
    %v718 = vadd.f32 %v416, %v696
    %v719 = vadd.f32 %v418, %v696
    %v720 = vadd.f32 %v421, %v696
    %v721 = vadd.f32 %v423, %v696
    %v722 = vadd.f32 %v426, %v696
    %v723 = vadd.f32 %v428, %v696
    %v724 = vadd.f32 %v431, %v696
    %v725 = vadd.f32 %v433, %v696
    %v726 = vadd.f32 %v436, %v696
    %v727 = vadd.f32 %v438, %v696
    %v728 = vadd.f32 %v441, %v696
    %v729 = vadd.f32 %v443, %v696
    %v730 = vadd.f32 %v446, %v696
    %v731 = vadd.f32 %v448, %v696
    %v732 = vadd.f32 %v451, %v696
    %v733 = vadd.f32 %v453, %v696
    %v734 = vadd.f32 %v456, %v696
    %v735 = vadd.f32 %v458, %v696
    %v736 = vadd.f32 %v461, %v696
    %v737 = vadd.f32 %v463, %v696
    %v738 = vadd.f32 %v466, %v696
    %v739 = vadd.f32 %v468, %v696
    %v740 = vadd.f32 %v471, %v696
    %v741 = vadd.f32 %v473, %v696
    %v742 = vadd.f32 %v476, %v696
    %v743 = vadd.f32 %v478, %v696
    %v744 = vadd.f32 %v481, %v696
    %v745 = vadd.f32 %v483, %v696
    %v746 = vadd.f32 %v486, %v696
    %v747 = vadd.f32 %v488, %v696
    %v748 = vadd.f32 %v491, %v696
    %v749 = vadd.f32 %v493, %v696
    %v750 = vadd.f32 %v496, %v696
    %v751 = vadd.f32 %v498, %v696
    %v752 = vadd.f32 %v501, %v696
    %v753 = vadd.f32 %v503, %v696
    %v754 = vadd.f32 %v506, %v696
    %v755 = vadd.f32 %v508, %v696
    %v756 = vadd.f32 %v511, %v696
    %v757 = vadd.f32 %v513, %v696
    %v758 = vadd.f32 %v516, %v696
    %v759 = vadd.f32 %v518, %v696
    %v760 = vadd.f32 %v521, %v696
    %v761 = vadd.f32 %v523, %v696
    %v762 = vld [vmem:[%s3] sm:$0x1]
    %v764 = vperm.slane %v762, 0
    %v766 = vadd.f32 %v535, %v764
    %v767 = vadd.f32 %v537, %v764
    %v768 = vadd.f32 %v540, %v764
    %v769 = vadd.f32 %v542, %v764
    %v770 = vadd.f32 %v545, %v764
    %v771 = vadd.f32 %v547, %v764
    %v772 = vadd.f32 %v550, %v764
    %v773 = vadd.f32 %v552, %v764
    %v774 = vadd.f32 %v555, %v764
    %v775 = vadd.f32 %v557, %v764
    %v776 = vadd.f32 %v560, %v764
    %v777 = vadd.f32 %v562, %v764
    %v778 = vadd.f32 %v565, %v764
    %v779 = vadd.f32 %v567, %v764
    %v780 = vadd.f32 %v570, %v764
    %v781 = vadd.f32 %v572, %v764
    %v782 = vadd.f32 %v575, %v764
    %v783 = vadd.f32 %v577, %v764
    %v784 = vadd.f32 %v580, %v764
    %v785 = vadd.f32 %v582, %v764
    %v786 = vadd.f32 %v585, %v764
    %v787 = vadd.f32 %v587, %v764
    %v788 = vadd.f32 %v590, %v764
    %v789 = vadd.f32 %v592, %v764
    %v790 = vadd.f32 %v595, %v764
    %v791 = vadd.f32 %v597, %v764
    %v792 = vadd.f32 %v600, %v764
    %v793 = vadd.f32 %v602, %v764
    %v794 = vadd.f32 %v605, %v764
    %v795 = vadd.f32 %v607, %v764
    %v796 = vadd.f32 %v610, %v764
    %v797 = vadd.f32 %v612, %v764
    %v798 = vadd.f32 %v615, %v764
    %v799 = vadd.f32 %v617, %v764
    %v800 = vadd.f32 %v620, %v764
    %v801 = vadd.f32 %v622, %v764
    %v802 = vadd.f32 %v625, %v764
    %v803 = vadd.f32 %v627, %v764
    %v804 = vadd.f32 %v630, %v764
    %v805 = vadd.f32 %v632, %v764
    %v806 = vadd.f32 %v635, %v764
    %v807 = vadd.f32 %v637, %v764
    %v808 = vadd.f32 %v640, %v764
    %v809 = vadd.f32 %v642, %v764
    %v810 = vadd.f32 %v645, %v764
    %v811 = vadd.f32 %v647, %v764
    %v812 = vadd.f32 %v650, %v764
    %v813 = vadd.f32 %v652, %v764
    %v814 = vadd.f32 %v655, %v764
    %v815 = vadd.f32 %v657, %v764
    %v816 = vadd.f32 %v660, %v764
    %v817 = vadd.f32 %v662, %v764
    %v818 = vadd.f32 %v665, %v764
    %v819 = vadd.f32 %v667, %v764
    %v820 = vadd.f32 %v670, %v764
    %v821 = vadd.f32 %v672, %v764
    %v822 = vadd.f32 %v675, %v764
    %v823 = vadd.f32 %v677, %v764
    %v824 = vadd.f32 %v680, %v764
    %v825 = vadd.f32 %v682, %v764
    %v826 = vadd.f32 %v685, %v764
    %v827 = vadd.f32 %v687, %v764
    %v828 = vadd.f32 %v690, %v764
    %v829 = vadd.f32 %v692, %v764
    %v830 = vxor.u32 %v698, 2147483648
    %v831 = vxor.u32 %v699, 2147483648
    %v832 = vxor.u32 %v700, 2147483648
    %v833 = vxor.u32 %v701, 2147483648
    %v834 = vxor.u32 %v702, 2147483648
    %v835 = vxor.u32 %v703, 2147483648
    %v836 = vxor.u32 %v704, 2147483648
    %v837 = vxor.u32 %v705, 2147483648
    %v838 = vxor.u32 %v706, 2147483648
    %v839 = vxor.u32 %v707, 2147483648
    %v840 = vxor.u32 %v708, 2147483648
    %v841 = vxor.u32 %v709, 2147483648
    %v842 = vxor.u32 %v710, 2147483648
    %v843 = vxor.u32 %v711, 2147483648
    %v844 = vxor.u32 %v712, 2147483648
    %v845 = vxor.u32 %v713, 2147483648
    %v846 = vxor.u32 %v714, 2147483648
    %v847 = vxor.u32 %v715, 2147483648
    %v848 = vxor.u32 %v716, 2147483648
    %v849 = vxor.u32 %v717, 2147483648
    %v850 = vxor.u32 %v718, 2147483648
    %v851 = vxor.u32 %v719, 2147483648
    %v852 = vxor.u32 %v720, 2147483648
    %v853 = vxor.u32 %v721, 2147483648
    %v854 = vxor.u32 %v722, 2147483648
    %v855 = vxor.u32 %v723, 2147483648
    %v856 = vxor.u32 %v724, 2147483648
    %v857 = vxor.u32 %v725, 2147483648
    %v858 = vxor.u32 %v726, 2147483648
    %v859 = vxor.u32 %v727, 2147483648
    %v860 = vxor.u32 %v728, 2147483648
    %v861 = vxor.u32 %v729, 2147483648
    %v862 = vxor.u32 %v730, 2147483648
    %v863 = vxor.u32 %v731, 2147483648
    %v864 = vxor.u32 %v732, 2147483648
    %v865 = vxor.u32 %v733, 2147483648
    %v866 = vxor.u32 %v734, 2147483648
    %v867 = vxor.u32 %v735, 2147483648
    %v868 = vxor.u32 %v736, 2147483648
    %v869 = vxor.u32 %v737, 2147483648
    %v870 = vxor.u32 %v738, 2147483648
    %v871 = vxor.u32 %v739, 2147483648
    %v872 = vxor.u32 %v740, 2147483648
    %v873 = vxor.u32 %v741, 2147483648
    %v874 = vxor.u32 %v742, 2147483648
    %v875 = vxor.u32 %v743, 2147483648
    %v876 = vxor.u32 %v744, 2147483648
    %v877 = vxor.u32 %v745, 2147483648
    %v878 = vxor.u32 %v746, 2147483648
    %v879 = vxor.u32 %v747, 2147483648
    %v880 = vxor.u32 %v748, 2147483648
    %v881 = vxor.u32 %v749, 2147483648
    %v882 = vxor.u32 %v750, 2147483648
    %v883 = vxor.u32 %v751, 2147483648
    %v884 = vxor.u32 %v752, 2147483648
    %v885 = vxor.u32 %v753, 2147483648
    %v886 = vxor.u32 %v754, 2147483648
    %v887 = vxor.u32 %v755, 2147483648
    %v888 = vxor.u32 %v756, 2147483648
    %v889 = vxor.u32 %v757, 2147483648
    %v890 = vxor.u32 %v758, 2147483648
    %v891 = vxor.u32 %v759, 2147483648
    %v892 = vxor.u32 %v760, 2147483648
    %v893 = vxor.u32 %v761, 2147483648
    %v894 = vmul.f32 %v830, 1.442695
    %v895 = vpow.pop %v894
    %v896 = vmul.f32 %v831, 1.442695
    %v897 = vpow.pop %v896
    %v898 = vmul.f32 %v832, 1.442695
    %v899 = vpow.pop %v898
    %v900 = vmul.f32 %v833, 1.442695
    %v901 = vpow.pop %v900
    %v902 = vmul.f32 %v834, 1.442695
    %v903 = vpow.pop %v902
    %v904 = vmul.f32 %v835, 1.442695
    %v905 = vpow.pop %v904
    %v906 = vmul.f32 %v836, 1.442695
    %v907 = vpow.pop %v906
    %v908 = vmul.f32 %v837, 1.442695
    %v909 = vpow.pop %v908
    %v910 = vmul.f32 %v838, 1.442695
    %v911 = vpow.pop %v910
    %v912 = vmul.f32 %v839, 1.442695
    %v913 = vpow.pop %v912
    %v914 = vmul.f32 %v840, 1.442695
    %v915 = vpow.pop %v914
    %v916 = vmul.f32 %v841, 1.442695
    %v917 = vpow.pop %v916
    %v918 = vmul.f32 %v842, 1.442695
    %v919 = vpow.pop %v918
    %v920 = vmul.f32 %v843, 1.442695
    %v921 = vpow.pop %v920
    %v922 = vmul.f32 %v844, 1.442695
    %v923 = vpow.pop %v922
    %v924 = vmul.f32 %v845, 1.442695
    %v925 = vpow.pop %v924
    %v926 = vmul.f32 %v846, 1.442695
    %v927 = vpow.pop %v926
    %v928 = vmul.f32 %v847, 1.442695
    %v929 = vpow.pop %v928
    %v930 = vmul.f32 %v848, 1.442695
    %v931 = vpow.pop %v930
    %v932 = vmul.f32 %v849, 1.442695
    %v933 = vpow.pop %v932
    %v934 = vmul.f32 %v850, 1.442695
    %v935 = vpow.pop %v934
    %v936 = vmul.f32 %v851, 1.442695
    %v937 = vpow.pop %v936
    %v938 = vmul.f32 %v852, 1.442695
    %v939 = vpow.pop %v938
    %v940 = vmul.f32 %v853, 1.442695
    %v941 = vpow.pop %v940
    %v942 = vmul.f32 %v854, 1.442695
    %v943 = vpow.pop %v942
    %v944 = vmul.f32 %v855, 1.442695
    %v945 = vpow.pop %v944
    %v946 = vmul.f32 %v856, 1.442695
    %v947 = vpow.pop %v946
    %v948 = vmul.f32 %v857, 1.442695
    %v949 = vpow.pop %v948
    %v950 = vmul.f32 %v858, 1.442695
    %v951 = vpow.pop %v950
    %v952 = vmul.f32 %v859, 1.442695
    %v953 = vpow.pop %v952
    %v954 = vmul.f32 %v860, 1.442695
    %v955 = vpow.pop %v954
    %v956 = vmul.f32 %v861, 1.442695
    %v957 = vpow.pop %v956
    %v958 = vmul.f32 %v862, 1.442695
    %v959 = vpow.pop %v958
    %v960 = vmul.f32 %v863, 1.442695
    %v961 = vpow.pop %v960
    %v962 = vmul.f32 %v864, 1.442695
    %v963 = vpow.pop %v962
    %v964 = vmul.f32 %v865, 1.442695
    %v965 = vpow.pop %v964
    %v966 = vmul.f32 %v866, 1.442695
    %v967 = vpow.pop %v966
    %v968 = vmul.f32 %v867, 1.442695
    %v969 = vpow.pop %v968
    %v970 = vmul.f32 %v868, 1.442695
    %v971 = vpow.pop %v970
    %v972 = vmul.f32 %v869, 1.442695
    %v973 = vpow.pop %v972
    %v974 = vmul.f32 %v870, 1.442695
    %v975 = vpow.pop %v974
    %v976 = vmul.f32 %v871, 1.442695
    %v977 = vpow.pop %v976
    %v978 = vmul.f32 %v872, 1.442695
    %v979 = vpow.pop %v978
    %v980 = vmul.f32 %v873, 1.442695
    %v981 = vpow.pop %v980
    %v982 = vmul.f32 %v874, 1.442695
    %v983 = vpow.pop %v982
    %v984 = vmul.f32 %v875, 1.442695
    %v985 = vpow.pop %v984
    %v986 = vmul.f32 %v876, 1.442695
    %v987 = vpow.pop %v986
    %v988 = vmul.f32 %v877, 1.442695
    %v989 = vpow.pop %v988
    %v990 = vmul.f32 %v878, 1.442695
    %v991 = vpow.pop %v990
    %v992 = vmul.f32 %v879, 1.442695
    %v993 = vpow.pop %v992
    %v994 = vmul.f32 %v880, 1.442695
    %v995 = vpow.pop %v994
    %v996 = vmul.f32 %v881, 1.442695
    %v997 = vpow.pop %v996
    %v998 = vmul.f32 %v882, 1.442695
    %v999 = vpow.pop %v998
    %v1000 = vmul.f32 %v883, 1.442695
    %v1001 = vpow.pop %v1000
    %v1002 = vmul.f32 %v884, 1.442695
    %v1003 = vpow.pop %v1002
    %v1004 = vmul.f32 %v885, 1.442695
    %v1005 = vpow.pop %v1004
    %v1006 = vmul.f32 %v886, 1.442695
    %v1007 = vpow.pop %v1006
    %v1008 = vmul.f32 %v887, 1.442695
    %v1009 = vpow.pop %v1008
    %v1010 = vmul.f32 %v888, 1.442695
    %v1011 = vpow.pop %v1010
    %v1012 = vmul.f32 %v889, 1.442695
    %v1013 = vpow.pop %v1012
    %v1014 = vmul.f32 %v890, 1.442695
    %v1015 = vpow.pop %v1014
    %v1016 = vmul.f32 %v891, 1.442695
    %v1017 = vpow.pop %v1016
    %v1018 = vmul.f32 %v892, 1.442695
    %v1019 = vpow.pop %v1018
    %v1020 = vmul.f32 %v893, 1.442695
    %v1021 = vpow.pop %v1020
    %v1022 = vadd.f32 %v895, 1.0
    %v1023 = vadd.f32 %v897, 1.0
    %v1024 = vadd.f32 %v899, 1.0
    %v1025 = vadd.f32 %v901, 1.0
    %v1026 = vadd.f32 %v903, 1.0
    %v1027 = vadd.f32 %v905, 1.0
    %v1028 = vadd.f32 %v907, 1.0
    %v1029 = vadd.f32 %v909, 1.0
    %v1030 = vadd.f32 %v911, 1.0
    %v1031 = vadd.f32 %v913, 1.0
    %v1032 = vadd.f32 %v915, 1.0
    %v1033 = vadd.f32 %v917, 1.0
    %v1034 = vadd.f32 %v919, 1.0
    %v1035 = vadd.f32 %v921, 1.0
    %v1036 = vadd.f32 %v923, 1.0
    %v1037 = vadd.f32 %v925, 1.0
    %v1038 = vadd.f32 %v927, 1.0
    %v1039 = vadd.f32 %v929, 1.0
    %v1040 = vadd.f32 %v931, 1.0
    %v1041 = vadd.f32 %v933, 1.0
    %v1042 = vadd.f32 %v935, 1.0
    %v1043 = vadd.f32 %v937, 1.0
    %v1044 = vadd.f32 %v939, 1.0
    %v1045 = vadd.f32 %v941, 1.0
    %v1046 = vadd.f32 %v943, 1.0
    %v1047 = vadd.f32 %v945, 1.0
    %v1048 = vadd.f32 %v947, 1.0
    %v1049 = vadd.f32 %v949, 1.0
    %v1050 = vadd.f32 %v951, 1.0
    %v1051 = vadd.f32 %v953, 1.0
    %v1052 = vadd.f32 %v955, 1.0
    %v1053 = vadd.f32 %v957, 1.0
    %v1054 = vadd.f32 %v959, 1.0
    %v1055 = vadd.f32 %v961, 1.0
    %v1056 = vadd.f32 %v963, 1.0
    %v1057 = vadd.f32 %v965, 1.0
    %v1058 = vadd.f32 %v967, 1.0
    %v1059 = vadd.f32 %v969, 1.0
    %v1060 = vadd.f32 %v971, 1.0
    %v1061 = vadd.f32 %v973, 1.0
    %v1062 = vadd.f32 %v975, 1.0
    %v1063 = vadd.f32 %v977, 1.0
    %v1064 = vadd.f32 %v979, 1.0
    %v1065 = vadd.f32 %v981, 1.0
    %v1066 = vadd.f32 %v983, 1.0
    %v1067 = vadd.f32 %v985, 1.0
    %v1068 = vadd.f32 %v987, 1.0
    %v1069 = vadd.f32 %v989, 1.0
    %v1070 = vadd.f32 %v991, 1.0
    %v1071 = vadd.f32 %v993, 1.0
    %v1072 = vadd.f32 %v995, 1.0
    %v1073 = vadd.f32 %v997, 1.0
    %v1074 = vadd.f32 %v999, 1.0
    %v1075 = vadd.f32 %v1001, 1.0
    %v1076 = vadd.f32 %v1003, 1.0
    %v1077 = vadd.f32 %v1005, 1.0
    %v1078 = vadd.f32 %v1007, 1.0
    %v1079 = vadd.f32 %v1009, 1.0
    %v1080 = vadd.f32 %v1011, 1.0
    %v1081 = vadd.f32 %v1013, 1.0
    %v1082 = vadd.f32 %v1015, 1.0
    %v1083 = vadd.f32 %v1017, 1.0
    %v1084 = vadd.f32 %v1019, 1.0
    %v1085 = vadd.f32 %v1021, 1.0
    %v1086 = vrcp.pop %v1022
    %v1087 = vmul.f32 %v1022, %v1086
    %v1088 = vsub.f32 1.0, %v1087
    %v1089 = vmul.f32 %v1086, %v1088
    %v1090 = vadd.f32 %v1086, %v1089
    %vm1091 = vweird.f32 %v1022
    %vm1092 = vweird.f32 %v1086
    %vm1093 = vmor %vm1091, %vm1092
    %v1094 = vsel %vm1093, %v1086, %v1090
    %v1095 = vand.u32 2147483647, %v1022
    %vm1096 = vcmp.eq.f32.partialorder %v1095, 8.507059e+37
    %v1097 = vand.u32 %v1022, 2147483648
    %v1098 = vor.u32 1.1754944e-38, %v1097
    %v1099 = vsel %vm1096, %v1098, %v1094
    %v1100 = vmul.f32 1.0, %v1099
    %v1101 = vrcp.pop %v1023
    %v1102 = vmul.f32 %v1023, %v1101
    %v1103 = vsub.f32 1.0, %v1102
    %v1104 = vmul.f32 %v1101, %v1103
    %v1105 = vadd.f32 %v1101, %v1104
    %vm1106 = vweird.f32 %v1023
    %vm1107 = vweird.f32 %v1101
    %vm1108 = vmor %vm1106, %vm1107
    %v1109 = vsel %vm1108, %v1101, %v1105
    %v1110 = vand.u32 2147483647, %v1023
    %vm1111 = vcmp.eq.f32.partialorder %v1110, 8.507059e+37
    %v1112 = vand.u32 %v1023, 2147483648
    %v1113 = vor.u32 1.1754944e-38, %v1112
    %v1114 = vsel %vm1111, %v1113, %v1109
    %v1115 = vmul.f32 1.0, %v1114
    %v1116 = vrcp.pop %v1024
    %v1117 = vmul.f32 %v1024, %v1116
    %v1118 = vsub.f32 1.0, %v1117
    %v1119 = vmul.f32 %v1116, %v1118
    %v1120 = vadd.f32 %v1116, %v1119
    %vm1121 = vweird.f32 %v1024
    %vm1122 = vweird.f32 %v1116
    %vm1123 = vmor %vm1121, %vm1122
    %v1124 = vsel %vm1123, %v1116, %v1120
    %v1125 = vand.u32 2147483647, %v1024
    %vm1126 = vcmp.eq.f32.partialorder %v1125, 8.507059e+37
    %v1127 = vand.u32 %v1024, 2147483648
    %v1128 = vor.u32 1.1754944e-38, %v1127
    %v1129 = vsel %vm1126, %v1128, %v1124
    %v1130 = vmul.f32 1.0, %v1129
    %v1131 = vrcp.pop %v1025
    %v1132 = vmul.f32 %v1025, %v1131
    %v1133 = vsub.f32 1.0, %v1132
    %v1134 = vmul.f32 %v1131, %v1133
    %v1135 = vadd.f32 %v1131, %v1134
    %vm1136 = vweird.f32 %v1025
    %vm1137 = vweird.f32 %v1131
    %vm1138 = vmor %vm1136, %vm1137
    %v1139 = vsel %vm1138, %v1131, %v1135
    %v1140 = vand.u32 2147483647, %v1025
    %vm1141 = vcmp.eq.f32.partialorder %v1140, 8.507059e+37
    %v1142 = vand.u32 %v1025, 2147483648
    %v1143 = vor.u32 1.1754944e-38, %v1142
    %v1144 = vsel %vm1141, %v1143, %v1139
    %v1145 = vmul.f32 1.0, %v1144
    %v1146 = vrcp.pop %v1026
    %v1147 = vmul.f32 %v1026, %v1146
    %v1148 = vsub.f32 1.0, %v1147
    %v1149 = vmul.f32 %v1146, %v1148
    %v1150 = vadd.f32 %v1146, %v1149
    %vm1151 = vweird.f32 %v1026
    %vm1152 = vweird.f32 %v1146
    %vm1153 = vmor %vm1151, %vm1152
    %v1154 = vsel %vm1153, %v1146, %v1150
    %v1155 = vand.u32 2147483647, %v1026
    %vm1156 = vcmp.eq.f32.partialorder %v1155, 8.507059e+37
    %v1157 = vand.u32 %v1026, 2147483648
    %v1158 = vor.u32 1.1754944e-38, %v1157
    %v1159 = vsel %vm1156, %v1158, %v1154
    %v1160 = vmul.f32 1.0, %v1159
    %v1161 = vrcp.pop %v1027
    %v1162 = vmul.f32 %v1027, %v1161
    %v1163 = vsub.f32 1.0, %v1162
    %v1164 = vmul.f32 %v1161, %v1163
    %v1165 = vadd.f32 %v1161, %v1164
    %vm1166 = vweird.f32 %v1027
    %vm1167 = vweird.f32 %v1161
    %vm1168 = vmor %vm1166, %vm1167
    %v1169 = vsel %vm1168, %v1161, %v1165
    %v1170 = vand.u32 2147483647, %v1027
    %vm1171 = vcmp.eq.f32.partialorder %v1170, 8.507059e+37
    %v1172 = vand.u32 %v1027, 2147483648
    %v1173 = vor.u32 1.1754944e-38, %v1172
    %v1174 = vsel %vm1171, %v1173, %v1169
    %v1175 = vmul.f32 1.0, %v1174
    %v1176 = vrcp.pop %v1028
    %v1177 = vmul.f32 %v1028, %v1176
    %v1178 = vsub.f32 1.0, %v1177
    %v1179 = vmul.f32 %v1176, %v1178
    %v1180 = vadd.f32 %v1176, %v1179
    %vm1181 = vweird.f32 %v1028
    %vm1182 = vweird.f32 %v1176
    %vm1183 = vmor %vm1181, %vm1182
    %v1184 = vsel %vm1183, %v1176, %v1180
    %v1185 = vand.u32 2147483647, %v1028
    %vm1186 = vcmp.eq.f32.partialorder %v1185, 8.507059e+37
    %v1187 = vand.u32 %v1028, 2147483648
    %v1188 = vor.u32 1.1754944e-38, %v1187
    %v1189 = vsel %vm1186, %v1188, %v1184
    %v1190 = vmul.f32 1.0, %v1189
    %v1191 = vrcp.pop %v1029
    %v1192 = vmul.f32 %v1029, %v1191
    %v1193 = vsub.f32 1.0, %v1192
    %v1194 = vmul.f32 %v1191, %v1193
    %v1195 = vadd.f32 %v1191, %v1194
    %vm1196 = vweird.f32 %v1029
    %vm1197 = vweird.f32 %v1191
    %vm1198 = vmor %vm1196, %vm1197
    %v1199 = vsel %vm1198, %v1191, %v1195
    %v1200 = vand.u32 2147483647, %v1029
    %vm1201 = vcmp.eq.f32.partialorder %v1200, 8.507059e+37
    %v1202 = vand.u32 %v1029, 2147483648
    %v1203 = vor.u32 1.1754944e-38, %v1202
    %v1204 = vsel %vm1201, %v1203, %v1199
    %v1205 = vmul.f32 1.0, %v1204
    %v1206 = vrcp.pop %v1030
    %v1207 = vmul.f32 %v1030, %v1206
    %v1208 = vsub.f32 1.0, %v1207
    %v1209 = vmul.f32 %v1206, %v1208
    %v1210 = vadd.f32 %v1206, %v1209
    %vm1211 = vweird.f32 %v1030
    %vm1212 = vweird.f32 %v1206
    %vm1213 = vmor %vm1211, %vm1212
    %v1214 = vsel %vm1213, %v1206, %v1210
    %v1215 = vand.u32 2147483647, %v1030
    %vm1216 = vcmp.eq.f32.partialorder %v1215, 8.507059e+37
    %v1217 = vand.u32 %v1030, 2147483648
    %v1218 = vor.u32 1.1754944e-38, %v1217
    %v1219 = vsel %vm1216, %v1218, %v1214
    %v1220 = vmul.f32 1.0, %v1219
    %v1221 = vrcp.pop %v1031
    %v1222 = vmul.f32 %v1031, %v1221
    %v1223 = vsub.f32 1.0, %v1222
    %v1224 = vmul.f32 %v1221, %v1223
    %v1225 = vadd.f32 %v1221, %v1224
    %vm1226 = vweird.f32 %v1031
    %vm1227 = vweird.f32 %v1221
    %vm1228 = vmor %vm1226, %vm1227
    %v1229 = vsel %vm1228, %v1221, %v1225
    %v1230 = vand.u32 2147483647, %v1031
    %vm1231 = vcmp.eq.f32.partialorder %v1230, 8.507059e+37
    %v1232 = vand.u32 %v1031, 2147483648
    %v1233 = vor.u32 1.1754944e-38, %v1232
    %v1234 = vsel %vm1231, %v1233, %v1229
    %v1235 = vmul.f32 1.0, %v1234
    %v1236 = vrcp.pop %v1032
    %v1237 = vmul.f32 %v1032, %v1236
    %v1238 = vsub.f32 1.0, %v1237
    %v1239 = vmul.f32 %v1236, %v1238
    %v1240 = vadd.f32 %v1236, %v1239
    %vm1241 = vweird.f32 %v1032
    %vm1242 = vweird.f32 %v1236
    %vm1243 = vmor %vm1241, %vm1242
    %v1244 = vsel %vm1243, %v1236, %v1240
    %v1245 = vand.u32 2147483647, %v1032
    %vm1246 = vcmp.eq.f32.partialorder %v1245, 8.507059e+37
    %v1247 = vand.u32 %v1032, 2147483648
    %v1248 = vor.u32 1.1754944e-38, %v1247
    %v1249 = vsel %vm1246, %v1248, %v1244
    %v1250 = vmul.f32 1.0, %v1249
    %v1251 = vrcp.pop %v1033
    %v1252 = vmul.f32 %v1033, %v1251
    %v1253 = vsub.f32 1.0, %v1252
    %v1254 = vmul.f32 %v1251, %v1253
    %v1255 = vadd.f32 %v1251, %v1254
    %vm1256 = vweird.f32 %v1033
    %vm1257 = vweird.f32 %v1251
    %vm1258 = vmor %vm1256, %vm1257
    %v1259 = vsel %vm1258, %v1251, %v1255
    %v1260 = vand.u32 2147483647, %v1033
    %vm1261 = vcmp.eq.f32.partialorder %v1260, 8.507059e+37
    %v1262 = vand.u32 %v1033, 2147483648
    %v1263 = vor.u32 1.1754944e-38, %v1262
    %v1264 = vsel %vm1261, %v1263, %v1259
    %v1265 = vmul.f32 1.0, %v1264
    %v1266 = vrcp.pop %v1034
    %v1267 = vmul.f32 %v1034, %v1266
    %v1268 = vsub.f32 1.0, %v1267
    %v1269 = vmul.f32 %v1266, %v1268
    %v1270 = vadd.f32 %v1266, %v1269
    %vm1271 = vweird.f32 %v1034
    %vm1272 = vweird.f32 %v1266
    %vm1273 = vmor %vm1271, %vm1272
    %v1274 = vsel %vm1273, %v1266, %v1270
    %v1275 = vand.u32 2147483647, %v1034
    %vm1276 = vcmp.eq.f32.partialorder %v1275, 8.507059e+37
    %v1277 = vand.u32 %v1034, 2147483648
    %v1278 = vor.u32 1.1754944e-38, %v1277
    %v1279 = vsel %vm1276, %v1278, %v1274
    %v1280 = vmul.f32 1.0, %v1279
    %v1281 = vrcp.pop %v1035
    %v1282 = vmul.f32 %v1035, %v1281
    %v1283 = vsub.f32 1.0, %v1282
    %v1284 = vmul.f32 %v1281, %v1283
    %v1285 = vadd.f32 %v1281, %v1284
    %vm1286 = vweird.f32 %v1035
    %vm1287 = vweird.f32 %v1281
    %vm1288 = vmor %vm1286, %vm1287
    %v1289 = vsel %vm1288, %v1281, %v1285
    %v1290 = vand.u32 2147483647, %v1035
    %vm1291 = vcmp.eq.f32.partialorder %v1290, 8.507059e+37
    %v1292 = vand.u32 %v1035, 2147483648
    %v1293 = vor.u32 1.1754944e-38, %v1292
    %v1294 = vsel %vm1291, %v1293, %v1289
    %v1295 = vmul.f32 1.0, %v1294
    %v1296 = vrcp.pop %v1036
    %v1297 = vmul.f32 %v1036, %v1296
    %v1298 = vsub.f32 1.0, %v1297
    %v1299 = vmul.f32 %v1296, %v1298
    %v1300 = vadd.f32 %v1296, %v1299
    %vm1301 = vweird.f32 %v1036
    %vm1302 = vweird.f32 %v1296
    %vm1303 = vmor %vm1301, %vm1302
    %v1304 = vsel %vm1303, %v1296, %v1300
    %v1305 = vand.u32 2147483647, %v1036
    %vm1306 = vcmp.eq.f32.partialorder %v1305, 8.507059e+37
    %v1307 = vand.u32 %v1036, 2147483648
    %v1308 = vor.u32 1.1754944e-38, %v1307
    %v1309 = vsel %vm1306, %v1308, %v1304
    %v1310 = vmul.f32 1.0, %v1309
    %v1311 = vrcp.pop %v1037
    %v1312 = vmul.f32 %v1037, %v1311
    %v1313 = vsub.f32 1.0, %v1312
    %v1314 = vmul.f32 %v1311, %v1313
    %v1315 = vadd.f32 %v1311, %v1314
    %vm1316 = vweird.f32 %v1037
    %vm1317 = vweird.f32 %v1311
    %vm1318 = vmor %vm1316, %vm1317
    %v1319 = vsel %vm1318, %v1311, %v1315
    %v1320 = vand.u32 2147483647, %v1037
    %vm1321 = vcmp.eq.f32.partialorder %v1320, 8.507059e+37
    %v1322 = vand.u32 %v1037, 2147483648
    %v1323 = vor.u32 1.1754944e-38, %v1322
    %v1324 = vsel %vm1321, %v1323, %v1319
    %v1325 = vmul.f32 1.0, %v1324
    %v1326 = vrcp.pop %v1038
    %v1327 = vmul.f32 %v1038, %v1326
    %v1328 = vsub.f32 1.0, %v1327
    %v1329 = vmul.f32 %v1326, %v1328
    %v1330 = vadd.f32 %v1326, %v1329
    %vm1331 = vweird.f32 %v1038
    %vm1332 = vweird.f32 %v1326
    %vm1333 = vmor %vm1331, %vm1332
    %v1334 = vsel %vm1333, %v1326, %v1330
    %v1335 = vand.u32 2147483647, %v1038
    %vm1336 = vcmp.eq.f32.partialorder %v1335, 8.507059e+37
    %v1337 = vand.u32 %v1038, 2147483648
    %v1338 = vor.u32 1.1754944e-38, %v1337
    %v1339 = vsel %vm1336, %v1338, %v1334
    %v1340 = vmul.f32 1.0, %v1339
    %v1341 = vrcp.pop %v1039
    %v1342 = vmul.f32 %v1039, %v1341
    %v1343 = vsub.f32 1.0, %v1342
    %v1344 = vmul.f32 %v1341, %v1343
    %v1345 = vadd.f32 %v1341, %v1344
    %vm1346 = vweird.f32 %v1039
    %vm1347 = vweird.f32 %v1341
    %vm1348 = vmor %vm1346, %vm1347
    %v1349 = vsel %vm1348, %v1341, %v1345
    %v1350 = vand.u32 2147483647, %v1039
    %vm1351 = vcmp.eq.f32.partialorder %v1350, 8.507059e+37
    %v1352 = vand.u32 %v1039, 2147483648
    %v1353 = vor.u32 1.1754944e-38, %v1352
    %v1354 = vsel %vm1351, %v1353, %v1349
    %v1355 = vmul.f32 1.0, %v1354
    %v1356 = vrcp.pop %v1040
    %v1357 = vmul.f32 %v1040, %v1356
    %v1358 = vsub.f32 1.0, %v1357
    %v1359 = vmul.f32 %v1356, %v1358
    %v1360 = vadd.f32 %v1356, %v1359
    %vm1361 = vweird.f32 %v1040
    %vm1362 = vweird.f32 %v1356
    %vm1363 = vmor %vm1361, %vm1362
    %v1364 = vsel %vm1363, %v1356, %v1360
    %v1365 = vand.u32 2147483647, %v1040
    %vm1366 = vcmp.eq.f32.partialorder %v1365, 8.507059e+37
    %v1367 = vand.u32 %v1040, 2147483648
    %v1368 = vor.u32 1.1754944e-38, %v1367
    %v1369 = vsel %vm1366, %v1368, %v1364
    %v1370 = vmul.f32 1.0, %v1369
    %v1371 = vrcp.pop %v1041
    %v1372 = vmul.f32 %v1041, %v1371
    %v1373 = vsub.f32 1.0, %v1372
    %v1374 = vmul.f32 %v1371, %v1373
    %v1375 = vadd.f32 %v1371, %v1374
    %vm1376 = vweird.f32 %v1041
    %vm1377 = vweird.f32 %v1371
    %vm1378 = vmor %vm1376, %vm1377
    %v1379 = vsel %vm1378, %v1371, %v1375
    %v1380 = vand.u32 2147483647, %v1041
    %vm1381 = vcmp.eq.f32.partialorder %v1380, 8.507059e+37
    %v1382 = vand.u32 %v1041, 2147483648
    %v1383 = vor.u32 1.1754944e-38, %v1382
    %v1384 = vsel %vm1381, %v1383, %v1379
    %v1385 = vmul.f32 1.0, %v1384
    %v1386 = vrcp.pop %v1042
    %v1387 = vmul.f32 %v1042, %v1386
    %v1388 = vsub.f32 1.0, %v1387
    %v1389 = vmul.f32 %v1386, %v1388
    %v1390 = vadd.f32 %v1386, %v1389
    %vm1391 = vweird.f32 %v1042
    %vm1392 = vweird.f32 %v1386
    %vm1393 = vmor %vm1391, %vm1392
    %v1394 = vsel %vm1393, %v1386, %v1390
    %v1395 = vand.u32 2147483647, %v1042
    %vm1396 = vcmp.eq.f32.partialorder %v1395, 8.507059e+37
    %v1397 = vand.u32 %v1042, 2147483648
    %v1398 = vor.u32 1.1754944e-38, %v1397
    %v1399 = vsel %vm1396, %v1398, %v1394
    %v1400 = vmul.f32 1.0, %v1399
    %v1401 = vrcp.pop %v1043
    %v1402 = vmul.f32 %v1043, %v1401
    %v1403 = vsub.f32 1.0, %v1402
    %v1404 = vmul.f32 %v1401, %v1403
    %v1405 = vadd.f32 %v1401, %v1404
    %vm1406 = vweird.f32 %v1043
    %vm1407 = vweird.f32 %v1401
    %vm1408 = vmor %vm1406, %vm1407
    %v1409 = vsel %vm1408, %v1401, %v1405
    %v1410 = vand.u32 2147483647, %v1043
    %vm1411 = vcmp.eq.f32.partialorder %v1410, 8.507059e+37
    %v1412 = vand.u32 %v1043, 2147483648
    %v1413 = vor.u32 1.1754944e-38, %v1412
    %v1414 = vsel %vm1411, %v1413, %v1409
    %v1415 = vmul.f32 1.0, %v1414
    %v1416 = vrcp.pop %v1044
    %v1417 = vmul.f32 %v1044, %v1416
    %v1418 = vsub.f32 1.0, %v1417
    %v1419 = vmul.f32 %v1416, %v1418
    %v1420 = vadd.f32 %v1416, %v1419
    %vm1421 = vweird.f32 %v1044
    %vm1422 = vweird.f32 %v1416
    %vm1423 = vmor %vm1421, %vm1422
    %v1424 = vsel %vm1423, %v1416, %v1420
    %v1425 = vand.u32 2147483647, %v1044
    %vm1426 = vcmp.eq.f32.partialorder %v1425, 8.507059e+37
    %v1427 = vand.u32 %v1044, 2147483648
    %v1428 = vor.u32 1.1754944e-38, %v1427
    %v1429 = vsel %vm1426, %v1428, %v1424
    %v1430 = vmul.f32 1.0, %v1429
    %v1431 = vrcp.pop %v1045
    %v1432 = vmul.f32 %v1045, %v1431
    %v1433 = vsub.f32 1.0, %v1432
    %v1434 = vmul.f32 %v1431, %v1433
    %v1435 = vadd.f32 %v1431, %v1434
    %vm1436 = vweird.f32 %v1045
    %vm1437 = vweird.f32 %v1431
    %vm1438 = vmor %vm1436, %vm1437
    %v1439 = vsel %vm1438, %v1431, %v1435
    %v1440 = vand.u32 2147483647, %v1045
    %vm1441 = vcmp.eq.f32.partialorder %v1440, 8.507059e+37
    %v1442 = vand.u32 %v1045, 2147483648
    %v1443 = vor.u32 1.1754944e-38, %v1442
    %v1444 = vsel %vm1441, %v1443, %v1439
    %v1445 = vmul.f32 1.0, %v1444
    %v1446 = vrcp.pop %v1046
    %v1447 = vmul.f32 %v1046, %v1446
    %v1448 = vsub.f32 1.0, %v1447
    %v1449 = vmul.f32 %v1446, %v1448
    %v1450 = vadd.f32 %v1446, %v1449
    %vm1451 = vweird.f32 %v1046
    %vm1452 = vweird.f32 %v1446
    %vm1453 = vmor %vm1451, %vm1452
    %v1454 = vsel %vm1453, %v1446, %v1450
    %v1455 = vand.u32 2147483647, %v1046
    %vm1456 = vcmp.eq.f32.partialorder %v1455, 8.507059e+37
    %v1457 = vand.u32 %v1046, 2147483648
    %v1458 = vor.u32 1.1754944e-38, %v1457
    %v1459 = vsel %vm1456, %v1458, %v1454
    %v1460 = vmul.f32 1.0, %v1459
    %v1461 = vrcp.pop %v1047
    %v1462 = vmul.f32 %v1047, %v1461
    %v1463 = vsub.f32 1.0, %v1462
    %v1464 = vmul.f32 %v1461, %v1463
    %v1465 = vadd.f32 %v1461, %v1464
    %vm1466 = vweird.f32 %v1047
    %vm1467 = vweird.f32 %v1461
    %vm1468 = vmor %vm1466, %vm1467
    %v1469 = vsel %vm1468, %v1461, %v1465
    %v1470 = vand.u32 2147483647, %v1047
    %vm1471 = vcmp.eq.f32.partialorder %v1470, 8.507059e+37
    %v1472 = vand.u32 %v1047, 2147483648
    %v1473 = vor.u32 1.1754944e-38, %v1472
    %v1474 = vsel %vm1471, %v1473, %v1469
    %v1475 = vmul.f32 1.0, %v1474
    %v1476 = vrcp.pop %v1048
    %v1477 = vmul.f32 %v1048, %v1476
    %v1478 = vsub.f32 1.0, %v1477
    %v1479 = vmul.f32 %v1476, %v1478
    %v1480 = vadd.f32 %v1476, %v1479
    %vm1481 = vweird.f32 %v1048
    %vm1482 = vweird.f32 %v1476
    %vm1483 = vmor %vm1481, %vm1482
    %v1484 = vsel %vm1483, %v1476, %v1480
    %v1485 = vand.u32 2147483647, %v1048
    %vm1486 = vcmp.eq.f32.partialorder %v1485, 8.507059e+37
    %v1487 = vand.u32 %v1048, 2147483648
    %v1488 = vor.u32 1.1754944e-38, %v1487
    %v1489 = vsel %vm1486, %v1488, %v1484
    %v1490 = vmul.f32 1.0, %v1489
    %v1491 = vrcp.pop %v1049
    %v1492 = vmul.f32 %v1049, %v1491
    %v1493 = vsub.f32 1.0, %v1492
    %v1494 = vmul.f32 %v1491, %v1493
    %v1495 = vadd.f32 %v1491, %v1494
    %vm1496 = vweird.f32 %v1049
    %vm1497 = vweird.f32 %v1491
    %vm1498 = vmor %vm1496, %vm1497
    %v1499 = vsel %vm1498, %v1491, %v1495
    %v1500 = vand.u32 2147483647, %v1049
    %vm1501 = vcmp.eq.f32.partialorder %v1500, 8.507059e+37
    %v1502 = vand.u32 %v1049, 2147483648
    %v1503 = vor.u32 1.1754944e-38, %v1502
    %v1504 = vsel %vm1501, %v1503, %v1499
    %v1505 = vmul.f32 1.0, %v1504
    %v1506 = vrcp.pop %v1050
    %v1507 = vmul.f32 %v1050, %v1506
    %v1508 = vsub.f32 1.0, %v1507
    %v1509 = vmul.f32 %v1506, %v1508
    %v1510 = vadd.f32 %v1506, %v1509
    %vm1511 = vweird.f32 %v1050
    %vm1512 = vweird.f32 %v1506
    %vm1513 = vmor %vm1511, %vm1512
    %v1514 = vsel %vm1513, %v1506, %v1510
    %v1515 = vand.u32 2147483647, %v1050
    %vm1516 = vcmp.eq.f32.partialorder %v1515, 8.507059e+37
    %v1517 = vand.u32 %v1050, 2147483648
    %v1518 = vor.u32 1.1754944e-38, %v1517
    %v1519 = vsel %vm1516, %v1518, %v1514
    %v1520 = vmul.f32 1.0, %v1519
    %v1521 = vrcp.pop %v1051
    %v1522 = vmul.f32 %v1051, %v1521
    %v1523 = vsub.f32 1.0, %v1522
    %v1524 = vmul.f32 %v1521, %v1523
    %v1525 = vadd.f32 %v1521, %v1524
    %vm1526 = vweird.f32 %v1051
    %vm1527 = vweird.f32 %v1521
    %vm1528 = vmor %vm1526, %vm1527
    %v1529 = vsel %vm1528, %v1521, %v1525
    %v1530 = vand.u32 2147483647, %v1051
    %vm1531 = vcmp.eq.f32.partialorder %v1530, 8.507059e+37
    %v1532 = vand.u32 %v1051, 2147483648
    %v1533 = vor.u32 1.1754944e-38, %v1532
    %v1534 = vsel %vm1531, %v1533, %v1529
    %v1535 = vmul.f32 1.0, %v1534
    %v1536 = vrcp.pop %v1052
    %v1537 = vmul.f32 %v1052, %v1536
    %v1538 = vsub.f32 1.0, %v1537
    %v1539 = vmul.f32 %v1536, %v1538
    %v1540 = vadd.f32 %v1536, %v1539
    %vm1541 = vweird.f32 %v1052
    %vm1542 = vweird.f32 %v1536
    %vm1543 = vmor %vm1541, %vm1542
    %v1544 = vsel %vm1543, %v1536, %v1540
    %v1545 = vand.u32 2147483647, %v1052
    %vm1546 = vcmp.eq.f32.partialorder %v1545, 8.507059e+37
    %v1547 = vand.u32 %v1052, 2147483648
    %v1548 = vor.u32 1.1754944e-38, %v1547
    %v1549 = vsel %vm1546, %v1548, %v1544
    %v1550 = vmul.f32 1.0, %v1549
    %v1551 = vrcp.pop %v1053
    %v1552 = vmul.f32 %v1053, %v1551
    %v1553 = vsub.f32 1.0, %v1552
    %v1554 = vmul.f32 %v1551, %v1553
    %v1555 = vadd.f32 %v1551, %v1554
    %vm1556 = vweird.f32 %v1053
    %vm1557 = vweird.f32 %v1551
    %vm1558 = vmor %vm1556, %vm1557
    %v1559 = vsel %vm1558, %v1551, %v1555
    %v1560 = vand.u32 2147483647, %v1053
    %vm1561 = vcmp.eq.f32.partialorder %v1560, 8.507059e+37
    %v1562 = vand.u32 %v1053, 2147483648
    %v1563 = vor.u32 1.1754944e-38, %v1562
    %v1564 = vsel %vm1561, %v1563, %v1559
    %v1565 = vmul.f32 1.0, %v1564
    %v1566 = vrcp.pop %v1054
    %v1567 = vmul.f32 %v1054, %v1566
    %v1568 = vsub.f32 1.0, %v1567
    %v1569 = vmul.f32 %v1566, %v1568
    %v1570 = vadd.f32 %v1566, %v1569
    %vm1571 = vweird.f32 %v1054
    %vm1572 = vweird.f32 %v1566
    %vm1573 = vmor %vm1571, %vm1572
    %v1574 = vsel %vm1573, %v1566, %v1570
    %v1575 = vand.u32 2147483647, %v1054
    %vm1576 = vcmp.eq.f32.partialorder %v1575, 8.507059e+37
    %v1577 = vand.u32 %v1054, 2147483648
    %v1578 = vor.u32 1.1754944e-38, %v1577
    %v1579 = vsel %vm1576, %v1578, %v1574
    %v1580 = vmul.f32 1.0, %v1579
    %v1581 = vrcp.pop %v1055
    %v1582 = vmul.f32 %v1055, %v1581
    %v1583 = vsub.f32 1.0, %v1582
    %v1584 = vmul.f32 %v1581, %v1583
    %v1585 = vadd.f32 %v1581, %v1584
    %vm1586 = vweird.f32 %v1055
    %vm1587 = vweird.f32 %v1581
    %vm1588 = vmor %vm1586, %vm1587
    %v1589 = vsel %vm1588, %v1581, %v1585
    %v1590 = vand.u32 2147483647, %v1055
    %vm1591 = vcmp.eq.f32.partialorder %v1590, 8.507059e+37
    %v1592 = vand.u32 %v1055, 2147483648
    %v1593 = vor.u32 1.1754944e-38, %v1592
    %v1594 = vsel %vm1591, %v1593, %v1589
    %v1595 = vmul.f32 1.0, %v1594
    %v1596 = vrcp.pop %v1056
    %v1597 = vmul.f32 %v1056, %v1596
    %v1598 = vsub.f32 1.0, %v1597
    %v1599 = vmul.f32 %v1596, %v1598
    %v1600 = vadd.f32 %v1596, %v1599
    %vm1601 = vweird.f32 %v1056
    %vm1602 = vweird.f32 %v1596
    %vm1603 = vmor %vm1601, %vm1602
    %v1604 = vsel %vm1603, %v1596, %v1600
    %v1605 = vand.u32 2147483647, %v1056
    %vm1606 = vcmp.eq.f32.partialorder %v1605, 8.507059e+37
    %v1607 = vand.u32 %v1056, 2147483648
    %v1608 = vor.u32 1.1754944e-38, %v1607
    %v1609 = vsel %vm1606, %v1608, %v1604
    %v1610 = vmul.f32 1.0, %v1609
    %v1611 = vrcp.pop %v1057
    %v1612 = vmul.f32 %v1057, %v1611
    %v1613 = vsub.f32 1.0, %v1612
    %v1614 = vmul.f32 %v1611, %v1613
    %v1615 = vadd.f32 %v1611, %v1614
    %vm1616 = vweird.f32 %v1057
    %vm1617 = vweird.f32 %v1611
    %vm1618 = vmor %vm1616, %vm1617
    %v1619 = vsel %vm1618, %v1611, %v1615
    %v1620 = vand.u32 2147483647, %v1057
    %vm1621 = vcmp.eq.f32.partialorder %v1620, 8.507059e+37
    %v1622 = vand.u32 %v1057, 2147483648
    %v1623 = vor.u32 1.1754944e-38, %v1622
    %v1624 = vsel %vm1621, %v1623, %v1619
    %v1625 = vmul.f32 1.0, %v1624
    %v1626 = vrcp.pop %v1058
    %v1627 = vmul.f32 %v1058, %v1626
    %v1628 = vsub.f32 1.0, %v1627
    %v1629 = vmul.f32 %v1626, %v1628
    %v1630 = vadd.f32 %v1626, %v1629
    %vm1631 = vweird.f32 %v1058
    %vm1632 = vweird.f32 %v1626
    %vm1633 = vmor %vm1631, %vm1632
    %v1634 = vsel %vm1633, %v1626, %v1630
    %v1635 = vand.u32 2147483647, %v1058
    %vm1636 = vcmp.eq.f32.partialorder %v1635, 8.507059e+37
    %v1637 = vand.u32 %v1058, 2147483648
    %v1638 = vor.u32 1.1754944e-38, %v1637
    %v1639 = vsel %vm1636, %v1638, %v1634
    %v1640 = vmul.f32 1.0, %v1639
    %v1641 = vrcp.pop %v1059
    %v1642 = vmul.f32 %v1059, %v1641
    %v1643 = vsub.f32 1.0, %v1642
    %v1644 = vmul.f32 %v1641, %v1643
    %v1645 = vadd.f32 %v1641, %v1644
    %vm1646 = vweird.f32 %v1059
    %vm1647 = vweird.f32 %v1641
    %vm1648 = vmor %vm1646, %vm1647
    %v1649 = vsel %vm1648, %v1641, %v1645
    %v1650 = vand.u32 2147483647, %v1059
    %vm1651 = vcmp.eq.f32.partialorder %v1650, 8.507059e+37
    %v1652 = vand.u32 %v1059, 2147483648
    %v1653 = vor.u32 1.1754944e-38, %v1652
    %v1654 = vsel %vm1651, %v1653, %v1649
    %v1655 = vmul.f32 1.0, %v1654
    %v1656 = vrcp.pop %v1060
    %v1657 = vmul.f32 %v1060, %v1656
    %v1658 = vsub.f32 1.0, %v1657
    %v1659 = vmul.f32 %v1656, %v1658
    %v1660 = vadd.f32 %v1656, %v1659
    %vm1661 = vweird.f32 %v1060
    %vm1662 = vweird.f32 %v1656
    %vm1663 = vmor %vm1661, %vm1662
    %v1664 = vsel %vm1663, %v1656, %v1660
    %v1665 = vand.u32 2147483647, %v1060
    %vm1666 = vcmp.eq.f32.partialorder %v1665, 8.507059e+37
    %v1667 = vand.u32 %v1060, 2147483648
    %v1668 = vor.u32 1.1754944e-38, %v1667
    %v1669 = vsel %vm1666, %v1668, %v1664
    %v1670 = vmul.f32 1.0, %v1669
    %v1671 = vrcp.pop %v1061
    %v1672 = vmul.f32 %v1061, %v1671
    %v1673 = vsub.f32 1.0, %v1672
    %v1674 = vmul.f32 %v1671, %v1673
    %v1675 = vadd.f32 %v1671, %v1674
    %vm1676 = vweird.f32 %v1061
    %vm1677 = vweird.f32 %v1671
    %vm1678 = vmor %vm1676, %vm1677
    %v1679 = vsel %vm1678, %v1671, %v1675
    %v1680 = vand.u32 2147483647, %v1061
    %vm1681 = vcmp.eq.f32.partialorder %v1680, 8.507059e+37
    %v1682 = vand.u32 %v1061, 2147483648
    %v1683 = vor.u32 1.1754944e-38, %v1682
    %v1684 = vsel %vm1681, %v1683, %v1679
    %v1685 = vmul.f32 1.0, %v1684
    %v1686 = vrcp.pop %v1062
    %v1687 = vmul.f32 %v1062, %v1686
    %v1688 = vsub.f32 1.0, %v1687
    %v1689 = vmul.f32 %v1686, %v1688
    %v1690 = vadd.f32 %v1686, %v1689
    %vm1691 = vweird.f32 %v1062
    %vm1692 = vweird.f32 %v1686
    %vm1693 = vmor %vm1691, %vm1692
    %v1694 = vsel %vm1693, %v1686, %v1690
    %v1695 = vand.u32 2147483647, %v1062
    %vm1696 = vcmp.eq.f32.partialorder %v1695, 8.507059e+37
    %v1697 = vand.u32 %v1062, 2147483648
    %v1698 = vor.u32 1.1754944e-38, %v1697
    %v1699 = vsel %vm1696, %v1698, %v1694
    %v1700 = vmul.f32 1.0, %v1699
    %v1701 = vrcp.pop %v1063
    %v1702 = vmul.f32 %v1063, %v1701
    %v1703 = vsub.f32 1.0, %v1702
    %v1704 = vmul.f32 %v1701, %v1703
    %v1705 = vadd.f32 %v1701, %v1704
    %vm1706 = vweird.f32 %v1063
    %vm1707 = vweird.f32 %v1701
    %vm1708 = vmor %vm1706, %vm1707
    %v1709 = vsel %vm1708, %v1701, %v1705
    %v1710 = vand.u32 2147483647, %v1063
    %vm1711 = vcmp.eq.f32.partialorder %v1710, 8.507059e+37
    %v1712 = vand.u32 %v1063, 2147483648
    %v1713 = vor.u32 1.1754944e-38, %v1712
    %v1714 = vsel %vm1711, %v1713, %v1709
    %v1715 = vmul.f32 1.0, %v1714
    %v1716 = vrcp.pop %v1064
    %v1717 = vmul.f32 %v1064, %v1716
    %v1718 = vsub.f32 1.0, %v1717
    %v1719 = vmul.f32 %v1716, %v1718
    %v1720 = vadd.f32 %v1716, %v1719
    %vm1721 = vweird.f32 %v1064
    %vm1722 = vweird.f32 %v1716
    %vm1723 = vmor %vm1721, %vm1722
    %v1724 = vsel %vm1723, %v1716, %v1720
    %v1725 = vand.u32 2147483647, %v1064
    %vm1726 = vcmp.eq.f32.partialorder %v1725, 8.507059e+37
    %v1727 = vand.u32 %v1064, 2147483648
    %v1728 = vor.u32 1.1754944e-38, %v1727
    %v1729 = vsel %vm1726, %v1728, %v1724
    %v1730 = vmul.f32 1.0, %v1729
    %v1731 = vrcp.pop %v1065
    %v1732 = vmul.f32 %v1065, %v1731
    %v1733 = vsub.f32 1.0, %v1732
    %v1734 = vmul.f32 %v1731, %v1733
    %v1735 = vadd.f32 %v1731, %v1734
    %vm1736 = vweird.f32 %v1065
    %vm1737 = vweird.f32 %v1731
    %vm1738 = vmor %vm1736, %vm1737
    %v1739 = vsel %vm1738, %v1731, %v1735
    %v1740 = vand.u32 2147483647, %v1065
    %vm1741 = vcmp.eq.f32.partialorder %v1740, 8.507059e+37
    %v1742 = vand.u32 %v1065, 2147483648
    %v1743 = vor.u32 1.1754944e-38, %v1742
    %v1744 = vsel %vm1741, %v1743, %v1739
    %v1745 = vmul.f32 1.0, %v1744
    %v1746 = vrcp.pop %v1066
    %v1747 = vmul.f32 %v1066, %v1746
    %v1748 = vsub.f32 1.0, %v1747
    %v1749 = vmul.f32 %v1746, %v1748
    %v1750 = vadd.f32 %v1746, %v1749
    %vm1751 = vweird.f32 %v1066
    %vm1752 = vweird.f32 %v1746
    %vm1753 = vmor %vm1751, %vm1752
    %v1754 = vsel %vm1753, %v1746, %v1750
    %v1755 = vand.u32 2147483647, %v1066
    %vm1756 = vcmp.eq.f32.partialorder %v1755, 8.507059e+37
    %v1757 = vand.u32 %v1066, 2147483648
    %v1758 = vor.u32 1.1754944e-38, %v1757
    %v1759 = vsel %vm1756, %v1758, %v1754
    %v1760 = vmul.f32 1.0, %v1759
    %v1761 = vrcp.pop %v1067
    %v1762 = vmul.f32 %v1067, %v1761
    %v1763 = vsub.f32 1.0, %v1762
    %v1764 = vmul.f32 %v1761, %v1763
    %v1765 = vadd.f32 %v1761, %v1764
    %vm1766 = vweird.f32 %v1067
    %vm1767 = vweird.f32 %v1761
    %vm1768 = vmor %vm1766, %vm1767
    %v1769 = vsel %vm1768, %v1761, %v1765
    %v1770 = vand.u32 2147483647, %v1067
    %vm1771 = vcmp.eq.f32.partialorder %v1770, 8.507059e+37
    %v1772 = vand.u32 %v1067, 2147483648
    %v1773 = vor.u32 1.1754944e-38, %v1772
    %v1774 = vsel %vm1771, %v1773, %v1769
    %v1775 = vmul.f32 1.0, %v1774
    %v1776 = vrcp.pop %v1068
    %v1777 = vmul.f32 %v1068, %v1776
    %v1778 = vsub.f32 1.0, %v1777
    %v1779 = vmul.f32 %v1776, %v1778
    %v1780 = vadd.f32 %v1776, %v1779
    %vm1781 = vweird.f32 %v1068
    %vm1782 = vweird.f32 %v1776
    %vm1783 = vmor %vm1781, %vm1782
    %v1784 = vsel %vm1783, %v1776, %v1780
    %v1785 = vand.u32 2147483647, %v1068
    %vm1786 = vcmp.eq.f32.partialorder %v1785, 8.507059e+37
    %v1787 = vand.u32 %v1068, 2147483648
    %v1788 = vor.u32 1.1754944e-38, %v1787
    %v1789 = vsel %vm1786, %v1788, %v1784
    %v1790 = vmul.f32 1.0, %v1789
    %v1791 = vrcp.pop %v1069
    %v1792 = vmul.f32 %v1069, %v1791
    %v1793 = vsub.f32 1.0, %v1792
    %v1794 = vmul.f32 %v1791, %v1793
    %v1795 = vadd.f32 %v1791, %v1794
    %vm1796 = vweird.f32 %v1069
    %vm1797 = vweird.f32 %v1791
    %vm1798 = vmor %vm1796, %vm1797
    %v1799 = vsel %vm1798, %v1791, %v1795
    %v1800 = vand.u32 2147483647, %v1069
    %vm1801 = vcmp.eq.f32.partialorder %v1800, 8.507059e+37
    %v1802 = vand.u32 %v1069, 2147483648
    %v1803 = vor.u32 1.1754944e-38, %v1802
    %v1804 = vsel %vm1801, %v1803, %v1799
    %v1805 = vmul.f32 1.0, %v1804
    %v1806 = vrcp.pop %v1070
    %v1807 = vmul.f32 %v1070, %v1806
    %v1808 = vsub.f32 1.0, %v1807
    %v1809 = vmul.f32 %v1806, %v1808
    %v1810 = vadd.f32 %v1806, %v1809
    %vm1811 = vweird.f32 %v1070
    %vm1812 = vweird.f32 %v1806
    %vm1813 = vmor %vm1811, %vm1812
    %v1814 = vsel %vm1813, %v1806, %v1810
    %v1815 = vand.u32 2147483647, %v1070
    %vm1816 = vcmp.eq.f32.partialorder %v1815, 8.507059e+37
    %v1817 = vand.u32 %v1070, 2147483648
    %v1818 = vor.u32 1.1754944e-38, %v1817
    %v1819 = vsel %vm1816, %v1818, %v1814
    %v1820 = vmul.f32 1.0, %v1819
    %v1821 = vrcp.pop %v1071
    %v1822 = vmul.f32 %v1071, %v1821
    %v1823 = vsub.f32 1.0, %v1822
    %v1824 = vmul.f32 %v1821, %v1823
    %v1825 = vadd.f32 %v1821, %v1824
    %vm1826 = vweird.f32 %v1071
    %vm1827 = vweird.f32 %v1821
    %vm1828 = vmor %vm1826, %vm1827
    %v1829 = vsel %vm1828, %v1821, %v1825
    %v1830 = vand.u32 2147483647, %v1071
    %vm1831 = vcmp.eq.f32.partialorder %v1830, 8.507059e+37
    %v1832 = vand.u32 %v1071, 2147483648
    %v1833 = vor.u32 1.1754944e-38, %v1832
    %v1834 = vsel %vm1831, %v1833, %v1829
    %v1835 = vmul.f32 1.0, %v1834
    %v1836 = vrcp.pop %v1072
    %v1837 = vmul.f32 %v1072, %v1836
    %v1838 = vsub.f32 1.0, %v1837
    %v1839 = vmul.f32 %v1836, %v1838
    %v1840 = vadd.f32 %v1836, %v1839
    %vm1841 = vweird.f32 %v1072
    %vm1842 = vweird.f32 %v1836
    %vm1843 = vmor %vm1841, %vm1842
    %v1844 = vsel %vm1843, %v1836, %v1840
    %v1845 = vand.u32 2147483647, %v1072
    %vm1846 = vcmp.eq.f32.partialorder %v1845, 8.507059e+37
    %v1847 = vand.u32 %v1072, 2147483648
    %v1848 = vor.u32 1.1754944e-38, %v1847
    %v1849 = vsel %vm1846, %v1848, %v1844
    %v1850 = vmul.f32 1.0, %v1849
    %v1851 = vrcp.pop %v1073
    %v1852 = vmul.f32 %v1073, %v1851
    %v1853 = vsub.f32 1.0, %v1852
    %v1854 = vmul.f32 %v1851, %v1853
    %v1855 = vadd.f32 %v1851, %v1854
    %vm1856 = vweird.f32 %v1073
    %vm1857 = vweird.f32 %v1851
    %vm1858 = vmor %vm1856, %vm1857
    %v1859 = vsel %vm1858, %v1851, %v1855
    %v1860 = vand.u32 2147483647, %v1073
    %vm1861 = vcmp.eq.f32.partialorder %v1860, 8.507059e+37
    %v1862 = vand.u32 %v1073, 2147483648
    %v1863 = vor.u32 1.1754944e-38, %v1862
    %v1864 = vsel %vm1861, %v1863, %v1859
    %v1865 = vmul.f32 1.0, %v1864
    %v1866 = vrcp.pop %v1074
    %v1867 = vmul.f32 %v1074, %v1866
    %v1868 = vsub.f32 1.0, %v1867
    %v1869 = vmul.f32 %v1866, %v1868
    %v1870 = vadd.f32 %v1866, %v1869
    %vm1871 = vweird.f32 %v1074
    %vm1872 = vweird.f32 %v1866
    %vm1873 = vmor %vm1871, %vm1872
    %v1874 = vsel %vm1873, %v1866, %v1870
    %v1875 = vand.u32 2147483647, %v1074
    %vm1876 = vcmp.eq.f32.partialorder %v1875, 8.507059e+37
    %v1877 = vand.u32 %v1074, 2147483648
    %v1878 = vor.u32 1.1754944e-38, %v1877
    %v1879 = vsel %vm1876, %v1878, %v1874
    %v1880 = vmul.f32 1.0, %v1879
    %v1881 = vrcp.pop %v1075
    %v1882 = vmul.f32 %v1075, %v1881
    %v1883 = vsub.f32 1.0, %v1882
    %v1884 = vmul.f32 %v1881, %v1883
    %v1885 = vadd.f32 %v1881, %v1884
    %vm1886 = vweird.f32 %v1075
    %vm1887 = vweird.f32 %v1881
    %vm1888 = vmor %vm1886, %vm1887
    %v1889 = vsel %vm1888, %v1881, %v1885
    %v1890 = vand.u32 2147483647, %v1075
    %vm1891 = vcmp.eq.f32.partialorder %v1890, 8.507059e+37
    %v1892 = vand.u32 %v1075, 2147483648
    %v1893 = vor.u32 1.1754944e-38, %v1892
    %v1894 = vsel %vm1891, %v1893, %v1889
    %v1895 = vmul.f32 1.0, %v1894
    %v1896 = vrcp.pop %v1076
    %v1897 = vmul.f32 %v1076, %v1896
    %v1898 = vsub.f32 1.0, %v1897
    %v1899 = vmul.f32 %v1896, %v1898
    %v1900 = vadd.f32 %v1896, %v1899
    %vm1901 = vweird.f32 %v1076
    %vm1902 = vweird.f32 %v1896
    %vm1903 = vmor %vm1901, %vm1902
    %v1904 = vsel %vm1903, %v1896, %v1900
    %v1905 = vand.u32 2147483647, %v1076
    %vm1906 = vcmp.eq.f32.partialorder %v1905, 8.507059e+37
    %v1907 = vand.u32 %v1076, 2147483648
    %v1908 = vor.u32 1.1754944e-38, %v1907
    %v1909 = vsel %vm1906, %v1908, %v1904
    %v1910 = vmul.f32 1.0, %v1909
    %v1911 = vrcp.pop %v1077
    %v1912 = vmul.f32 %v1077, %v1911
    %v1913 = vsub.f32 1.0, %v1912
    %v1914 = vmul.f32 %v1911, %v1913
    %v1915 = vadd.f32 %v1911, %v1914
    %vm1916 = vweird.f32 %v1077
    %vm1917 = vweird.f32 %v1911
    %vm1918 = vmor %vm1916, %vm1917
    %v1919 = vsel %vm1918, %v1911, %v1915
    %v1920 = vand.u32 2147483647, %v1077
    %vm1921 = vcmp.eq.f32.partialorder %v1920, 8.507059e+37
    %v1922 = vand.u32 %v1077, 2147483648
    %v1923 = vor.u32 1.1754944e-38, %v1922
    %v1924 = vsel %vm1921, %v1923, %v1919
    %v1925 = vmul.f32 1.0, %v1924
    %v1926 = vrcp.pop %v1078
    %v1927 = vmul.f32 %v1078, %v1926
    %v1928 = vsub.f32 1.0, %v1927
    %v1929 = vmul.f32 %v1926, %v1928
    %v1930 = vadd.f32 %v1926, %v1929
    %vm1931 = vweird.f32 %v1078
    %vm1932 = vweird.f32 %v1926
    %vm1933 = vmor %vm1931, %vm1932
    %v1934 = vsel %vm1933, %v1926, %v1930
    %v1935 = vand.u32 2147483647, %v1078
    %vm1936 = vcmp.eq.f32.partialorder %v1935, 8.507059e+37
    %v1937 = vand.u32 %v1078, 2147483648
    %v1938 = vor.u32 1.1754944e-38, %v1937
    %v1939 = vsel %vm1936, %v1938, %v1934
    %v1940 = vmul.f32 1.0, %v1939
    %v1941 = vrcp.pop %v1079
    %v1942 = vmul.f32 %v1079, %v1941
    %v1943 = vsub.f32 1.0, %v1942
    %v1944 = vmul.f32 %v1941, %v1943
    %v1945 = vadd.f32 %v1941, %v1944
    %vm1946 = vweird.f32 %v1079
    %vm1947 = vweird.f32 %v1941
    %vm1948 = vmor %vm1946, %vm1947
    %v1949 = vsel %vm1948, %v1941, %v1945
    %v1950 = vand.u32 2147483647, %v1079
    %vm1951 = vcmp.eq.f32.partialorder %v1950, 8.507059e+37
    %v1952 = vand.u32 %v1079, 2147483648
    %v1953 = vor.u32 1.1754944e-38, %v1952
    %v1954 = vsel %vm1951, %v1953, %v1949
    %v1955 = vmul.f32 1.0, %v1954
    %v1956 = vrcp.pop %v1080
    %v1957 = vmul.f32 %v1080, %v1956
    %v1958 = vsub.f32 1.0, %v1957
    %v1959 = vmul.f32 %v1956, %v1958
    %v1960 = vadd.f32 %v1956, %v1959
    %vm1961 = vweird.f32 %v1080
    %vm1962 = vweird.f32 %v1956
    %vm1963 = vmor %vm1961, %vm1962
    %v1964 = vsel %vm1963, %v1956, %v1960
    %v1965 = vand.u32 2147483647, %v1080
    %vm1966 = vcmp.eq.f32.partialorder %v1965, 8.507059e+37
    %v1967 = vand.u32 %v1080, 2147483648
    %v1968 = vor.u32 1.1754944e-38, %v1967
    %v1969 = vsel %vm1966, %v1968, %v1964
    %v1970 = vmul.f32 1.0, %v1969
    %v1971 = vrcp.pop %v1081
    %v1972 = vmul.f32 %v1081, %v1971
    %v1973 = vsub.f32 1.0, %v1972
    %v1974 = vmul.f32 %v1971, %v1973
    %v1975 = vadd.f32 %v1971, %v1974
    %vm1976 = vweird.f32 %v1081
    %vm1977 = vweird.f32 %v1971
    %vm1978 = vmor %vm1976, %vm1977
    %v1979 = vsel %vm1978, %v1971, %v1975
    %v1980 = vand.u32 2147483647, %v1081
    %vm1981 = vcmp.eq.f32.partialorder %v1980, 8.507059e+37
    %v1982 = vand.u32 %v1081, 2147483648
    %v1983 = vor.u32 1.1754944e-38, %v1982
    %v1984 = vsel %vm1981, %v1983, %v1979
    %v1985 = vmul.f32 1.0, %v1984
    %v1986 = vrcp.pop %v1082
    %v1987 = vmul.f32 %v1082, %v1986
    %v1988 = vsub.f32 1.0, %v1987
    %v1989 = vmul.f32 %v1986, %v1988
    %v1990 = vadd.f32 %v1986, %v1989
    %vm1991 = vweird.f32 %v1082
    %vm1992 = vweird.f32 %v1986
    %vm1993 = vmor %vm1991, %vm1992
    %v1994 = vsel %vm1993, %v1986, %v1990
    %v1995 = vand.u32 2147483647, %v1082
    %vm1996 = vcmp.eq.f32.partialorder %v1995, 8.507059e+37
    %v1997 = vand.u32 %v1082, 2147483648
    %v1998 = vor.u32 1.1754944e-38, %v1997
    %v1999 = vsel %vm1996, %v1998, %v1994
    %v2000 = vmul.f32 1.0, %v1999
    %v2001 = vrcp.pop %v1083
    %v2002 = vmul.f32 %v1083, %v2001
    %v2003 = vsub.f32 1.0, %v2002
    %v2004 = vmul.f32 %v2001, %v2003
    %v2005 = vadd.f32 %v2001, %v2004
    %vm2006 = vweird.f32 %v1083
    %vm2007 = vweird.f32 %v2001
    %vm2008 = vmor %vm2006, %vm2007
    %v2009 = vsel %vm2008, %v2001, %v2005
    %v2010 = vand.u32 2147483647, %v1083
    %vm2011 = vcmp.eq.f32.partialorder %v2010, 8.507059e+37
    %v2012 = vand.u32 %v1083, 2147483648
    %v2013 = vor.u32 1.1754944e-38, %v2012
    %v2014 = vsel %vm2011, %v2013, %v2009
    %v2015 = vmul.f32 1.0, %v2014
    %v2016 = vrcp.pop %v1084
    %v2017 = vmul.f32 %v1084, %v2016
    %v2018 = vsub.f32 1.0, %v2017
    %v2019 = vmul.f32 %v2016, %v2018
    %v2020 = vadd.f32 %v2016, %v2019
    %vm2021 = vweird.f32 %v1084
    %vm2022 = vweird.f32 %v2016
    %vm2023 = vmor %vm2021, %vm2022
    %v2024 = vsel %vm2023, %v2016, %v2020
    %v2025 = vand.u32 2147483647, %v1084
    %vm2026 = vcmp.eq.f32.partialorder %v2025, 8.507059e+37
    %v2027 = vand.u32 %v1084, 2147483648
    %v2028 = vor.u32 1.1754944e-38, %v2027
    %v2029 = vsel %vm2026, %v2028, %v2024
    %v2030 = vmul.f32 1.0, %v2029
    %v2031 = vrcp.pop %v1085
    %v2032 = vmul.f32 %v1085, %v2031
    %v2033 = vsub.f32 1.0, %v2032
    %v2034 = vmul.f32 %v2031, %v2033
    %v2035 = vadd.f32 %v2031, %v2034
    %vm2036 = vweird.f32 %v1085
    %vm2037 = vweird.f32 %v2031
    %vm2038 = vmor %vm2036, %vm2037
    %v2039 = vsel %vm2038, %v2031, %v2035
    %v2040 = vand.u32 2147483647, %v1085
    %vm2041 = vcmp.eq.f32.partialorder %v2040, 8.507059e+37
    %v2042 = vand.u32 %v1085, 2147483648
    %v2043 = vor.u32 1.1754944e-38, %v2042
    %v2044 = vsel %vm2041, %v2043, %v2039
    %v2045 = vmul.f32 1.0, %v2044
    %v2046 = vmul.f32 %v698, %v1100
    %v2047 = vmul.f32 %v699, %v1115
    %v2048 = vmul.f32 %v700, %v1130
    %v2049 = vmul.f32 %v701, %v1145
    %v2050 = vmul.f32 %v702, %v1160
    %v2051 = vmul.f32 %v703, %v1175
    %v2052 = vmul.f32 %v704, %v1190
    %v2053 = vmul.f32 %v705, %v1205
    %v2054 = vmul.f32 %v706, %v1220
    %v2055 = vmul.f32 %v707, %v1235
    %v2056 = vmul.f32 %v708, %v1250
    %v2057 = vmul.f32 %v709, %v1265
    %v2058 = vmul.f32 %v710, %v1280
    %v2059 = vmul.f32 %v711, %v1295
    %v2060 = vmul.f32 %v712, %v1310
    %v2061 = vmul.f32 %v713, %v1325
    %v2062 = vmul.f32 %v714, %v1340
    %v2063 = vmul.f32 %v715, %v1355
    %v2064 = vmul.f32 %v716, %v1370
    %v2065 = vmul.f32 %v717, %v1385
    %v2066 = vmul.f32 %v718, %v1400
    %v2067 = vmul.f32 %v719, %v1415
    %v2068 = vmul.f32 %v720, %v1430
    %v2069 = vmul.f32 %v721, %v1445
    %v2070 = vmul.f32 %v722, %v1460
    %v2071 = vmul.f32 %v723, %v1475
    %v2072 = vmul.f32 %v724, %v1490
    %v2073 = vmul.f32 %v725, %v1505
    %v2074 = vmul.f32 %v726, %v1520
    %v2075 = vmul.f32 %v727, %v1535
    %v2076 = vmul.f32 %v728, %v1550
    %v2077 = vmul.f32 %v729, %v1565
    %v2078 = vmul.f32 %v730, %v1580
    %v2079 = vmul.f32 %v731, %v1595
    %v2080 = vmul.f32 %v732, %v1610
    %v2081 = vmul.f32 %v733, %v1625
    %v2082 = vmul.f32 %v734, %v1640
    %v2083 = vmul.f32 %v735, %v1655
    %v2084 = vmul.f32 %v736, %v1670
    %v2085 = vmul.f32 %v737, %v1685
    %v2086 = vmul.f32 %v738, %v1700
    %v2087 = vmul.f32 %v739, %v1715
    %v2088 = vmul.f32 %v740, %v1730
    %v2089 = vmul.f32 %v741, %v1745
    %v2090 = vmul.f32 %v742, %v1760
    %v2091 = vmul.f32 %v743, %v1775
    %v2092 = vmul.f32 %v744, %v1790
    %v2093 = vmul.f32 %v745, %v1805
    %v2094 = vmul.f32 %v746, %v1820
    %v2095 = vmul.f32 %v747, %v1835
    %v2096 = vmul.f32 %v748, %v1850
    %v2097 = vmul.f32 %v749, %v1865
    %v2098 = vmul.f32 %v750, %v1880
    %v2099 = vmul.f32 %v751, %v1895
    %v2100 = vmul.f32 %v752, %v1910
    %v2101 = vmul.f32 %v753, %v1925
    %v2102 = vmul.f32 %v754, %v1940
    %v2103 = vmul.f32 %v755, %v1955
    %v2104 = vmul.f32 %v756, %v1970
    %v2105 = vmul.f32 %v757, %v1985
    %v2106 = vmul.f32 %v758, %v2000
    %v2107 = vmul.f32 %v759, %v2015
    %v2108 = vmul.f32 %v760, %v2030
    %v2109 = vmul.f32 %v761, %v2045
    %v2110 = vpack.c.bf16 %v2046, %v2046
    %v2111 = vpack.c.bf16 %v2047, %v2047
    %v2112 = vpack.c.bf16 %v2048, %v2048
    %v2113 = vpack.c.bf16 %v2049, %v2049
    %v2114 = vpack.c.bf16 %v2050, %v2050
    %v2115 = vpack.c.bf16 %v2051, %v2051
    %v2116 = vpack.c.bf16 %v2052, %v2052
    %v2117 = vpack.c.bf16 %v2053, %v2053
    %v2118 = vpack.c.bf16 %v2054, %v2054
    %v2119 = vpack.c.bf16 %v2055, %v2055
    %v2120 = vpack.c.bf16 %v2056, %v2056
    %v2121 = vpack.c.bf16 %v2057, %v2057
    %v2122 = vpack.c.bf16 %v2058, %v2058
    %v2123 = vpack.c.bf16 %v2059, %v2059
    %v2124 = vpack.c.bf16 %v2060, %v2060
    %v2125 = vpack.c.bf16 %v2061, %v2061
    %v2126 = vpack.c.bf16 %v2062, %v2062
    %v2127 = vpack.c.bf16 %v2063, %v2063
    %v2128 = vpack.c.bf16 %v2064, %v2064
    %v2129 = vpack.c.bf16 %v2065, %v2065
    %v2130 = vpack.c.bf16 %v2066, %v2066
    %v2131 = vpack.c.bf16 %v2067, %v2067
    %v2132 = vpack.c.bf16 %v2068, %v2068
    %v2133 = vpack.c.bf16 %v2069, %v2069
    %v2134 = vpack.c.bf16 %v2070, %v2070
    %v2135 = vpack.c.bf16 %v2071, %v2071
    %v2136 = vpack.c.bf16 %v2072, %v2072
    %v2137 = vpack.c.bf16 %v2073, %v2073
    %v2138 = vpack.c.bf16 %v2074, %v2074
    %v2139 = vpack.c.bf16 %v2075, %v2075
    %v2140 = vpack.c.bf16 %v2076, %v2076
    %v2141 = vpack.c.bf16 %v2077, %v2077
    %v2142 = vpack.c.bf16 %v2078, %v2078
    %v2143 = vpack.c.bf16 %v2079, %v2079
    %v2144 = vpack.c.bf16 %v2080, %v2080
    %v2145 = vpack.c.bf16 %v2081, %v2081
    %v2146 = vpack.c.bf16 %v2082, %v2082
    %v2147 = vpack.c.bf16 %v2083, %v2083
    %v2148 = vpack.c.bf16 %v2084, %v2084
    %v2149 = vpack.c.bf16 %v2085, %v2085
    %v2150 = vpack.c.bf16 %v2086, %v2086
    %v2151 = vpack.c.bf16 %v2087, %v2087
    %v2152 = vpack.c.bf16 %v2088, %v2088
    %v2153 = vpack.c.bf16 %v2089, %v2089
    %v2154 = vpack.c.bf16 %v2090, %v2090
    %v2155 = vpack.c.bf16 %v2091, %v2091
    %v2156 = vpack.c.bf16 %v2092, %v2092
    %v2157 = vpack.c.bf16 %v2093, %v2093
    %v2158 = vpack.c.bf16 %v2094, %v2094
    %v2159 = vpack.c.bf16 %v2095, %v2095
    %v2160 = vpack.c.bf16 %v2096, %v2096
    %v2161 = vpack.c.bf16 %v2097, %v2097
    %v2162 = vpack.c.bf16 %v2098, %v2098
    %v2163 = vpack.c.bf16 %v2099, %v2099
    %v2164 = vpack.c.bf16 %v2100, %v2100
    %v2165 = vpack.c.bf16 %v2101, %v2101
    %v2166 = vpack.c.bf16 %v2102, %v2102
    %v2167 = vpack.c.bf16 %v2103, %v2103
    %v2168 = vpack.c.bf16 %v2104, %v2104
    %v2169 = vpack.c.bf16 %v2105, %v2105
    %v2170 = vpack.c.bf16 %v2106, %v2106
    %v2171 = vpack.c.bf16 %v2107, %v2107
    %v2172 = vpack.c.bf16 %v2108, %v2108
    %v2173 = vpack.c.bf16 %v2109, %v2109
    %2174 = vst [vmem:[#allocation2] sm:$0xf] %v2110
    %2175 = vst [vmem:[#allocation2 + $0x4] sm:$0xf] %v2111
    %2176 = vst [vmem:[#allocation2 + $0x8] sm:$0xf] %v2112
    %2177 = vst [vmem:[#allocation2 + $0xc] sm:$0xf] %v2113
    %2178 = vst [vmem:[#allocation2 + $0x10] sm:$0xf] %v2114
    %2179 = vst [vmem:[#allocation2 + $0x14] sm:$0xf] %v2115
    %2180 = vst [vmem:[#allocation2 + $0x18] sm:$0xf] %v2116
    %2181 = vst [vmem:[#allocation2 + $0x1c] sm:$0xf] %v2117
    %2182 = vst [vmem:[#allocation2 + $0x20] sm:$0xf] %v2118
    %2183 = vst [vmem:[#allocation2 + $0x24] sm:$0xf] %v2119
    %2184 = vst [vmem:[#allocation2 + $0x28] sm:$0xf] %v2120
    %2185 = vst [vmem:[#allocation2 + $0x2c] sm:$0xf] %v2121
    %2186 = vst [vmem:[#allocation2 + $0x30] sm:$0xf] %v2122
    %2187 = vst [vmem:[#allocation2 + $0x34] sm:$0xf] %v2123
    %2188 = vst [vmem:[#allocation2 + $0x38] sm:$0xf] %v2124
    %2189 = vst [vmem:[#allocation2 + $0x3c] sm:$0xf] %v2125
    %2190 = vst [vmem:[#allocation2 + $0x40] sm:$0xf] %v2126
    %2191 = vst [vmem:[#allocation2 + $0x44] sm:$0xf] %v2127
    %2192 = vst [vmem:[#allocation2 + $0x48] sm:$0xf] %v2128
    %2193 = vst [vmem:[#allocation2 + $0x4c] sm:$0xf] %v2129
    %2194 = vst [vmem:[#allocation2 + $0x50] sm:$0xf] %v2130
    %2195 = vst [vmem:[#allocation2 + $0x54] sm:$0xf] %v2131
    %2196 = vst [vmem:[#allocation2 + $0x58] sm:$0xf] %v2132
    %2197 = vst [vmem:[#allocation2 + $0x5c] sm:$0xf] %v2133
    %2198 = vst [vmem:[#allocation2 + $0x60] sm:$0xf] %v2134
    %2199 = vst [vmem:[#allocation2 + $0x64] sm:$0xf] %v2135
    %2200 = vst [vmem:[#allocation2 + $0x68] sm:$0xf] %v2136
    %2201 = vst [vmem:[#allocation2 + $0x6c] sm:$0xf] %v2137
    %2202 = vst [vmem:[#allocation2 + $0x70] sm:$0xf] %v2138
    %2203 = vst [vmem:[#allocation2 + $0x74] sm:$0xf] %v2139
    %2204 = vst [vmem:[#allocation2 + $0x78] sm:$0xf] %v2140
    %2205 = vst [vmem:[#allocation2 + $0x7c] sm:$0xf] %v2141
    %2206 = vst [vmem:[#allocation2 + $0x80] sm:$0xf] %v2142
    %2207 = vst [vmem:[#allocation2 + $0x84] sm:$0xf] %v2143
    %2208 = vst [vmem:[#allocation2 + $0x88] sm:$0xf] %v2144
    %2209 = vst [vmem:[#allocation2 + $0x8c] sm:$0xf] %v2145
    %2210 = vst [vmem:[#allocation2 + $0x90] sm:$0xf] %v2146
    %2211 = vst [vmem:[#allocation2 + $0x94] sm:$0xf] %v2147
    %2212 = vst [vmem:[#allocation2 + $0x98] sm:$0xf] %v2148
    %2213 = vst [vmem:[#allocation2 + $0x9c] sm:$0xf] %v2149
    %2214 = vst [vmem:[#allocation2 + $0xa0] sm:$0xf] %v2150
    %2215 = vst [vmem:[#allocation2 + $0xa4] sm:$0xf] %v2151
    %2216 = vst [vmem:[#allocation2 + $0xa8] sm:$0xf] %v2152
    %2217 = vst [vmem:[#allocation2 + $0xac] sm:$0xf] %v2153
    %2218 = vst [vmem:[#allocation2 + $0xb0] sm:$0xf] %v2154
    %2219 = vst [vmem:[#allocation2 + $0xb4] sm:$0xf] %v2155
    %2220 = vst [vmem:[#allocation2 + $0xb8] sm:$0xf] %v2156
    %2221 = vst [vmem:[#allocation2 + $0xbc] sm:$0xf] %v2157
    %2222 = vst [vmem:[#allocation2 + $0xc0] sm:$0xf] %v2158
    %2223 = vst [vmem:[#allocation2 + $0xc4] sm:$0xf] %v2159
    %2224 = vst [vmem:[#allocation2 + $0xc8] sm:$0xf] %v2160
    %2225 = vst [vmem:[#allocation2 + $0xcc] sm:$0xf] %v2161
    %2226 = vst [vmem:[#allocation2 + $0xd0] sm:$0xf] %v2162
    %2227 = vst [vmem:[#allocation2 + $0xd4] sm:$0xf] %v2163
    %2228 = vst [vmem:[#allocation2 + $0xd8] sm:$0xf] %v2164
    %2229 = vst [vmem:[#allocation2 + $0xdc] sm:$0xf] %v2165
    %2230 = vst [vmem:[#allocation2 + $0xe0] sm:$0xf] %v2166
    %2231 = vst [vmem:[#allocation2 + $0xe4] sm:$0xf] %v2167
    %2232 = vst [vmem:[#allocation2 + $0xe8] sm:$0xf] %v2168
    %2233 = vst [vmem:[#allocation2 + $0xec] sm:$0xf] %v2169
    %2234 = vst [vmem:[#allocation2 + $0xf0] sm:$0xf] %v2170
    %2235 = vst [vmem:[#allocation2 + $0xf4] sm:$0xf] %v2171
    %2236 = vst [vmem:[#allocation2 + $0xf8] sm:$0xf] %v2172
    %2237 = vst [vmem:[#allocation2 + $0xfc] sm:$0xf] %v2173
    %v2238 = vxor.u32 %v766, 2147483648
    %v2239 = vxor.u32 %v767, 2147483648
    %v2240 = vxor.u32 %v768, 2147483648
    %v2241 = vxor.u32 %v769, 2147483648
    %v2242 = vxor.u32 %v770, 2147483648
    %v2243 = vxor.u32 %v771, 2147483648
    %v2244 = vxor.u32 %v772, 2147483648
    %v2245 = vxor.u32 %v773, 2147483648
    %v2246 = vxor.u32 %v774, 2147483648
    %v2247 = vxor.u32 %v775, 2147483648
    %v2248 = vxor.u32 %v776, 2147483648
    %v2249 = vxor.u32 %v777, 2147483648
    %v2250 = vxor.u32 %v778, 2147483648
    %v2251 = vxor.u32 %v779, 2147483648
    %v2252 = vxor.u32 %v780, 2147483648
    %v2253 = vxor.u32 %v781, 2147483648
    %v2254 = vxor.u32 %v782, 2147483648
    %v2255 = vxor.u32 %v783, 2147483648
    %v2256 = vxor.u32 %v784, 2147483648
    %v2257 = vxor.u32 %v785, 2147483648
    %v2258 = vxor.u32 %v786, 2147483648
    %v2259 = vxor.u32 %v787, 2147483648
    %v2260 = vxor.u32 %v788, 2147483648
    %v2261 = vxor.u32 %v789, 2147483648
    %v2262 = vxor.u32 %v790, 2147483648
    %v2263 = vxor.u32 %v791, 2147483648
    %v2264 = vxor.u32 %v792, 2147483648
    %v2265 = vxor.u32 %v793, 2147483648
    %v2266 = vxor.u32 %v794, 2147483648
    %v2267 = vxor.u32 %v795, 2147483648
    %v2268 = vxor.u32 %v796, 2147483648
    %v2269 = vxor.u32 %v797, 2147483648
    %v2270 = vxor.u32 %v798, 2147483648
    %v2271 = vxor.u32 %v799, 2147483648
    %v2272 = vxor.u32 %v800, 2147483648
    %v2273 = vxor.u32 %v801, 2147483648
    %v2274 = vxor.u32 %v802, 2147483648
    %v2275 = vxor.u32 %v803, 2147483648
    %v2276 = vxor.u32 %v804, 2147483648
    %v2277 = vxor.u32 %v805, 2147483648
    %v2278 = vxor.u32 %v806, 2147483648
    %v2279 = vxor.u32 %v807, 2147483648
    %v2280 = vxor.u32 %v808, 2147483648
    %v2281 = vxor.u32 %v809, 2147483648
    %v2282 = vxor.u32 %v810, 2147483648
    %v2283 = vxor.u32 %v811, 2147483648
    %v2284 = vxor.u32 %v812, 2147483648
    %v2285 = vxor.u32 %v813, 2147483648
    %v2286 = vxor.u32 %v814, 2147483648
    %v2287 = vxor.u32 %v815, 2147483648
    %v2288 = vxor.u32 %v816, 2147483648
    %v2289 = vxor.u32 %v817, 2147483648
    %v2290 = vxor.u32 %v818, 2147483648
    %v2291 = vxor.u32 %v819, 2147483648
    %v2292 = vxor.u32 %v820, 2147483648
    %v2293 = vxor.u32 %v821, 2147483648
    %v2294 = vxor.u32 %v822, 2147483648
    %v2295 = vxor.u32 %v823, 2147483648
    %v2296 = vxor.u32 %v824, 2147483648
    %v2297 = vxor.u32 %v825, 2147483648
    %v2298 = vxor.u32 %v826, 2147483648
    %v2299 = vxor.u32 %v827, 2147483648
    %v2300 = vxor.u32 %v828, 2147483648
    %v2301 = vxor.u32 %v829, 2147483648
    %v2302 = vmul.f32 %v2238, 1.442695
    %v2303 = vpow.pop %v2302
    %v2304 = vmul.f32 %v2239, 1.442695
    %v2305 = vpow.pop %v2304
    %v2306 = vmul.f32 %v2240, 1.442695
    %v2307 = vpow.pop %v2306
    %v2308 = vmul.f32 %v2241, 1.442695
    %v2309 = vpow.pop %v2308
    %v2310 = vmul.f32 %v2242, 1.442695
    %v2311 = vpow.pop %v2310
    %v2312 = vmul.f32 %v2243, 1.442695
    %v2313 = vpow.pop %v2312
    %v2314 = vmul.f32 %v2244, 1.442695
    %v2315 = vpow.pop %v2314
    %v2316 = vmul.f32 %v2245, 1.442695
    %v2317 = vpow.pop %v2316
    %v2318 = vmul.f32 %v2246, 1.442695
    %v2319 = vpow.pop %v2318
    %v2320 = vmul.f32 %v2247, 1.442695
    %v2321 = vpow.pop %v2320
    %v2322 = vmul.f32 %v2248, 1.442695
    %v2323 = vpow.pop %v2322
    %v2324 = vmul.f32 %v2249, 1.442695
    %v2325 = vpow.pop %v2324
    %v2326 = vmul.f32 %v2250, 1.442695
    %v2327 = vpow.pop %v2326
    %v2328 = vmul.f32 %v2251, 1.442695
    %v2329 = vpow.pop %v2328
    %v2330 = vmul.f32 %v2252, 1.442695
    %v2331 = vpow.pop %v2330
    %v2332 = vmul.f32 %v2253, 1.442695
    %v2333 = vpow.pop %v2332
    %v2334 = vmul.f32 %v2254, 1.442695
    %v2335 = vpow.pop %v2334
    %v2336 = vmul.f32 %v2255, 1.442695
    %v2337 = vpow.pop %v2336
    %v2338 = vmul.f32 %v2256, 1.442695
    %v2339 = vpow.pop %v2338
    %v2340 = vmul.f32 %v2257, 1.442695
    %v2341 = vpow.pop %v2340
    %v2342 = vmul.f32 %v2258, 1.442695
    %v2343 = vpow.pop %v2342
    %v2344 = vmul.f32 %v2259, 1.442695
    %v2345 = vpow.pop %v2344
    %v2346 = vmul.f32 %v2260, 1.442695
    %v2347 = vpow.pop %v2346
    %v2348 = vmul.f32 %v2261, 1.442695
    %v2349 = vpow.pop %v2348
    %v2350 = vmul.f32 %v2262, 1.442695
    %v2351 = vpow.pop %v2350
    %v2352 = vmul.f32 %v2263, 1.442695
    %v2353 = vpow.pop %v2352
    %v2354 = vmul.f32 %v2264, 1.442695
    %v2355 = vpow.pop %v2354
    %v2356 = vmul.f32 %v2265, 1.442695
    %v2357 = vpow.pop %v2356
    %v2358 = vmul.f32 %v2266, 1.442695
    %v2359 = vpow.pop %v2358
    %v2360 = vmul.f32 %v2267, 1.442695
    %v2361 = vpow.pop %v2360
    %v2362 = vmul.f32 %v2268, 1.442695
    %v2363 = vpow.pop %v2362
    %v2364 = vmul.f32 %v2269, 1.442695
    %v2365 = vpow.pop %v2364
    %v2366 = vmul.f32 %v2270, 1.442695
    %v2367 = vpow.pop %v2366
    %v2368 = vmul.f32 %v2271, 1.442695
    %v2369 = vpow.pop %v2368
    %v2370 = vmul.f32 %v2272, 1.442695
    %v2371 = vpow.pop %v2370
    %v2372 = vmul.f32 %v2273, 1.442695
    %v2373 = vpow.pop %v2372
    %v2374 = vmul.f32 %v2274, 1.442695
    %v2375 = vpow.pop %v2374
    %v2376 = vmul.f32 %v2275, 1.442695
    %v2377 = vpow.pop %v2376
    %v2378 = vmul.f32 %v2276, 1.442695
    %v2379 = vpow.pop %v2378
    %v2380 = vmul.f32 %v2277, 1.442695
    %v2381 = vpow.pop %v2380
    %v2382 = vmul.f32 %v2278, 1.442695
    %v2383 = vpow.pop %v2382
    %v2384 = vmul.f32 %v2279, 1.442695
    %v2385 = vpow.pop %v2384
    %v2386 = vmul.f32 %v2280, 1.442695
    %v2387 = vpow.pop %v2386
    %v2388 = vmul.f32 %v2281, 1.442695
    %v2389 = vpow.pop %v2388
    %v2390 = vmul.f32 %v2282, 1.442695
    %v2391 = vpow.pop %v2390
    %v2392 = vmul.f32 %v2283, 1.442695
    %v2393 = vpow.pop %v2392
    %v2394 = vmul.f32 %v2284, 1.442695
    %v2395 = vpow.pop %v2394
    %v2396 = vmul.f32 %v2285, 1.442695
    %v2397 = vpow.pop %v2396
    %v2398 = vmul.f32 %v2286, 1.442695
    %v2399 = vpow.pop %v2398
    %v2400 = vmul.f32 %v2287, 1.442695
    %v2401 = vpow.pop %v2400
    %v2402 = vmul.f32 %v2288, 1.442695
    %v2403 = vpow.pop %v2402
    %v2404 = vmul.f32 %v2289, 1.442695
    %v2405 = vpow.pop %v2404
    %v2406 = vmul.f32 %v2290, 1.442695
    %v2407 = vpow.pop %v2406
    %v2408 = vmul.f32 %v2291, 1.442695
    %v2409 = vpow.pop %v2408
    %v2410 = vmul.f32 %v2292, 1.442695
    %v2411 = vpow.pop %v2410
    %v2412 = vmul.f32 %v2293, 1.442695
    %v2413 = vpow.pop %v2412
    %v2414 = vmul.f32 %v2294, 1.442695
    %v2415 = vpow.pop %v2414
    %v2416 = vmul.f32 %v2295, 1.442695
    %v2417 = vpow.pop %v2416
    %v2418 = vmul.f32 %v2296, 1.442695
    %v2419 = vpow.pop %v2418
    %v2420 = vmul.f32 %v2297, 1.442695
    %v2421 = vpow.pop %v2420
    %v2422 = vmul.f32 %v2298, 1.442695
    %v2423 = vpow.pop %v2422
    %v2424 = vmul.f32 %v2299, 1.442695
    %v2425 = vpow.pop %v2424
    %v2426 = vmul.f32 %v2300, 1.442695
    %v2427 = vpow.pop %v2426
    %v2428 = vmul.f32 %v2301, 1.442695
    %v2429 = vpow.pop %v2428
    %v2430 = vadd.f32 %v2303, 1.0
    %v2431 = vadd.f32 %v2305, 1.0
    %v2432 = vadd.f32 %v2307, 1.0
    %v2433 = vadd.f32 %v2309, 1.0
    %v2434 = vadd.f32 %v2311, 1.0
    %v2435 = vadd.f32 %v2313, 1.0
    %v2436 = vadd.f32 %v2315, 1.0
    %v2437 = vadd.f32 %v2317, 1.0
    %v2438 = vadd.f32 %v2319, 1.0
    %v2439 = vadd.f32 %v2321, 1.0
    %v2440 = vadd.f32 %v2323, 1.0
    %v2441 = vadd.f32 %v2325, 1.0
    %v2442 = vadd.f32 %v2327, 1.0
    %v2443 = vadd.f32 %v2329, 1.0
    %v2444 = vadd.f32 %v2331, 1.0
    %v2445 = vadd.f32 %v2333, 1.0
    %v2446 = vadd.f32 %v2335, 1.0
    %v2447 = vadd.f32 %v2337, 1.0
    %v2448 = vadd.f32 %v2339, 1.0
    %v2449 = vadd.f32 %v2341, 1.0
    %v2450 = vadd.f32 %v2343, 1.0
    %v2451 = vadd.f32 %v2345, 1.0
    %v2452 = vadd.f32 %v2347, 1.0
    %v2453 = vadd.f32 %v2349, 1.0
    %v2454 = vadd.f32 %v2351, 1.0
    %v2455 = vadd.f32 %v2353, 1.0
    %v2456 = vadd.f32 %v2355, 1.0
    %v2457 = vadd.f32 %v2357, 1.0
    %v2458 = vadd.f32 %v2359, 1.0
    %v2459 = vadd.f32 %v2361, 1.0
    %v2460 = vadd.f32 %v2363, 1.0
    %v2461 = vadd.f32 %v2365, 1.0
    %v2462 = vadd.f32 %v2367, 1.0
    %v2463 = vadd.f32 %v2369, 1.0
    %v2464 = vadd.f32 %v2371, 1.0
    %v2465 = vadd.f32 %v2373, 1.0
    %v2466 = vadd.f32 %v2375, 1.0
    %v2467 = vadd.f32 %v2377, 1.0
    %v2468 = vadd.f32 %v2379, 1.0
    %v2469 = vadd.f32 %v2381, 1.0
    %v2470 = vadd.f32 %v2383, 1.0
    %v2471 = vadd.f32 %v2385, 1.0
    %v2472 = vadd.f32 %v2387, 1.0
    %v2473 = vadd.f32 %v2389, 1.0
    %v2474 = vadd.f32 %v2391, 1.0
    %v2475 = vadd.f32 %v2393, 1.0
    %v2476 = vadd.f32 %v2395, 1.0
    %v2477 = vadd.f32 %v2397, 1.0
    %v2478 = vadd.f32 %v2399, 1.0
    %v2479 = vadd.f32 %v2401, 1.0
    %v2480 = vadd.f32 %v2403, 1.0
    %v2481 = vadd.f32 %v2405, 1.0
    %v2482 = vadd.f32 %v2407, 1.0
    %v2483 = vadd.f32 %v2409, 1.0
    %v2484 = vadd.f32 %v2411, 1.0
    %v2485 = vadd.f32 %v2413, 1.0
    %v2486 = vadd.f32 %v2415, 1.0
    %v2487 = vadd.f32 %v2417, 1.0
    %v2488 = vadd.f32 %v2419, 1.0
    %v2489 = vadd.f32 %v2421, 1.0
    %v2490 = vadd.f32 %v2423, 1.0
    %v2491 = vadd.f32 %v2425, 1.0
    %v2492 = vadd.f32 %v2427, 1.0
    %v2493 = vadd.f32 %v2429, 1.0
    %v2494 = vrcp.pop %v2430
    %v2495 = vmul.f32 %v2430, %v2494
    %v2496 = vsub.f32 1.0, %v2495
    %v2497 = vmul.f32 %v2494, %v2496
    %v2498 = vadd.f32 %v2494, %v2497
    %vm2499 = vweird.f32 %v2430
    %vm2500 = vweird.f32 %v2494
    %vm2501 = vmor %vm2499, %vm2500
    %v2502 = vsel %vm2501, %v2494, %v2498
    %v2503 = vand.u32 2147483647, %v2430
    %vm2504 = vcmp.eq.f32.partialorder %v2503, 8.507059e+37
    %v2505 = vand.u32 %v2430, 2147483648
    %v2506 = vor.u32 1.1754944e-38, %v2505
    %v2507 = vsel %vm2504, %v2506, %v2502
    %v2508 = vmul.f32 1.0, %v2507
    %v2509 = vrcp.pop %v2431
    %v2510 = vmul.f32 %v2431, %v2509
    %v2511 = vsub.f32 1.0, %v2510
    %v2512 = vmul.f32 %v2509, %v2511
    %v2513 = vadd.f32 %v2509, %v2512
    %vm2514 = vweird.f32 %v2431
    %vm2515 = vweird.f32 %v2509
    %vm2516 = vmor %vm2514, %vm2515
    %v2517 = vsel %vm2516, %v2509, %v2513
    %v2518 = vand.u32 2147483647, %v2431
    %vm2519 = vcmp.eq.f32.partialorder %v2518, 8.507059e+37
    %v2520 = vand.u32 %v2431, 2147483648
    %v2521 = vor.u32 1.1754944e-38, %v2520
    %v2522 = vsel %vm2519, %v2521, %v2517
    %v2523 = vmul.f32 1.0, %v2522
    %v2524 = vrcp.pop %v2432
    %v2525 = vmul.f32 %v2432, %v2524
    %v2526 = vsub.f32 1.0, %v2525
    %v2527 = vmul.f32 %v2524, %v2526
    %v2528 = vadd.f32 %v2524, %v2527
    %vm2529 = vweird.f32 %v2432
    %vm2530 = vweird.f32 %v2524
    %vm2531 = vmor %vm2529, %vm2530
    %v2532 = vsel %vm2531, %v2524, %v2528
    %v2533 = vand.u32 2147483647, %v2432
    %vm2534 = vcmp.eq.f32.partialorder %v2533, 8.507059e+37
    %v2535 = vand.u32 %v2432, 2147483648
    %v2536 = vor.u32 1.1754944e-38, %v2535
    %v2537 = vsel %vm2534, %v2536, %v2532
    %v2538 = vmul.f32 1.0, %v2537
    %v2539 = vrcp.pop %v2433
    %v2540 = vmul.f32 %v2433, %v2539
    %v2541 = vsub.f32 1.0, %v2540
    %v2542 = vmul.f32 %v2539, %v2541
    %v2543 = vadd.f32 %v2539, %v2542
    %vm2544 = vweird.f32 %v2433
    %vm2545 = vweird.f32 %v2539
    %vm2546 = vmor %vm2544, %vm2545
    %v2547 = vsel %vm2546, %v2539, %v2543
    %v2548 = vand.u32 2147483647, %v2433
    %vm2549 = vcmp.eq.f32.partialorder %v2548, 8.507059e+37
    %v2550 = vand.u32 %v2433, 2147483648
    %v2551 = vor.u32 1.1754944e-38, %v2550
    %v2552 = vsel %vm2549, %v2551, %v2547
    %v2553 = vmul.f32 1.0, %v2552
    %v2554 = vrcp.pop %v2434
    %v2555 = vmul.f32 %v2434, %v2554
    %v2556 = vsub.f32 1.0, %v2555
    %v2557 = vmul.f32 %v2554, %v2556
    %v2558 = vadd.f32 %v2554, %v2557
    %vm2559 = vweird.f32 %v2434
    %vm2560 = vweird.f32 %v2554
    %vm2561 = vmor %vm2559, %vm2560
    %v2562 = vsel %vm2561, %v2554, %v2558
    %v2563 = vand.u32 2147483647, %v2434
    %vm2564 = vcmp.eq.f32.partialorder %v2563, 8.507059e+37
    %v2565 = vand.u32 %v2434, 2147483648
    %v2566 = vor.u32 1.1754944e-38, %v2565
    %v2567 = vsel %vm2564, %v2566, %v2562
    %v2568 = vmul.f32 1.0, %v2567
    %v2569 = vrcp.pop %v2435
    %v2570 = vmul.f32 %v2435, %v2569
    %v2571 = vsub.f32 1.0, %v2570
    %v2572 = vmul.f32 %v2569, %v2571
    %v2573 = vadd.f32 %v2569, %v2572
    %vm2574 = vweird.f32 %v2435
    %vm2575 = vweird.f32 %v2569
    %vm2576 = vmor %vm2574, %vm2575
    %v2577 = vsel %vm2576, %v2569, %v2573
    %v2578 = vand.u32 2147483647, %v2435
    %vm2579 = vcmp.eq.f32.partialorder %v2578, 8.507059e+37
    %v2580 = vand.u32 %v2435, 2147483648
    %v2581 = vor.u32 1.1754944e-38, %v2580
    %v2582 = vsel %vm2579, %v2581, %v2577
    %v2583 = vmul.f32 1.0, %v2582
    %v2584 = vrcp.pop %v2436
    %v2585 = vmul.f32 %v2436, %v2584
    %v2586 = vsub.f32 1.0, %v2585
    %v2587 = vmul.f32 %v2584, %v2586
    %v2588 = vadd.f32 %v2584, %v2587
    %vm2589 = vweird.f32 %v2436
    %vm2590 = vweird.f32 %v2584
    %vm2591 = vmor %vm2589, %vm2590
    %v2592 = vsel %vm2591, %v2584, %v2588
    %v2593 = vand.u32 2147483647, %v2436
    %vm2594 = vcmp.eq.f32.partialorder %v2593, 8.507059e+37
    %v2595 = vand.u32 %v2436, 2147483648
    %v2596 = vor.u32 1.1754944e-38, %v2595
    %v2597 = vsel %vm2594, %v2596, %v2592
    %v2598 = vmul.f32 1.0, %v2597
    %v2599 = vrcp.pop %v2437
    %v2600 = vmul.f32 %v2437, %v2599
    %v2601 = vsub.f32 1.0, %v2600
    %v2602 = vmul.f32 %v2599, %v2601
    %v2603 = vadd.f32 %v2599, %v2602
    %vm2604 = vweird.f32 %v2437
    %vm2605 = vweird.f32 %v2599
    %vm2606 = vmor %vm2604, %vm2605
    %v2607 = vsel %vm2606, %v2599, %v2603
    %v2608 = vand.u32 2147483647, %v2437
    %vm2609 = vcmp.eq.f32.partialorder %v2608, 8.507059e+37
    %v2610 = vand.u32 %v2437, 2147483648
    %v2611 = vor.u32 1.1754944e-38, %v2610
    %v2612 = vsel %vm2609, %v2611, %v2607
    %v2613 = vmul.f32 1.0, %v2612
    %v2614 = vrcp.pop %v2438
    %v2615 = vmul.f32 %v2438, %v2614
    %v2616 = vsub.f32 1.0, %v2615
    %v2617 = vmul.f32 %v2614, %v2616
    %v2618 = vadd.f32 %v2614, %v2617
    %vm2619 = vweird.f32 %v2438
    %vm2620 = vweird.f32 %v2614
    %vm2621 = vmor %vm2619, %vm2620
    %v2622 = vsel %vm2621, %v2614, %v2618
    %v2623 = vand.u32 2147483647, %v2438
    %vm2624 = vcmp.eq.f32.partialorder %v2623, 8.507059e+37
    %v2625 = vand.u32 %v2438, 2147483648
    %v2626 = vor.u32 1.1754944e-38, %v2625
    %v2627 = vsel %vm2624, %v2626, %v2622
    %v2628 = vmul.f32 1.0, %v2627
    %v2629 = vrcp.pop %v2439
    %v2630 = vmul.f32 %v2439, %v2629
    %v2631 = vsub.f32 1.0, %v2630
    %v2632 = vmul.f32 %v2629, %v2631
    %v2633 = vadd.f32 %v2629, %v2632
    %vm2634 = vweird.f32 %v2439
    %vm2635 = vweird.f32 %v2629
    %vm2636 = vmor %vm2634, %vm2635
    %v2637 = vsel %vm2636, %v2629, %v2633
    %v2638 = vand.u32 2147483647, %v2439
    %vm2639 = vcmp.eq.f32.partialorder %v2638, 8.507059e+37
    %v2640 = vand.u32 %v2439, 2147483648
    %v2641 = vor.u32 1.1754944e-38, %v2640
    %v2642 = vsel %vm2639, %v2641, %v2637
    %v2643 = vmul.f32 1.0, %v2642
    %v2644 = vrcp.pop %v2440
    %v2645 = vmul.f32 %v2440, %v2644
    %v2646 = vsub.f32 1.0, %v2645
    %v2647 = vmul.f32 %v2644, %v2646
    %v2648 = vadd.f32 %v2644, %v2647
    %vm2649 = vweird.f32 %v2440
    %vm2650 = vweird.f32 %v2644
    %vm2651 = vmor %vm2649, %vm2650
    %v2652 = vsel %vm2651, %v2644, %v2648
    %v2653 = vand.u32 2147483647, %v2440
    %vm2654 = vcmp.eq.f32.partialorder %v2653, 8.507059e+37
    %v2655 = vand.u32 %v2440, 2147483648
    %v2656 = vor.u32 1.1754944e-38, %v2655
    %v2657 = vsel %vm2654, %v2656, %v2652
    %v2658 = vmul.f32 1.0, %v2657
    %v2659 = vrcp.pop %v2441
    %v2660 = vmul.f32 %v2441, %v2659
    %v2661 = vsub.f32 1.0, %v2660
    %v2662 = vmul.f32 %v2659, %v2661
    %v2663 = vadd.f32 %v2659, %v2662
    %vm2664 = vweird.f32 %v2441
    %vm2665 = vweird.f32 %v2659
    %vm2666 = vmor %vm2664, %vm2665
    %v2667 = vsel %vm2666, %v2659, %v2663
    %v2668 = vand.u32 2147483647, %v2441
    %vm2669 = vcmp.eq.f32.partialorder %v2668, 8.507059e+37
    %v2670 = vand.u32 %v2441, 2147483648
    %v2671 = vor.u32 1.1754944e-38, %v2670
    %v2672 = vsel %vm2669, %v2671, %v2667
    %v2673 = vmul.f32 1.0, %v2672
    %v2674 = vrcp.pop %v2442
    %v2675 = vmul.f32 %v2442, %v2674
    %v2676 = vsub.f32 1.0, %v2675
    %v2677 = vmul.f32 %v2674, %v2676
    %v2678 = vadd.f32 %v2674, %v2677
    %vm2679 = vweird.f32 %v2442
    %vm2680 = vweird.f32 %v2674
    %vm2681 = vmor %vm2679, %vm2680
    %v2682 = vsel %vm2681, %v2674, %v2678
    %v2683 = vand.u32 2147483647, %v2442
    %vm2684 = vcmp.eq.f32.partialorder %v2683, 8.507059e+37
    %v2685 = vand.u32 %v2442, 2147483648
    %v2686 = vor.u32 1.1754944e-38, %v2685
    %v2687 = vsel %vm2684, %v2686, %v2682
    %v2688 = vmul.f32 1.0, %v2687
    %v2689 = vrcp.pop %v2443
    %v2690 = vmul.f32 %v2443, %v2689
    %v2691 = vsub.f32 1.0, %v2690
    %v2692 = vmul.f32 %v2689, %v2691
    %v2693 = vadd.f32 %v2689, %v2692
    %vm2694 = vweird.f32 %v2443
    %vm2695 = vweird.f32 %v2689
    %vm2696 = vmor %vm2694, %vm2695
    %v2697 = vsel %vm2696, %v2689, %v2693
    %v2698 = vand.u32 2147483647, %v2443
    %vm2699 = vcmp.eq.f32.partialorder %v2698, 8.507059e+37
    %v2700 = vand.u32 %v2443, 2147483648
    %v2701 = vor.u32 1.1754944e-38, %v2700
    %v2702 = vsel %vm2699, %v2701, %v2697
    %v2703 = vmul.f32 1.0, %v2702
    %v2704 = vrcp.pop %v2444
    %v2705 = vmul.f32 %v2444, %v2704
    %v2706 = vsub.f32 1.0, %v2705
    %v2707 = vmul.f32 %v2704, %v2706
    %v2708 = vadd.f32 %v2704, %v2707
    %vm2709 = vweird.f32 %v2444
    %vm2710 = vweird.f32 %v2704
    %vm2711 = vmor %vm2709, %vm2710
    %v2712 = vsel %vm2711, %v2704, %v2708
    %v2713 = vand.u32 2147483647, %v2444
    %vm2714 = vcmp.eq.f32.partialorder %v2713, 8.507059e+37
    %v2715 = vand.u32 %v2444, 2147483648
    %v2716 = vor.u32 1.1754944e-38, %v2715
    %v2717 = vsel %vm2714, %v2716, %v2712
    %v2718 = vmul.f32 1.0, %v2717
    %v2719 = vrcp.pop %v2445
    %v2720 = vmul.f32 %v2445, %v2719
    %v2721 = vsub.f32 1.0, %v2720
    %v2722 = vmul.f32 %v2719, %v2721
    %v2723 = vadd.f32 %v2719, %v2722
    %vm2724 = vweird.f32 %v2445
    %vm2725 = vweird.f32 %v2719
    %vm2726 = vmor %vm2724, %vm2725
    %v2727 = vsel %vm2726, %v2719, %v2723
    %v2728 = vand.u32 2147483647, %v2445
    %vm2729 = vcmp.eq.f32.partialorder %v2728, 8.507059e+37
    %v2730 = vand.u32 %v2445, 2147483648
    %v2731 = vor.u32 1.1754944e-38, %v2730
    %v2732 = vsel %vm2729, %v2731, %v2727
    %v2733 = vmul.f32 1.0, %v2732
    %v2734 = vrcp.pop %v2446
    %v2735 = vmul.f32 %v2446, %v2734
    %v2736 = vsub.f32 1.0, %v2735
    %v2737 = vmul.f32 %v2734, %v2736
    %v2738 = vadd.f32 %v2734, %v2737
    %vm2739 = vweird.f32 %v2446
    %vm2740 = vweird.f32 %v2734
    %vm2741 = vmor %vm2739, %vm2740
    %v2742 = vsel %vm2741, %v2734, %v2738
    %v2743 = vand.u32 2147483647, %v2446
    %vm2744 = vcmp.eq.f32.partialorder %v2743, 8.507059e+37
    %v2745 = vand.u32 %v2446, 2147483648
    %v2746 = vor.u32 1.1754944e-38, %v2745
    %v2747 = vsel %vm2744, %v2746, %v2742
    %v2748 = vmul.f32 1.0, %v2747
    %v2749 = vrcp.pop %v2447
    %v2750 = vmul.f32 %v2447, %v2749
    %v2751 = vsub.f32 1.0, %v2750
    %v2752 = vmul.f32 %v2749, %v2751
    %v2753 = vadd.f32 %v2749, %v2752
    %vm2754 = vweird.f32 %v2447
    %vm2755 = vweird.f32 %v2749
    %vm2756 = vmor %vm2754, %vm2755
    %v2757 = vsel %vm2756, %v2749, %v2753
    %v2758 = vand.u32 2147483647, %v2447
    %vm2759 = vcmp.eq.f32.partialorder %v2758, 8.507059e+37
    %v2760 = vand.u32 %v2447, 2147483648
    %v2761 = vor.u32 1.1754944e-38, %v2760
    %v2762 = vsel %vm2759, %v2761, %v2757
    %v2763 = vmul.f32 1.0, %v2762
    %v2764 = vrcp.pop %v2448
    %v2765 = vmul.f32 %v2448, %v2764
    %v2766 = vsub.f32 1.0, %v2765
    %v2767 = vmul.f32 %v2764, %v2766
    %v2768 = vadd.f32 %v2764, %v2767
    %vm2769 = vweird.f32 %v2448
    %vm2770 = vweird.f32 %v2764
    %vm2771 = vmor %vm2769, %vm2770
    %v2772 = vsel %vm2771, %v2764, %v2768
    %v2773 = vand.u32 2147483647, %v2448
    %vm2774 = vcmp.eq.f32.partialorder %v2773, 8.507059e+37
    %v2775 = vand.u32 %v2448, 2147483648
    %v2776 = vor.u32 1.1754944e-38, %v2775
    %v2777 = vsel %vm2774, %v2776, %v2772
    %v2778 = vmul.f32 1.0, %v2777
    %v2779 = vrcp.pop %v2449
    %v2780 = vmul.f32 %v2449, %v2779
    %v2781 = vsub.f32 1.0, %v2780
    %v2782 = vmul.f32 %v2779, %v2781
    %v2783 = vadd.f32 %v2779, %v2782
    %vm2784 = vweird.f32 %v2449
    %vm2785 = vweird.f32 %v2779
    %vm2786 = vmor %vm2784, %vm2785
    %v2787 = vsel %vm2786, %v2779, %v2783
    %v2788 = vand.u32 2147483647, %v2449
    %vm2789 = vcmp.eq.f32.partialorder %v2788, 8.507059e+37
    %v2790 = vand.u32 %v2449, 2147483648
    %v2791 = vor.u32 1.1754944e-38, %v2790
    %v2792 = vsel %vm2789, %v2791, %v2787
    %v2793 = vmul.f32 1.0, %v2792
    %v2794 = vrcp.pop %v2450
    %v2795 = vmul.f32 %v2450, %v2794
    %v2796 = vsub.f32 1.0, %v2795
    %v2797 = vmul.f32 %v2794, %v2796
    %v2798 = vadd.f32 %v2794, %v2797
    %vm2799 = vweird.f32 %v2450
    %vm2800 = vweird.f32 %v2794
    %vm2801 = vmor %vm2799, %vm2800
    %v2802 = vsel %vm2801, %v2794, %v2798
    %v2803 = vand.u32 2147483647, %v2450
    %vm2804 = vcmp.eq.f32.partialorder %v2803, 8.507059e+37
    %v2805 = vand.u32 %v2450, 2147483648
    %v2806 = vor.u32 1.1754944e-38, %v2805
    %v2807 = vsel %vm2804, %v2806, %v2802
    %v2808 = vmul.f32 1.0, %v2807
    %v2809 = vrcp.pop %v2451
    %v2810 = vmul.f32 %v2451, %v2809
    %v2811 = vsub.f32 1.0, %v2810
    %v2812 = vmul.f32 %v2809, %v2811
    %v2813 = vadd.f32 %v2809, %v2812
    %vm2814 = vweird.f32 %v2451
    %vm2815 = vweird.f32 %v2809
    %vm2816 = vmor %vm2814, %vm2815
    %v2817 = vsel %vm2816, %v2809, %v2813
    %v2818 = vand.u32 2147483647, %v2451
    %vm2819 = vcmp.eq.f32.partialorder %v2818, 8.507059e+37
    %v2820 = vand.u32 %v2451, 2147483648
    %v2821 = vor.u32 1.1754944e-38, %v2820
    %v2822 = vsel %vm2819, %v2821, %v2817
    %v2823 = vmul.f32 1.0, %v2822
    %v2824 = vrcp.pop %v2452
    %v2825 = vmul.f32 %v2452, %v2824
    %v2826 = vsub.f32 1.0, %v2825
    %v2827 = vmul.f32 %v2824, %v2826
    %v2828 = vadd.f32 %v2824, %v2827
    %vm2829 = vweird.f32 %v2452
    %vm2830 = vweird.f32 %v2824
    %vm2831 = vmor %vm2829, %vm2830
    %v2832 = vsel %vm2831, %v2824, %v2828
    %v2833 = vand.u32 2147483647, %v2452
    %vm2834 = vcmp.eq.f32.partialorder %v2833, 8.507059e+37
    %v2835 = vand.u32 %v2452, 2147483648
    %v2836 = vor.u32 1.1754944e-38, %v2835
    %v2837 = vsel %vm2834, %v2836, %v2832
    %v2838 = vmul.f32 1.0, %v2837
    %v2839 = vrcp.pop %v2453
    %v2840 = vmul.f32 %v2453, %v2839
    %v2841 = vsub.f32 1.0, %v2840
    %v2842 = vmul.f32 %v2839, %v2841
    %v2843 = vadd.f32 %v2839, %v2842
    %vm2844 = vweird.f32 %v2453
    %vm2845 = vweird.f32 %v2839
    %vm2846 = vmor %vm2844, %vm2845
    %v2847 = vsel %vm2846, %v2839, %v2843
    %v2848 = vand.u32 2147483647, %v2453
    %vm2849 = vcmp.eq.f32.partialorder %v2848, 8.507059e+37
    %v2850 = vand.u32 %v2453, 2147483648
    %v2851 = vor.u32 1.1754944e-38, %v2850
    %v2852 = vsel %vm2849, %v2851, %v2847
    %v2853 = vmul.f32 1.0, %v2852
    %v2854 = vrcp.pop %v2454
    %v2855 = vmul.f32 %v2454, %v2854
    %v2856 = vsub.f32 1.0, %v2855
    %v2857 = vmul.f32 %v2854, %v2856
    %v2858 = vadd.f32 %v2854, %v2857
    %vm2859 = vweird.f32 %v2454
    %vm2860 = vweird.f32 %v2854
    %vm2861 = vmor %vm2859, %vm2860
    %v2862 = vsel %vm2861, %v2854, %v2858
    %v2863 = vand.u32 2147483647, %v2454
    %vm2864 = vcmp.eq.f32.partialorder %v2863, 8.507059e+37
    %v2865 = vand.u32 %v2454, 2147483648
    %v2866 = vor.u32 1.1754944e-38, %v2865
    %v2867 = vsel %vm2864, %v2866, %v2862
    %v2868 = vmul.f32 1.0, %v2867
    %v2869 = vrcp.pop %v2455
    %v2870 = vmul.f32 %v2455, %v2869
    %v2871 = vsub.f32 1.0, %v2870
    %v2872 = vmul.f32 %v2869, %v2871
    %v2873 = vadd.f32 %v2869, %v2872
    %vm2874 = vweird.f32 %v2455
    %vm2875 = vweird.f32 %v2869
    %vm2876 = vmor %vm2874, %vm2875
    %v2877 = vsel %vm2876, %v2869, %v2873
    %v2878 = vand.u32 2147483647, %v2455
    %vm2879 = vcmp.eq.f32.partialorder %v2878, 8.507059e+37
    %v2880 = vand.u32 %v2455, 2147483648
    %v2881 = vor.u32 1.1754944e-38, %v2880
    %v2882 = vsel %vm2879, %v2881, %v2877
    %v2883 = vmul.f32 1.0, %v2882
    %v2884 = vrcp.pop %v2456
    %v2885 = vmul.f32 %v2456, %v2884
    %v2886 = vsub.f32 1.0, %v2885
    %v2887 = vmul.f32 %v2884, %v2886
    %v2888 = vadd.f32 %v2884, %v2887
    %vm2889 = vweird.f32 %v2456
    %vm2890 = vweird.f32 %v2884
    %vm2891 = vmor %vm2889, %vm2890
    %v2892 = vsel %vm2891, %v2884, %v2888
    %v2893 = vand.u32 2147483647, %v2456
    %vm2894 = vcmp.eq.f32.partialorder %v2893, 8.507059e+37
    %v2895 = vand.u32 %v2456, 2147483648
    %v2896 = vor.u32 1.1754944e-38, %v2895
    %v2897 = vsel %vm2894, %v2896, %v2892
    %v2898 = vmul.f32 1.0, %v2897
    %v2899 = vrcp.pop %v2457
    %v2900 = vmul.f32 %v2457, %v2899
    %v2901 = vsub.f32 1.0, %v2900
    %v2902 = vmul.f32 %v2899, %v2901
    %v2903 = vadd.f32 %v2899, %v2902
    %vm2904 = vweird.f32 %v2457
    %vm2905 = vweird.f32 %v2899
    %vm2906 = vmor %vm2904, %vm2905
    %v2907 = vsel %vm2906, %v2899, %v2903
    %v2908 = vand.u32 2147483647, %v2457
    %vm2909 = vcmp.eq.f32.partialorder %v2908, 8.507059e+37
    %v2910 = vand.u32 %v2457, 2147483648
    %v2911 = vor.u32 1.1754944e-38, %v2910
    %v2912 = vsel %vm2909, %v2911, %v2907
    %v2913 = vmul.f32 1.0, %v2912
    %v2914 = vrcp.pop %v2458
    %v2915 = vmul.f32 %v2458, %v2914
    %v2916 = vsub.f32 1.0, %v2915
    %v2917 = vmul.f32 %v2914, %v2916
    %v2918 = vadd.f32 %v2914, %v2917
    %vm2919 = vweird.f32 %v2458
    %vm2920 = vweird.f32 %v2914
    %vm2921 = vmor %vm2919, %vm2920
    %v2922 = vsel %vm2921, %v2914, %v2918
    %v2923 = vand.u32 2147483647, %v2458
    %vm2924 = vcmp.eq.f32.partialorder %v2923, 8.507059e+37
    %v2925 = vand.u32 %v2458, 2147483648
    %v2926 = vor.u32 1.1754944e-38, %v2925
    %v2927 = vsel %vm2924, %v2926, %v2922
    %v2928 = vmul.f32 1.0, %v2927
    %v2929 = vrcp.pop %v2459
    %v2930 = vmul.f32 %v2459, %v2929
    %v2931 = vsub.f32 1.0, %v2930
    %v2932 = vmul.f32 %v2929, %v2931
    %v2933 = vadd.f32 %v2929, %v2932
    %vm2934 = vweird.f32 %v2459
    %vm2935 = vweird.f32 %v2929
    %vm2936 = vmor %vm2934, %vm2935
    %v2937 = vsel %vm2936, %v2929, %v2933
    %v2938 = vand.u32 2147483647, %v2459
    %vm2939 = vcmp.eq.f32.partialorder %v2938, 8.507059e+37
    %v2940 = vand.u32 %v2459, 2147483648
    %v2941 = vor.u32 1.1754944e-38, %v2940
    %v2942 = vsel %vm2939, %v2941, %v2937
    %v2943 = vmul.f32 1.0, %v2942
    %v2944 = vrcp.pop %v2460
    %v2945 = vmul.f32 %v2460, %v2944
    %v2946 = vsub.f32 1.0, %v2945
    %v2947 = vmul.f32 %v2944, %v2946
    %v2948 = vadd.f32 %v2944, %v2947
    %vm2949 = vweird.f32 %v2460
    %vm2950 = vweird.f32 %v2944
    %vm2951 = vmor %vm2949, %vm2950
    %v2952 = vsel %vm2951, %v2944, %v2948
    %v2953 = vand.u32 2147483647, %v2460
    %vm2954 = vcmp.eq.f32.partialorder %v2953, 8.507059e+37
    %v2955 = vand.u32 %v2460, 2147483648
    %v2956 = vor.u32 1.1754944e-38, %v2955
    %v2957 = vsel %vm2954, %v2956, %v2952
    %v2958 = vmul.f32 1.0, %v2957
    %v2959 = vrcp.pop %v2461
    %v2960 = vmul.f32 %v2461, %v2959
    %v2961 = vsub.f32 1.0, %v2960
    %v2962 = vmul.f32 %v2959, %v2961
    %v2963 = vadd.f32 %v2959, %v2962
    %vm2964 = vweird.f32 %v2461
    %vm2965 = vweird.f32 %v2959
    %vm2966 = vmor %vm2964, %vm2965
    %v2967 = vsel %vm2966, %v2959, %v2963
    %v2968 = vand.u32 2147483647, %v2461
    %vm2969 = vcmp.eq.f32.partialorder %v2968, 8.507059e+37
    %v2970 = vand.u32 %v2461, 2147483648
    %v2971 = vor.u32 1.1754944e-38, %v2970
    %v2972 = vsel %vm2969, %v2971, %v2967
    %v2973 = vmul.f32 1.0, %v2972
    %v2974 = vrcp.pop %v2462
    %v2975 = vmul.f32 %v2462, %v2974
    %v2976 = vsub.f32 1.0, %v2975
    %v2977 = vmul.f32 %v2974, %v2976
    %v2978 = vadd.f32 %v2974, %v2977
    %vm2979 = vweird.f32 %v2462
    %vm2980 = vweird.f32 %v2974
    %vm2981 = vmor %vm2979, %vm2980
    %v2982 = vsel %vm2981, %v2974, %v2978
    %v2983 = vand.u32 2147483647, %v2462
    %vm2984 = vcmp.eq.f32.partialorder %v2983, 8.507059e+37
    %v2985 = vand.u32 %v2462, 2147483648
    %v2986 = vor.u32 1.1754944e-38, %v2985
    %v2987 = vsel %vm2984, %v2986, %v2982
    %v2988 = vmul.f32 1.0, %v2987
    %v2989 = vrcp.pop %v2463
    %v2990 = vmul.f32 %v2463, %v2989
    %v2991 = vsub.f32 1.0, %v2990
    %v2992 = vmul.f32 %v2989, %v2991
    %v2993 = vadd.f32 %v2989, %v2992
    %vm2994 = vweird.f32 %v2463
    %vm2995 = vweird.f32 %v2989
    %vm2996 = vmor %vm2994, %vm2995
    %v2997 = vsel %vm2996, %v2989, %v2993
    %v2998 = vand.u32 2147483647, %v2463
    %vm2999 = vcmp.eq.f32.partialorder %v2998, 8.507059e+37
    %v3000 = vand.u32 %v2463, 2147483648
    %v3001 = vor.u32 1.1754944e-38, %v3000
    %v3002 = vsel %vm2999, %v3001, %v2997
    %v3003 = vmul.f32 1.0, %v3002
    %v3004 = vrcp.pop %v2464
    %v3005 = vmul.f32 %v2464, %v3004
    %v3006 = vsub.f32 1.0, %v3005
    %v3007 = vmul.f32 %v3004, %v3006
    %v3008 = vadd.f32 %v3004, %v3007
    %vm3009 = vweird.f32 %v2464
    %vm3010 = vweird.f32 %v3004
    %vm3011 = vmor %vm3009, %vm3010
    %v3012 = vsel %vm3011, %v3004, %v3008
    %v3013 = vand.u32 2147483647, %v2464
    %vm3014 = vcmp.eq.f32.partialorder %v3013, 8.507059e+37
    %v3015 = vand.u32 %v2464, 2147483648
    %v3016 = vor.u32 1.1754944e-38, %v3015
    %v3017 = vsel %vm3014, %v3016, %v3012
    %v3018 = vmul.f32 1.0, %v3017
    %v3019 = vrcp.pop %v2465
    %v3020 = vmul.f32 %v2465, %v3019
    %v3021 = vsub.f32 1.0, %v3020
    %v3022 = vmul.f32 %v3019, %v3021
    %v3023 = vadd.f32 %v3019, %v3022
    %vm3024 = vweird.f32 %v2465
    %vm3025 = vweird.f32 %v3019
    %vm3026 = vmor %vm3024, %vm3025
    %v3027 = vsel %vm3026, %v3019, %v3023
    %v3028 = vand.u32 2147483647, %v2465
    %vm3029 = vcmp.eq.f32.partialorder %v3028, 8.507059e+37
    %v3030 = vand.u32 %v2465, 2147483648
    %v3031 = vor.u32 1.1754944e-38, %v3030
    %v3032 = vsel %vm3029, %v3031, %v3027
    %v3033 = vmul.f32 1.0, %v3032
    %v3034 = vrcp.pop %v2466
    %v3035 = vmul.f32 %v2466, %v3034
    %v3036 = vsub.f32 1.0, %v3035
    %v3037 = vmul.f32 %v3034, %v3036
    %v3038 = vadd.f32 %v3034, %v3037
    %vm3039 = vweird.f32 %v2466
    %vm3040 = vweird.f32 %v3034
    %vm3041 = vmor %vm3039, %vm3040
    %v3042 = vsel %vm3041, %v3034, %v3038
    %v3043 = vand.u32 2147483647, %v2466
    %vm3044 = vcmp.eq.f32.partialorder %v3043, 8.507059e+37
    %v3045 = vand.u32 %v2466, 2147483648
    %v3046 = vor.u32 1.1754944e-38, %v3045
    %v3047 = vsel %vm3044, %v3046, %v3042
    %v3048 = vmul.f32 1.0, %v3047
    %v3049 = vrcp.pop %v2467
    %v3050 = vmul.f32 %v2467, %v3049
    %v3051 = vsub.f32 1.0, %v3050
    %v3052 = vmul.f32 %v3049, %v3051
    %v3053 = vadd.f32 %v3049, %v3052
    %vm3054 = vweird.f32 %v2467
    %vm3055 = vweird.f32 %v3049
    %vm3056 = vmor %vm3054, %vm3055
    %v3057 = vsel %vm3056, %v3049, %v3053
    %v3058 = vand.u32 2147483647, %v2467
    %vm3059 = vcmp.eq.f32.partialorder %v3058, 8.507059e+37
    %v3060 = vand.u32 %v2467, 2147483648
    %v3061 = vor.u32 1.1754944e-38, %v3060
    %v3062 = vsel %vm3059, %v3061, %v3057
    %v3063 = vmul.f32 1.0, %v3062
    %v3064 = vrcp.pop %v2468
    %v3065 = vmul.f32 %v2468, %v3064
    %v3066 = vsub.f32 1.0, %v3065
    %v3067 = vmul.f32 %v3064, %v3066
    %v3068 = vadd.f32 %v3064, %v3067
    %vm3069 = vweird.f32 %v2468
    %vm3070 = vweird.f32 %v3064
    %vm3071 = vmor %vm3069, %vm3070
    %v3072 = vsel %vm3071, %v3064, %v3068
    %v3073 = vand.u32 2147483647, %v2468
    %vm3074 = vcmp.eq.f32.partialorder %v3073, 8.507059e+37
    %v3075 = vand.u32 %v2468, 2147483648
    %v3076 = vor.u32 1.1754944e-38, %v3075
    %v3077 = vsel %vm3074, %v3076, %v3072
    %v3078 = vmul.f32 1.0, %v3077
    %v3079 = vrcp.pop %v2469
    %v3080 = vmul.f32 %v2469, %v3079
    %v3081 = vsub.f32 1.0, %v3080
    %v3082 = vmul.f32 %v3079, %v3081
    %v3083 = vadd.f32 %v3079, %v3082
    %vm3084 = vweird.f32 %v2469
    %vm3085 = vweird.f32 %v3079
    %vm3086 = vmor %vm3084, %vm3085
    %v3087 = vsel %vm3086, %v3079, %v3083
    %v3088 = vand.u32 2147483647, %v2469
    %vm3089 = vcmp.eq.f32.partialorder %v3088, 8.507059e+37
    %v3090 = vand.u32 %v2469, 2147483648
    %v3091 = vor.u32 1.1754944e-38, %v3090
    %v3092 = vsel %vm3089, %v3091, %v3087
    %v3093 = vmul.f32 1.0, %v3092
    %v3094 = vrcp.pop %v2470
    %v3095 = vmul.f32 %v2470, %v3094
    %v3096 = vsub.f32 1.0, %v3095
    %v3097 = vmul.f32 %v3094, %v3096
    %v3098 = vadd.f32 %v3094, %v3097
    %vm3099 = vweird.f32 %v2470
    %vm3100 = vweird.f32 %v3094
    %vm3101 = vmor %vm3099, %vm3100
    %v3102 = vsel %vm3101, %v3094, %v3098
    %v3103 = vand.u32 2147483647, %v2470
    %vm3104 = vcmp.eq.f32.partialorder %v3103, 8.507059e+37
    %v3105 = vand.u32 %v2470, 2147483648
    %v3106 = vor.u32 1.1754944e-38, %v3105
    %v3107 = vsel %vm3104, %v3106, %v3102
    %v3108 = vmul.f32 1.0, %v3107
    %v3109 = vrcp.pop %v2471
    %v3110 = vmul.f32 %v2471, %v3109
    %v3111 = vsub.f32 1.0, %v3110
    %v3112 = vmul.f32 %v3109, %v3111
    %v3113 = vadd.f32 %v3109, %v3112
    %vm3114 = vweird.f32 %v2471
    %vm3115 = vweird.f32 %v3109
    %vm3116 = vmor %vm3114, %vm3115
    %v3117 = vsel %vm3116, %v3109, %v3113
    %v3118 = vand.u32 2147483647, %v2471
    %vm3119 = vcmp.eq.f32.partialorder %v3118, 8.507059e+37
    %v3120 = vand.u32 %v2471, 2147483648
    %v3121 = vor.u32 1.1754944e-38, %v3120
    %v3122 = vsel %vm3119, %v3121, %v3117
    %v3123 = vmul.f32 1.0, %v3122
    %v3124 = vrcp.pop %v2472
    %v3125 = vmul.f32 %v2472, %v3124
    %v3126 = vsub.f32 1.0, %v3125
    %v3127 = vmul.f32 %v3124, %v3126
    %v3128 = vadd.f32 %v3124, %v3127
    %vm3129 = vweird.f32 %v2472
    %vm3130 = vweird.f32 %v3124
    %vm3131 = vmor %vm3129, %vm3130
    %v3132 = vsel %vm3131, %v3124, %v3128
    %v3133 = vand.u32 2147483647, %v2472
    %vm3134 = vcmp.eq.f32.partialorder %v3133, 8.507059e+37
    %v3135 = vand.u32 %v2472, 2147483648
    %v3136 = vor.u32 1.1754944e-38, %v3135
    %v3137 = vsel %vm3134, %v3136, %v3132
    %v3138 = vmul.f32 1.0, %v3137
    %v3139 = vrcp.pop %v2473
    %v3140 = vmul.f32 %v2473, %v3139
    %v3141 = vsub.f32 1.0, %v3140
    %v3142 = vmul.f32 %v3139, %v3141
    %v3143 = vadd.f32 %v3139, %v3142
    %vm3144 = vweird.f32 %v2473
    %vm3145 = vweird.f32 %v3139
    %vm3146 = vmor %vm3144, %vm3145
    %v3147 = vsel %vm3146, %v3139, %v3143
    %v3148 = vand.u32 2147483647, %v2473
    %vm3149 = vcmp.eq.f32.partialorder %v3148, 8.507059e+37
    %v3150 = vand.u32 %v2473, 2147483648
    %v3151 = vor.u32 1.1754944e-38, %v3150
    %v3152 = vsel %vm3149, %v3151, %v3147
    %v3153 = vmul.f32 1.0, %v3152
    %v3154 = vrcp.pop %v2474
    %v3155 = vmul.f32 %v2474, %v3154
    %v3156 = vsub.f32 1.0, %v3155
    %v3157 = vmul.f32 %v3154, %v3156
    %v3158 = vadd.f32 %v3154, %v3157
    %vm3159 = vweird.f32 %v2474
    %vm3160 = vweird.f32 %v3154
    %vm3161 = vmor %vm3159, %vm3160
    %v3162 = vsel %vm3161, %v3154, %v3158
    %v3163 = vand.u32 2147483647, %v2474
    %vm3164 = vcmp.eq.f32.partialorder %v3163, 8.507059e+37
    %v3165 = vand.u32 %v2474, 2147483648
    %v3166 = vor.u32 1.1754944e-38, %v3165
    %v3167 = vsel %vm3164, %v3166, %v3162
    %v3168 = vmul.f32 1.0, %v3167
    %v3169 = vrcp.pop %v2475
    %v3170 = vmul.f32 %v2475, %v3169
    %v3171 = vsub.f32 1.0, %v3170
    %v3172 = vmul.f32 %v3169, %v3171
    %v3173 = vadd.f32 %v3169, %v3172
    %vm3174 = vweird.f32 %v2475
    %vm3175 = vweird.f32 %v3169
    %vm3176 = vmor %vm3174, %vm3175
    %v3177 = vsel %vm3176, %v3169, %v3173
    %v3178 = vand.u32 2147483647, %v2475
    %vm3179 = vcmp.eq.f32.partialorder %v3178, 8.507059e+37
    %v3180 = vand.u32 %v2475, 2147483648
    %v3181 = vor.u32 1.1754944e-38, %v3180
    %v3182 = vsel %vm3179, %v3181, %v3177
    %v3183 = vmul.f32 1.0, %v3182
    %v3184 = vrcp.pop %v2476
    %v3185 = vmul.f32 %v2476, %v3184
    %v3186 = vsub.f32 1.0, %v3185
    %v3187 = vmul.f32 %v3184, %v3186
    %v3188 = vadd.f32 %v3184, %v3187
    %vm3189 = vweird.f32 %v2476
    %vm3190 = vweird.f32 %v3184
    %vm3191 = vmor %vm3189, %vm3190
    %v3192 = vsel %vm3191, %v3184, %v3188
    %v3193 = vand.u32 2147483647, %v2476
    %vm3194 = vcmp.eq.f32.partialorder %v3193, 8.507059e+37
    %v3195 = vand.u32 %v2476, 2147483648
    %v3196 = vor.u32 1.1754944e-38, %v3195
    %v3197 = vsel %vm3194, %v3196, %v3192
    %v3198 = vmul.f32 1.0, %v3197
    %v3199 = vrcp.pop %v2477
    %v3200 = vmul.f32 %v2477, %v3199
    %v3201 = vsub.f32 1.0, %v3200
    %v3202 = vmul.f32 %v3199, %v3201
    %v3203 = vadd.f32 %v3199, %v3202
    %vm3204 = vweird.f32 %v2477
    %vm3205 = vweird.f32 %v3199
    %vm3206 = vmor %vm3204, %vm3205
    %v3207 = vsel %vm3206, %v3199, %v3203
    %v3208 = vand.u32 2147483647, %v2477
    %vm3209 = vcmp.eq.f32.partialorder %v3208, 8.507059e+37
    %v3210 = vand.u32 %v2477, 2147483648
    %v3211 = vor.u32 1.1754944e-38, %v3210
    %v3212 = vsel %vm3209, %v3211, %v3207
    %v3213 = vmul.f32 1.0, %v3212
    %v3214 = vrcp.pop %v2478
    %v3215 = vmul.f32 %v2478, %v3214
    %v3216 = vsub.f32 1.0, %v3215
    %v3217 = vmul.f32 %v3214, %v3216
    %v3218 = vadd.f32 %v3214, %v3217
    %vm3219 = vweird.f32 %v2478
    %vm3220 = vweird.f32 %v3214
    %vm3221 = vmor %vm3219, %vm3220
    %v3222 = vsel %vm3221, %v3214, %v3218
    %v3223 = vand.u32 2147483647, %v2478
    %vm3224 = vcmp.eq.f32.partialorder %v3223, 8.507059e+37
    %v3225 = vand.u32 %v2478, 2147483648
    %v3226 = vor.u32 1.1754944e-38, %v3225
    %v3227 = vsel %vm3224, %v3226, %v3222
    %v3228 = vmul.f32 1.0, %v3227
    %v3229 = vrcp.pop %v2479
    %v3230 = vmul.f32 %v2479, %v3229
    %v3231 = vsub.f32 1.0, %v3230
    %v3232 = vmul.f32 %v3229, %v3231
    %v3233 = vadd.f32 %v3229, %v3232
    %vm3234 = vweird.f32 %v2479
    %vm3235 = vweird.f32 %v3229
    %vm3236 = vmor %vm3234, %vm3235
    %v3237 = vsel %vm3236, %v3229, %v3233
    %v3238 = vand.u32 2147483647, %v2479
    %vm3239 = vcmp.eq.f32.partialorder %v3238, 8.507059e+37
    %v3240 = vand.u32 %v2479, 2147483648
    %v3241 = vor.u32 1.1754944e-38, %v3240
    %v3242 = vsel %vm3239, %v3241, %v3237
    %v3243 = vmul.f32 1.0, %v3242
    %v3244 = vrcp.pop %v2480
    %v3245 = vmul.f32 %v2480, %v3244
    %v3246 = vsub.f32 1.0, %v3245
    %v3247 = vmul.f32 %v3244, %v3246
    %v3248 = vadd.f32 %v3244, %v3247
    %vm3249 = vweird.f32 %v2480
    %vm3250 = vweird.f32 %v3244
    %vm3251 = vmor %vm3249, %vm3250
    %v3252 = vsel %vm3251, %v3244, %v3248
    %v3253 = vand.u32 2147483647, %v2480
    %vm3254 = vcmp.eq.f32.partialorder %v3253, 8.507059e+37
    %v3255 = vand.u32 %v2480, 2147483648
    %v3256 = vor.u32 1.1754944e-38, %v3255
    %v3257 = vsel %vm3254, %v3256, %v3252
    %v3258 = vmul.f32 1.0, %v3257
    %v3259 = vrcp.pop %v2481
    %v3260 = vmul.f32 %v2481, %v3259
    %v3261 = vsub.f32 1.0, %v3260
    %v3262 = vmul.f32 %v3259, %v3261
    %v3263 = vadd.f32 %v3259, %v3262
    %vm3264 = vweird.f32 %v2481
    %vm3265 = vweird.f32 %v3259
    %vm3266 = vmor %vm3264, %vm3265
    %v3267 = vsel %vm3266, %v3259, %v3263
    %v3268 = vand.u32 2147483647, %v2481
    %vm3269 = vcmp.eq.f32.partialorder %v3268, 8.507059e+37
    %v3270 = vand.u32 %v2481, 2147483648
    %v3271 = vor.u32 1.1754944e-38, %v3270
    %v3272 = vsel %vm3269, %v3271, %v3267
    %v3273 = vmul.f32 1.0, %v3272
    %v3274 = vrcp.pop %v2482
    %v3275 = vmul.f32 %v2482, %v3274
    %v3276 = vsub.f32 1.0, %v3275
    %v3277 = vmul.f32 %v3274, %v3276
    %v3278 = vadd.f32 %v3274, %v3277
    %vm3279 = vweird.f32 %v2482
    %vm3280 = vweird.f32 %v3274
    %vm3281 = vmor %vm3279, %vm3280
    %v3282 = vsel %vm3281, %v3274, %v3278
    %v3283 = vand.u32 2147483647, %v2482
    %vm3284 = vcmp.eq.f32.partialorder %v3283, 8.507059e+37
    %v3285 = vand.u32 %v2482, 2147483648
    %v3286 = vor.u32 1.1754944e-38, %v3285
    %v3287 = vsel %vm3284, %v3286, %v3282
    %v3288 = vmul.f32 1.0, %v3287
    %v3289 = vrcp.pop %v2483
    %v3290 = vmul.f32 %v2483, %v3289
    %v3291 = vsub.f32 1.0, %v3290
    %v3292 = vmul.f32 %v3289, %v3291
    %v3293 = vadd.f32 %v3289, %v3292
    %vm3294 = vweird.f32 %v2483
    %vm3295 = vweird.f32 %v3289
    %vm3296 = vmor %vm3294, %vm3295
    %v3297 = vsel %vm3296, %v3289, %v3293
    %v3298 = vand.u32 2147483647, %v2483
    %vm3299 = vcmp.eq.f32.partialorder %v3298, 8.507059e+37
    %v3300 = vand.u32 %v2483, 2147483648
    %v3301 = vor.u32 1.1754944e-38, %v3300
    %v3302 = vsel %vm3299, %v3301, %v3297
    %v3303 = vmul.f32 1.0, %v3302
    %v3304 = vrcp.pop %v2484
    %v3305 = vmul.f32 %v2484, %v3304
    %v3306 = vsub.f32 1.0, %v3305
    %v3307 = vmul.f32 %v3304, %v3306
    %v3308 = vadd.f32 %v3304, %v3307
    %vm3309 = vweird.f32 %v2484
    %vm3310 = vweird.f32 %v3304
    %vm3311 = vmor %vm3309, %vm3310
    %v3312 = vsel %vm3311, %v3304, %v3308
    %v3313 = vand.u32 2147483647, %v2484
    %vm3314 = vcmp.eq.f32.partialorder %v3313, 8.507059e+37
    %v3315 = vand.u32 %v2484, 2147483648
    %v3316 = vor.u32 1.1754944e-38, %v3315
    %v3317 = vsel %vm3314, %v3316, %v3312
    %v3318 = vmul.f32 1.0, %v3317
    %v3319 = vrcp.pop %v2485
    %v3320 = vmul.f32 %v2485, %v3319
    %v3321 = vsub.f32 1.0, %v3320
    %v3322 = vmul.f32 %v3319, %v3321
    %v3323 = vadd.f32 %v3319, %v3322
    %vm3324 = vweird.f32 %v2485
    %vm3325 = vweird.f32 %v3319
    %vm3326 = vmor %vm3324, %vm3325
    %v3327 = vsel %vm3326, %v3319, %v3323
    %v3328 = vand.u32 2147483647, %v2485
    %vm3329 = vcmp.eq.f32.partialorder %v3328, 8.507059e+37
    %v3330 = vand.u32 %v2485, 2147483648
    %v3331 = vor.u32 1.1754944e-38, %v3330
    %v3332 = vsel %vm3329, %v3331, %v3327
    %v3333 = vmul.f32 1.0, %v3332
    %v3334 = vrcp.pop %v2486
    %v3335 = vmul.f32 %v2486, %v3334
    %v3336 = vsub.f32 1.0, %v3335
    %v3337 = vmul.f32 %v3334, %v3336
    %v3338 = vadd.f32 %v3334, %v3337
    %vm3339 = vweird.f32 %v2486
    %vm3340 = vweird.f32 %v3334
    %vm3341 = vmor %vm3339, %vm3340
    %v3342 = vsel %vm3341, %v3334, %v3338
    %v3343 = vand.u32 2147483647, %v2486
    %vm3344 = vcmp.eq.f32.partialorder %v3343, 8.507059e+37
    %v3345 = vand.u32 %v2486, 2147483648
    %v3346 = vor.u32 1.1754944e-38, %v3345
    %v3347 = vsel %vm3344, %v3346, %v3342
    %v3348 = vmul.f32 1.0, %v3347
    %v3349 = vrcp.pop %v2487
    %v3350 = vmul.f32 %v2487, %v3349
    %v3351 = vsub.f32 1.0, %v3350
    %v3352 = vmul.f32 %v3349, %v3351
    %v3353 = vadd.f32 %v3349, %v3352
    %vm3354 = vweird.f32 %v2487
    %vm3355 = vweird.f32 %v3349
    %vm3356 = vmor %vm3354, %vm3355
    %v3357 = vsel %vm3356, %v3349, %v3353
    %v3358 = vand.u32 2147483647, %v2487
    %vm3359 = vcmp.eq.f32.partialorder %v3358, 8.507059e+37
    %v3360 = vand.u32 %v2487, 2147483648
    %v3361 = vor.u32 1.1754944e-38, %v3360
    %v3362 = vsel %vm3359, %v3361, %v3357
    %v3363 = vmul.f32 1.0, %v3362
    %v3364 = vrcp.pop %v2488
    %v3365 = vmul.f32 %v2488, %v3364
    %v3366 = vsub.f32 1.0, %v3365
    %v3367 = vmul.f32 %v3364, %v3366
    %v3368 = vadd.f32 %v3364, %v3367
    %vm3369 = vweird.f32 %v2488
    %vm3370 = vweird.f32 %v3364
    %vm3371 = vmor %vm3369, %vm3370
    %v3372 = vsel %vm3371, %v3364, %v3368
    %v3373 = vand.u32 2147483647, %v2488
    %vm3374 = vcmp.eq.f32.partialorder %v3373, 8.507059e+37
    %v3375 = vand.u32 %v2488, 2147483648
    %v3376 = vor.u32 1.1754944e-38, %v3375
    %v3377 = vsel %vm3374, %v3376, %v3372
    %v3378 = vmul.f32 1.0, %v3377
    %v3379 = vrcp.pop %v2489
    %v3380 = vmul.f32 %v2489, %v3379
    %v3381 = vsub.f32 1.0, %v3380
    %v3382 = vmul.f32 %v3379, %v3381
    %v3383 = vadd.f32 %v3379, %v3382
    %vm3384 = vweird.f32 %v2489
    %vm3385 = vweird.f32 %v3379
    %vm3386 = vmor %vm3384, %vm3385
    %v3387 = vsel %vm3386, %v3379, %v3383
    %v3388 = vand.u32 2147483647, %v2489
    %vm3389 = vcmp.eq.f32.partialorder %v3388, 8.507059e+37
    %v3390 = vand.u32 %v2489, 2147483648
    %v3391 = vor.u32 1.1754944e-38, %v3390
    %v3392 = vsel %vm3389, %v3391, %v3387
    %v3393 = vmul.f32 1.0, %v3392
    %v3394 = vrcp.pop %v2490
    %v3395 = vmul.f32 %v2490, %v3394
    %v3396 = vsub.f32 1.0, %v3395
    %v3397 = vmul.f32 %v3394, %v3396
    %v3398 = vadd.f32 %v3394, %v3397
    %vm3399 = vweird.f32 %v2490
    %vm3400 = vweird.f32 %v3394
    %vm3401 = vmor %vm3399, %vm3400
    %v3402 = vsel %vm3401, %v3394, %v3398
    %v3403 = vand.u32 2147483647, %v2490
    %vm3404 = vcmp.eq.f32.partialorder %v3403, 8.507059e+37
    %v3405 = vand.u32 %v2490, 2147483648
    %v3406 = vor.u32 1.1754944e-38, %v3405
    %v3407 = vsel %vm3404, %v3406, %v3402
    %v3408 = vmul.f32 1.0, %v3407
    %v3409 = vrcp.pop %v2491
    %v3410 = vmul.f32 %v2491, %v3409
    %v3411 = vsub.f32 1.0, %v3410
    %v3412 = vmul.f32 %v3409, %v3411
    %v3413 = vadd.f32 %v3409, %v3412
    %vm3414 = vweird.f32 %v2491
    %vm3415 = vweird.f32 %v3409
    %vm3416 = vmor %vm3414, %vm3415
    %v3417 = vsel %vm3416, %v3409, %v3413
    %v3418 = vand.u32 2147483647, %v2491
    %vm3419 = vcmp.eq.f32.partialorder %v3418, 8.507059e+37
    %v3420 = vand.u32 %v2491, 2147483648
    %v3421 = vor.u32 1.1754944e-38, %v3420
    %v3422 = vsel %vm3419, %v3421, %v3417
    %v3423 = vmul.f32 1.0, %v3422
    %v3424 = vrcp.pop %v2492
    %v3425 = vmul.f32 %v2492, %v3424
    %v3426 = vsub.f32 1.0, %v3425
    %v3427 = vmul.f32 %v3424, %v3426
    %v3428 = vadd.f32 %v3424, %v3427
    %vm3429 = vweird.f32 %v2492
    %vm3430 = vweird.f32 %v3424
    %vm3431 = vmor %vm3429, %vm3430
    %v3432 = vsel %vm3431, %v3424, %v3428
    %v3433 = vand.u32 2147483647, %v2492
    %vm3434 = vcmp.eq.f32.partialorder %v3433, 8.507059e+37
    %v3435 = vand.u32 %v2492, 2147483648
    %v3436 = vor.u32 1.1754944e-38, %v3435
    %v3437 = vsel %vm3434, %v3436, %v3432
    %v3438 = vmul.f32 1.0, %v3437
    %v3439 = vrcp.pop %v2493
    %v3440 = vmul.f32 %v2493, %v3439
    %v3441 = vsub.f32 1.0, %v3440
    %v3442 = vmul.f32 %v3439, %v3441
    %v3443 = vadd.f32 %v3439, %v3442
    %vm3444 = vweird.f32 %v2493
    %vm3445 = vweird.f32 %v3439
    %vm3446 = vmor %vm3444, %vm3445
    %v3447 = vsel %vm3446, %v3439, %v3443
    %v3448 = vand.u32 2147483647, %v2493
    %vm3449 = vcmp.eq.f32.partialorder %v3448, 8.507059e+37
    %v3450 = vand.u32 %v2493, 2147483648
    %v3451 = vor.u32 1.1754944e-38, %v3450
    %v3452 = vsel %vm3449, %v3451, %v3447
    %v3453 = vmul.f32 1.0, %v3452
    %v3454 = vmul.f32 %v766, %v2508
    %v3455 = vmul.f32 %v767, %v2523
    %v3456 = vmul.f32 %v768, %v2538
    %v3457 = vmul.f32 %v769, %v2553
    %v3458 = vmul.f32 %v770, %v2568
    %v3459 = vmul.f32 %v771, %v2583
    %v3460 = vmul.f32 %v772, %v2598
    %v3461 = vmul.f32 %v773, %v2613
    %v3462 = vmul.f32 %v774, %v2628
    %v3463 = vmul.f32 %v775, %v2643
    %v3464 = vmul.f32 %v776, %v2658
    %v3465 = vmul.f32 %v777, %v2673
    %v3466 = vmul.f32 %v778, %v2688
    %v3467 = vmul.f32 %v779, %v2703
    %v3468 = vmul.f32 %v780, %v2718
    %v3469 = vmul.f32 %v781, %v2733
    %v3470 = vmul.f32 %v782, %v2748
    %v3471 = vmul.f32 %v783, %v2763
    %v3472 = vmul.f32 %v784, %v2778
    %v3473 = vmul.f32 %v785, %v2793
    %v3474 = vmul.f32 %v786, %v2808
    %v3475 = vmul.f32 %v787, %v2823
    %v3476 = vmul.f32 %v788, %v2838
    %v3477 = vmul.f32 %v789, %v2853
    %v3478 = vmul.f32 %v790, %v2868
    %v3479 = vmul.f32 %v791, %v2883
    %v3480 = vmul.f32 %v792, %v2898
    %v3481 = vmul.f32 %v793, %v2913
    %v3482 = vmul.f32 %v794, %v2928
    %v3483 = vmul.f32 %v795, %v2943
    %v3484 = vmul.f32 %v796, %v2958
    %v3485 = vmul.f32 %v797, %v2973
    %v3486 = vmul.f32 %v798, %v2988
    %v3487 = vmul.f32 %v799, %v3003
    %v3488 = vmul.f32 %v800, %v3018
    %v3489 = vmul.f32 %v801, %v3033
    %v3490 = vmul.f32 %v802, %v3048
    %v3491 = vmul.f32 %v803, %v3063
    %v3492 = vmul.f32 %v804, %v3078
    %v3493 = vmul.f32 %v805, %v3093
    %v3494 = vmul.f32 %v806, %v3108
    %v3495 = vmul.f32 %v807, %v3123
    %v3496 = vmul.f32 %v808, %v3138
    %v3497 = vmul.f32 %v809, %v3153
    %v3498 = vmul.f32 %v810, %v3168
    %v3499 = vmul.f32 %v811, %v3183
    %v3500 = vmul.f32 %v812, %v3198
    %v3501 = vmul.f32 %v813, %v3213
    %v3502 = vmul.f32 %v814, %v3228
    %v3503 = vmul.f32 %v815, %v3243
    %v3504 = vmul.f32 %v816, %v3258
    %v3505 = vmul.f32 %v817, %v3273
    %v3506 = vmul.f32 %v818, %v3288
    %v3507 = vmul.f32 %v819, %v3303
    %v3508 = vmul.f32 %v820, %v3318
    %v3509 = vmul.f32 %v821, %v3333
    %v3510 = vmul.f32 %v822, %v3348
    %v3511 = vmul.f32 %v823, %v3363
    %v3512 = vmul.f32 %v824, %v3378
    %v3513 = vmul.f32 %v825, %v3393
    %v3514 = vmul.f32 %v826, %v3408
    %v3515 = vmul.f32 %v827, %v3423
    %v3516 = vmul.f32 %v828, %v3438
    %v3517 = vmul.f32 %v829, %v3453
    %v3518 = vpack.c.bf16 %v3454, %v3454
    %v3519 = vpack.c.bf16 %v3455, %v3455
    %v3520 = vpack.c.bf16 %v3456, %v3456
    %v3521 = vpack.c.bf16 %v3457, %v3457
    %v3522 = vpack.c.bf16 %v3458, %v3458
    %v3523 = vpack.c.bf16 %v3459, %v3459
    %v3524 = vpack.c.bf16 %v3460, %v3460
    %v3525 = vpack.c.bf16 %v3461, %v3461
    %v3526 = vpack.c.bf16 %v3462, %v3462
    %v3527 = vpack.c.bf16 %v3463, %v3463
    %v3528 = vpack.c.bf16 %v3464, %v3464
    %v3529 = vpack.c.bf16 %v3465, %v3465
    %v3530 = vpack.c.bf16 %v3466, %v3466
    %v3531 = vpack.c.bf16 %v3467, %v3467
    %v3532 = vpack.c.bf16 %v3468, %v3468
    %v3533 = vpack.c.bf16 %v3469, %v3469
    %v3534 = vpack.c.bf16 %v3470, %v3470
    %v3535 = vpack.c.bf16 %v3471, %v3471
    %v3536 = vpack.c.bf16 %v3472, %v3472
    %v3537 = vpack.c.bf16 %v3473, %v3473
    %v3538 = vpack.c.bf16 %v3474, %v3474
    %v3539 = vpack.c.bf16 %v3475, %v3475
    %v3540 = vpack.c.bf16 %v3476, %v3476
    %v3541 = vpack.c.bf16 %v3477, %v3477
    %v3542 = vpack.c.bf16 %v3478, %v3478
    %v3543 = vpack.c.bf16 %v3479, %v3479
    %v3544 = vpack.c.bf16 %v3480, %v3480
    %v3545 = vpack.c.bf16 %v3481, %v3481
    %v3546 = vpack.c.bf16 %v3482, %v3482
    %v3547 = vpack.c.bf16 %v3483, %v3483
    %v3548 = vpack.c.bf16 %v3484, %v3484
    %v3549 = vpack.c.bf16 %v3485, %v3485
    %v3550 = vpack.c.bf16 %v3486, %v3486
    %v3551 = vpack.c.bf16 %v3487, %v3487
    %v3552 = vpack.c.bf16 %v3488, %v3488
    %v3553 = vpack.c.bf16 %v3489, %v3489
    %v3554 = vpack.c.bf16 %v3490, %v3490
    %v3555 = vpack.c.bf16 %v3491, %v3491
    %v3556 = vpack.c.bf16 %v3492, %v3492
    %v3557 = vpack.c.bf16 %v3493, %v3493
    %v3558 = vpack.c.bf16 %v3494, %v3494
    %v3559 = vpack.c.bf16 %v3495, %v3495
    %v3560 = vpack.c.bf16 %v3496, %v3496
    %v3561 = vpack.c.bf16 %v3497, %v3497
    %v3562 = vpack.c.bf16 %v3498, %v3498
    %v3563 = vpack.c.bf16 %v3499, %v3499
    %v3564 = vpack.c.bf16 %v3500, %v3500
    %v3565 = vpack.c.bf16 %v3501, %v3501
    %v3566 = vpack.c.bf16 %v3502, %v3502
    %v3567 = vpack.c.bf16 %v3503, %v3503
    %v3568 = vpack.c.bf16 %v3504, %v3504
    %v3569 = vpack.c.bf16 %v3505, %v3505
    %v3570 = vpack.c.bf16 %v3506, %v3506
    %v3571 = vpack.c.bf16 %v3507, %v3507
    %v3572 = vpack.c.bf16 %v3508, %v3508
    %v3573 = vpack.c.bf16 %v3509, %v3509
    %v3574 = vpack.c.bf16 %v3510, %v3510
    %v3575 = vpack.c.bf16 %v3511, %v3511
    %v3576 = vpack.c.bf16 %v3512, %v3512
    %v3577 = vpack.c.bf16 %v3513, %v3513
    %v3578 = vpack.c.bf16 %v3514, %v3514
    %v3579 = vpack.c.bf16 %v3515, %v3515
    %v3580 = vpack.c.bf16 %v3516, %v3516
    %v3581 = vpack.c.bf16 %v3517, %v3517
    %3582 = vst [vmem:[#allocation4] sm:$0xf] %v3518
    %3583 = vst [vmem:[#allocation4 + $0x4] sm:$0xf] %v3519
    %3584 = vst [vmem:[#allocation4 + $0x8] sm:$0xf] %v3520
    %3585 = vst [vmem:[#allocation4 + $0xc] sm:$0xf] %v3521
    %3586 = vst [vmem:[#allocation4 + $0x10] sm:$0xf] %v3522
    %3587 = vst [vmem:[#allocation4 + $0x14] sm:$0xf] %v3523
    %3588 = vst [vmem:[#allocation4 + $0x18] sm:$0xf] %v3524
    %3589 = vst [vmem:[#allocation4 + $0x1c] sm:$0xf] %v3525
    %3590 = vst [vmem:[#allocation4 + $0x20] sm:$0xf] %v3526
    %3591 = vst [vmem:[#allocation4 + $0x24] sm:$0xf] %v3527
    %3592 = vst [vmem:[#allocation4 + $0x28] sm:$0xf] %v3528
    %3593 = vst [vmem:[#allocation4 + $0x2c] sm:$0xf] %v3529
    %3594 = vst [vmem:[#allocation4 + $0x30] sm:$0xf] %v3530
    %3595 = vst [vmem:[#allocation4 + $0x34] sm:$0xf] %v3531
    %3596 = vst [vmem:[#allocation4 + $0x38] sm:$0xf] %v3532
    %3597 = vst [vmem:[#allocation4 + $0x3c] sm:$0xf] %v3533
    %3598 = vst [vmem:[#allocation4 + $0x40] sm:$0xf] %v3534
    %3599 = vst [vmem:[#allocation4 + $0x44] sm:$0xf] %v3535
    %3600 = vst [vmem:[#allocation4 + $0x48] sm:$0xf] %v3536
    %3601 = vst [vmem:[#allocation4 + $0x4c] sm:$0xf] %v3537
    %3602 = vst [vmem:[#allocation4 + $0x50] sm:$0xf] %v3538
    %3603 = vst [vmem:[#allocation4 + $0x54] sm:$0xf] %v3539
    %3604 = vst [vmem:[#allocation4 + $0x58] sm:$0xf] %v3540
    %3605 = vst [vmem:[#allocation4 + $0x5c] sm:$0xf] %v3541
    %3606 = vst [vmem:[#allocation4 + $0x60] sm:$0xf] %v3542
    %3607 = vst [vmem:[#allocation4 + $0x64] sm:$0xf] %v3543
    %3608 = vst [vmem:[#allocation4 + $0x68] sm:$0xf] %v3544
    %3609 = vst [vmem:[#allocation4 + $0x6c] sm:$0xf] %v3545
    %3610 = vst [vmem:[#allocation4 + $0x70] sm:$0xf] %v3546
    %3611 = vst [vmem:[#allocation4 + $0x74] sm:$0xf] %v3547
    %3612 = vst [vmem:[#allocation4 + $0x78] sm:$0xf] %v3548
    %3613 = vst [vmem:[#allocation4 + $0x7c] sm:$0xf] %v3549
    %3614 = vst [vmem:[#allocation4 + $0x80] sm:$0xf] %v3550
    %3615 = vst [vmem:[#allocation4 + $0x84] sm:$0xf] %v3551
    %3616 = vst [vmem:[#allocation4 + $0x88] sm:$0xf] %v3552
    %3617 = vst [vmem:[#allocation4 + $0x8c] sm:$0xf] %v3553
    %3618 = vst [vmem:[#allocation4 + $0x90] sm:$0xf] %v3554
    %3619 = vst [vmem:[#allocation4 + $0x94] sm:$0xf] %v3555
    %3620 = vst [vmem:[#allocation4 + $0x98] sm:$0xf] %v3556
    %3621 = vst [vmem:[#allocation4 + $0x9c] sm:$0xf] %v3557
    %3622 = vst [vmem:[#allocation4 + $0xa0] sm:$0xf] %v3558
    %3623 = vst [vmem:[#allocation4 + $0xa4] sm:$0xf] %v3559
    %3624 = vst [vmem:[#allocation4 + $0xa8] sm:$0xf] %v3560
    %3625 = vst [vmem:[#allocation4 + $0xac] sm:$0xf] %v3561
    %3626 = vst [vmem:[#allocation4 + $0xb0] sm:$0xf] %v3562
    %3627 = vst [vmem:[#allocation4 + $0xb4] sm:$0xf] %v3563
    %3628 = vst [vmem:[#allocation4 + $0xb8] sm:$0xf] %v3564
    %3629 = vst [vmem:[#allocation4 + $0xbc] sm:$0xf] %v3565
    %3630 = vst [vmem:[#allocation4 + $0xc0] sm:$0xf] %v3566
    %3631 = vst [vmem:[#allocation4 + $0xc4] sm:$0xf] %v3567
    %3632 = vst [vmem:[#allocation4 + $0xc8] sm:$0xf] %v3568
    %3633 = vst [vmem:[#allocation4 + $0xcc] sm:$0xf] %v3569
    %3634 = vst [vmem:[#allocation4 + $0xd0] sm:$0xf] %v3570
    %3635 = vst [vmem:[#allocation4 + $0xd4] sm:$0xf] %v3571
    %3636 = vst [vmem:[#allocation4 + $0xd8] sm:$0xf] %v3572
    %3637 = vst [vmem:[#allocation4 + $0xdc] sm:$0xf] %v3573
    %3638 = vst [vmem:[#allocation4 + $0xe0] sm:$0xf] %v3574
    %3639 = vst [vmem:[#allocation4 + $0xe4] sm:$0xf] %v3575
    %3640 = vst [vmem:[#allocation4 + $0xe8] sm:$0xf] %v3576
    %3641 = vst [vmem:[#allocation4 + $0xec] sm:$0xf] %v3577
    %3642 = vst [vmem:[#allocation4 + $0xf0] sm:$0xf] %v3578
    %3643 = vst [vmem:[#allocation4 + $0xf4] sm:$0xf] %v3579
    %3644 = vst [vmem:[#allocation4 + $0xf8] sm:$0xf] %v3580
    %3645 = vst [vmem:[#allocation4 + $0xfc] sm:$0xf] %v3581
    // Predicated region
    $region18: #{tpu_custom_call.1} parent=1 // pred_check
      _
    $region19: #{tpu_custom_call.1} parent=1 // pred_check_branch
      %3647 = sbr.rel (0) target = $region21
    $region20: #{tpu_custom_call.1} parent=1 // pred_region
      %3649 = vsyncadd [#allocation3], 0
      %s3650 = sshll.u32 [#allocation2], 4
      %s3651 = int_to_ptr.vmem [resolvable:$true] %s3650
      %s3652 = sshll.u32 %s4, 4
      %s3653 = int_to_ptr.hbm [resolvable:$true] %s3652
      %3658 = dma.vmem_to_hbm [thread:$0]  %s3651, 4096, %s3653, [#allocation3], 64, 64, 4
    $region21: #{tpu_custom_call.1} parent=1 // pred_fallthru
      _
    // Predicated region
    $region22: #{tpu_custom_call.1} parent=1 // pred_check
      _
    $region23: #{tpu_custom_call.1} parent=1 // pred_check_branch
      %3660 = sbr.rel (0) target = $region25
    $region24: #{tpu_custom_call.1} parent=1 // pred_region
      %3662 = vsyncadd [#allocation5], 0
      %s3663 = sshll.u32 [#allocation4], 4
      %s3664 = int_to_ptr.vmem [resolvable:$true] %s3663
      %s3665 = sshll.u32 %s5, 4
      %s3666 = int_to_ptr.hbm [resolvable:$true] %s3665
      %3671 = dma.vmem_to_hbm [thread:$0]  %s3664, 4096, %s3666, [#allocation5], 64, 64, 4
    $region25: #{tpu_custom_call.1} parent=1 // pred_fallthru
      _
    // Predicated region
    $region26: #{tpu_custom_call.1} parent=1 // pred_check
      _
    $region27: #{tpu_custom_call.1} parent=1 // pred_check_branch
      %3673 = sbr.rel (0) target = $region29
    $region28: #{tpu_custom_call.1} parent=1 // pred_region
      %3675 = dma.done [#allocation3], 4096
    $region29: #{tpu_custom_call.1} parent=1 // pred_fallthru
      _
    // Predicated region
    $region30: #{tpu_custom_call.1} parent=1 // pred_check
      _
    $region31: #{tpu_custom_call.1} parent=1 // pred_check_branch
      %3677 = sbr.rel (0) target = $region33
    $region32: #{tpu_custom_call.1} parent=1 // pred_region
      %3679 = dma.done [#allocation5], 4096
    $region33: #{tpu_custom_call.1} parent=1 // pred_fallthru
      _
    %3680 = vsyncpa [#allocation3], 1
    %3681 = vsyncpa [#allocation5], 1

</llo_original>
